<compile_context>
chip_gen: v5e
topology: v5e:2x2
jax: 0.10.0
libtpu: 0.0.40
codegen_flags: <defaults>
</compile_context>

<pallas_src>
import functools

import jax
import jax.numpy as jnp
from jax.experimental import pallas as pl
from jax.experimental.pallas import tpu as pltpu


# ----------------------------------------------------------------------------
# Pallas kernel: fused 3x3 conv (in-VMEM im2col) + bias + activation + residual
# ----------------------------------------------------------------------------
def _conv3x3_kernel(x_ref, w_ref, b_ref, *rest, act, th, out_w, has_residual):
    """One (batch, row-tile) grid step.

    x_ref : (1, TH+2, W+2, Cin)  bf16 haloed input row-tile
    w_ref : (3, 3*Cin, Cout)     bf16 packed weights, ordered (ky, kx*Cin+c, co)
    b_ref : (1, Cout)            f32 bias
    res_ref (optional): (1, TH, W, Cout) f32 residual (added after activation)
    o_ref : (1, TH, W, Cout)     f32 output
    """
    if has_residual:
        res_ref, o_ref = rest
    else:
        (o_ref,) = rest

    x = x_ref[0]                                    # (TH+2, W+2, Cin) bf16
    cin = x.shape[-1]
    cout = o_ref.shape[-1]

    acc = jnp.zeros((th * out_w, cout), jnp.float32)
    # Unrolled over the 3 vertical taps: each iteration builds the horizontal
    # 3-tap patch in VMEM and issues one MXU dot with K = 3*Cin.
    for ky in range(3):
        rows = x[ky:ky + th]                        # (TH, W+2, Cin)
        patch = jnp.concatenate(
            [rows[:, 0:out_w], rows[:, 1:out_w + 1], rows[:, 2:out_w + 2]],
            axis=-1)                                # (TH, W, 3*Cin)
        acc = acc + jnp.dot(patch.reshape(th * out_w, 3 * cin), w_ref[ky],
                            preferred_element_type=jnp.float32)

    acc = acc + b_ref[...]                          # (1, Cout) broadcast
    if act == "relu":
        acc = jnp.maximum(acc, 0.0)
    elif act == "sigmoid":
        # sigmoid via EUP reciprocal, then the module's clamp(1e-4, 1.0).
        acc = pl.reciprocal(1.0 + jnp.exp(-acc), approx=True)
        acc = jnp.clip(acc, 1e-4, 1.0)

    y = acc.reshape(th, out_w, cout)
    if has_residual:
        y = y + res_ref[0]                          # fea = fea + act(conv(fea))
    o_ref[0] = y.astype(o_ref.dtype)


# ----------------------------------------------------------------------------
# Wrapper: tiling choice, halo-tile construction, weight packing, pallas_call
# ----------------------------------------------------------------------------
def _pick_tile_rows(h, w, cin, cout, has_residual,
                    budget_bytes=2 * 1024 * 1024):
    """Largest TH dividing H whose per-step blocks stay within ~budget_bytes."""
    per_row = (w + 2) * cin * 2 + w * cout * 4      # bf16 input tile + f32 out
    if has_residual:
        per_row += w * cout * 4                     # f32 residual block
    th = int(max(1, min(h, budget_bytes // max(per_row, 1))))
    while h % th:
        th -= 1
    return th


def conv3x3_same(x, w, b, *, act="none", residual=None):
    """Fused NHWC 3x3 conv, stride 1, same padding.

    x: (N, H, W, Cin) f32   w: (Cout, Cin, 3, 3) torch layout   b: (Cout,)
    residual: optional (N, H, W, Cout) f32 added AFTER the activation.
    Returns (N, H, W, Cout) f32.
    """
    n, h, w_dim, cin = x.shape
    cout = w.shape[0]

    # Zero-pad skinny K (e.g. Cin=3 for in_conv) up to a multiple of 8.
    cin_p = ((cin + 7) // 8) * 8
    cpad = cin_p - cin

    th = _pick_tile_rows(h, w_dim, cin_p, cout, residual is not None)
    t = h // th

    # bf16 operands for the MXU.  Haloed row-tiles are built once in HBM:
    # ~(TH+2)/TH x activation traffic instead of 9x for a materialized im2col.
    xpad = jnp.pad(x.astype(jnp.bfloat16),
                   ((0, 0), (1, 1), (1, 1), (0, cpad)))          # (N,H+2,W+2,Cin_p)
    tiles = jnp.stack([xpad[:, i * th:i * th + th + 2] for i in range(t)],
                      axis=1).reshape(n * t, th + 2, w_dim + 2, cin_p)

    wk = jnp.pad(w, ((0, 0), (0, cpad), (0, 0), (0, 0)))          # (Cout,Cin_p,3,3)
    wk = jnp.transpose(wk, (2, 3, 1, 0)).reshape(3, 3 * cin_p, cout)
    wk = wk.astype(jnp.bfloat16)
    b2 = b.reshape(1, cout).astype(jnp.float32)

    in_specs = [
        pl.BlockSpec((1, th + 2, w_dim + 2, cin_p),
                     lambda ni, ti: (ni * t + ti, 0, 0, 0)),
        pl.BlockSpec((3, 3 * cin_p, cout), lambda ni, ti: (0, 0, 0)),
        pl.BlockSpec((1, cout), lambda ni, ti: (0, 0)),
    ]
    inputs = [tiles, wk, b2]
    if residual is not None:
        in_specs.append(pl.BlockSpec((1, th, w_dim, cout),
                                     lambda ni, ti: (ni, ti, 0, 0)))
        inputs.append(residual.astype(jnp.float32))

    flops = 2 * n * h * w_dim * 9 * cin_p * cout
    transc = n * h * w_dim * cout if act == "sigmoid" else 0
    bytes_accessed = (tiles.size * 2 + wk.size * 2 + n * h * w_dim * cout * 4
                      + (n * h * w_dim * cout * 4 if residual is not None else 0))

    kernel = functools.partial(_conv3x3_kernel, act=act, th=th, out_w=w_dim,
                               has_residual=residual is not None)
    return pl.pallas_call(
        kernel,
        out_shape=jax.ShapeDtypeStruct((n, h, w_dim, cout), jnp.float32),
        grid_spec=pltpu.PrefetchScalarGridSpec(
            num_scalar_prefetch=0,
            grid=(n, t),
            in_specs=in_specs,
            out_specs=pl.BlockSpec((1, th, w_dim, cout),
                                   lambda ni, ti: (ni, ti, 0, 0)),
        ),
        compiler_params=pltpu.CompilerParams(
            dimension_semantics=("parallel", "parallel"),
            vmem_limit_bytes=32 * 1024 * 1024),
        cost_estimate=pl.CostEstimate(flops=flops, transcendentals=transc,
                                      bytes_accessed=bytes_accessed),
    )(*inputs)


# ----------------------------------------------------------------------------
# Enhancer forward (matches torch Enhancer.forward)
# ----------------------------------------------------------------------------
def enhancer_forward(params, x, layers=3):
    """x: (N, H, W, 3) NHWC in [0, 1]  ->  (N, H, W, 3)."""
    # in_conv: Conv3x3(3 -> channels) + ReLU
    fea = conv3x3_same(x, params["in_w"], params["in_b"], act="relu")
    # blocks: the SAME Conv3x3+BN+ReLU module applied `layers` times (shared
    # weights), each with a residual add.  BN (eval mode) folded into weights.
    for _ in range(layers):
        fea = conv3x3_same(fea, params["blk_w_folded"], params["blk_b_folded"],
                           act="relu", residual=fea)
    # out_conv: Conv3x3(channels -> 3) + Sigmoid, then clamp(1e-4, 1) — the
    # clamp is fused into the kernel's sigmoid branch.
    return conv3x3_same(fea, params["out_w"], params["out_b"], act="sigmoid")


# ----------------------------------------------------------------------------
# Deterministic parameter initialization (shapes from Enhancer.__init__)
# ----------------------------------------------------------------------------
def init_params(key, channels=64):
    ks = jax.random.split(key, 3)

    def conv_w(k, cout, cin, kh=3, kw=3):
        bound = 1.0 / float((cin * kh * kw) ** 0.5)
        return jax.random.uniform(k, (cout, cin, kh, kw), jnp.float32,
                                  -bound, bound)

    p = {
        "in_w": conv_w(ks[0], channels, 3),
        "in_b": jnp.zeros((channels,), jnp.float32),
        "blk_w": conv_w(ks[1], channels, channels),
        "blk_b": jnp.zeros((channels,), jnp.float32),
        "bn_gamma": jnp.ones((channels,), jnp.float32),
        "bn_beta": jnp.zeros((channels,), jnp.float32),
        "bn_mean": jnp.zeros((channels,), jnp.float32),
        "bn_var": jnp.ones((channels,), jnp.float32),
        "out_w": conv_w(ks[2], 3, channels),
        "out_b": jnp.zeros((3,), jnp.float32),
    }
    # Fold eval-mode BatchNorm2d (eps=1e-5) into the block conv.
    scale = p["bn_gamma"] / jnp.sqrt(p["bn_var"] + 1e-5)
    p["blk_w_folded"] = p["blk_w"] * scale[:, None, None, None]
    p["blk_b_folded"] = (p["blk_b"] - p["bn_mean"]) * scale + p["bn_beta"]
    return p


if __name__ == "__main__":
    key = jax.random.PRNGKey(0)
    pkey, xkey = jax.random.split(key)
    layers, channels = 3, 64
    params = init_params(pkey, channels=channels)

    # PyTorch-style NCHW input (batch=2, 3 channels, 16x16), values in [0, 1).
    x_nchw = jax.random.uniform(xkey, (2, 3, 16, 16), jnp.float32)
    x_nhwc = jnp.transpose(x_nchw, (0, 2, 3, 1))  # convert to kernel layout

    fwd = jax.jit(functools.partial(enhancer_forward, layers=layers))
    out = fwd(params, x_nhwc)
    jax.block_until_ready(out)
    print("KERNEL_OK")
</pallas_src>

<mosaic_0001>
module attributes {stable_mosaic.version = 11 : i64} {
  func.func @_conv3x3_kernel(%arg0: i32, %arg1: i32, %arg2: memref<1x18x18x8xbf16, #tpu.memory_space<vmem>>, %arg3: memref<3x24x64xbf16, #tpu.memory_space<vmem>>, %arg4: memref<1x64xf32, #tpu.memory_space<vmem>>, %arg5: memref<1x16x16x64xf32, #tpu.memory_space<vmem>>) attributes {dimension_semantics = [#tpu.dimension_semantics<parallel>, #tpu.dimension_semantics<parallel>], iteration_bounds = array<i64: 2, 1>, scalar_prefetch = 0 : i64, scratch_operands = 0 : i64, tpu.core_type = #tpu.core_type<tc>, window_params = [{transform_indices = @transform_0, window_bounds = array<i64: 1, 18, 18, 8>}, {pipeline_mode = #tpu.pipeline_mode<synchronous>, transform_indices = @transform_1, window_bounds = array<i64: 3, 24, 64>}, {pipeline_mode = #tpu.pipeline_mode<synchronous>, transform_indices = @transform_2, window_bounds = array<i64: 1, 64>}, {transform_indices = @transform_3, window_bounds = array<i64: 1, 16, 16, 64>}]} {
    %c0 = arith.constant 0 : index
    %c0_0 = arith.constant 0 : index
    %c0_1 = arith.constant 0 : index
    %c0_2 = arith.constant 0 : index
    %0 = vector.load %arg2[%c0, %c0_0, %c0_1, %c0_2] : memref<1x18x18x8xbf16, #tpu.memory_space<vmem>>, vector<1x18x18x8xbf16>
    %1 = vector.shape_cast %0 : vector<1x18x18x8xbf16> to vector<18x18x8xbf16>
    %cst = arith.constant 0.000000e+00 : f32
    %2 = vector.broadcast %cst : f32 to vector<256x64xf32>
    %3 = vector.extract_strided_slice %1 {offsets = [0, 0, 0], sizes = [16, 18, 8], strides = [1, 1, 1]} : vector<18x18x8xbf16> to vector<16x18x8xbf16>
    %4 = vector.extract_strided_slice %3 {offsets = [0, 0, 0], sizes = [16, 16, 8], strides = [1, 1, 1]} : vector<16x18x8xbf16> to vector<16x16x8xbf16>
    %5 = vector.extract_strided_slice %3 {offsets = [0, 1, 0], sizes = [16, 16, 8], strides = [1, 1, 1]} : vector<16x18x8xbf16> to vector<16x16x8xbf16>
    %6 = vector.extract_strided_slice %3 {offsets = [0, 2, 0], sizes = [16, 16, 8], strides = [1, 1, 1]} : vector<16x18x8xbf16> to vector<16x16x8xbf16>
    %7 = tpu.concatenate %4, %5, %6 in 2 : vector<16x16x8xbf16>, vector<16x16x8xbf16>, vector<16x16x8xbf16> -> vector<16x16x24xbf16>
    %8 = vector.shape_cast %7 : vector<16x16x24xbf16> to vector<256x24xbf16>
    %c0_3 = arith.constant 0 : index
    %c0_4 = arith.constant 0 : index
    %c0_5 = arith.constant 0 : index
    %9 = vector.load %arg3[%c0_3, %c0_4, %c0_5] : memref<3x24x64xbf16, #tpu.memory_space<vmem>>, vector<1x24x64xbf16>
    %10 = vector.shape_cast %9 : vector<1x24x64xbf16> to vector<24x64xbf16>
    %cst_6 = arith.constant dense<0.000000e+00> : vector<256x64xf32>
    %11 = tpu.matmul %8, %10, %cst_6 {dimension_numbers = #tpu.dot_dimension_numbers<[1], [0], [0], [1], [0, 0, 1, 1], [], []>} : vector<256x24xbf16>, vector<24x64xbf16>, vector<256x64xf32> -> vector<256x64xf32>
    %12 = arith.addf %2, %11 : vector<256x64xf32>
    %13 = vector.extract_strided_slice %1 {offsets = [1, 0, 0], sizes = [16, 18, 8], strides = [1, 1, 1]} : vector<18x18x8xbf16> to vector<16x18x8xbf16>
    %14 = vector.extract_strided_slice %13 {offsets = [0, 0, 0], sizes = [16, 16, 8], strides = [1, 1, 1]} : vector<16x18x8xbf16> to vector<16x16x8xbf16>
    %15 = vector.extract_strided_slice %13 {offsets = [0, 1, 0], sizes = [16, 16, 8], strides = [1, 1, 1]} : vector<16x18x8xbf16> to vector<16x16x8xbf16>
    %16 = vector.extract_strided_slice %13 {offsets = [0, 2, 0], sizes = [16, 16, 8], strides = [1, 1, 1]} : vector<16x18x8xbf16> to vector<16x16x8xbf16>
    %17 = tpu.concatenate %14, %15, %16 in 2 : vector<16x16x8xbf16>, vector<16x16x8xbf16>, vector<16x16x8xbf16> -> vector<16x16x24xbf16>
    %18 = vector.shape_cast %17 : vector<16x16x24xbf16> to vector<256x24xbf16>
    %c1 = arith.constant 1 : index
    %c0_7 = arith.constant 0 : index
    %c0_8 = arith.constant 0 : index
    %19 = vector.load %arg3[%c1, %c0_7, %c0_8] : memref<3x24x64xbf16, #tpu.memory_space<vmem>>, vector<1x24x64xbf16>
    %20 = vector.shape_cast %19 : vector<1x24x64xbf16> to vector<24x64xbf16>
    %cst_9 = arith.constant dense<0.000000e+00> : vector<256x64xf32>
    %21 = tpu.matmul %18, %20, %cst_9 {dimension_numbers = #tpu.dot_dimension_numbers<[1], [0], [0], [1], [0, 0, 1, 1], [], []>} : vector<256x24xbf16>, vector<24x64xbf16>, vector<256x64xf32> -> vector<256x64xf32>
    %22 = arith.addf %12, %21 : vector<256x64xf32>
    %23 = vector.extract_strided_slice %1 {offsets = [2, 0, 0], sizes = [16, 18, 8], strides = [1, 1, 1]} : vector<18x18x8xbf16> to vector<16x18x8xbf16>
    %24 = vector.extract_strided_slice %23 {offsets = [0, 0, 0], sizes = [16, 16, 8], strides = [1, 1, 1]} : vector<16x18x8xbf16> to vector<16x16x8xbf16>
    %25 = vector.extract_strided_slice %23 {offsets = [0, 1, 0], sizes = [16, 16, 8], strides = [1, 1, 1]} : vector<16x18x8xbf16> to vector<16x16x8xbf16>
    %26 = vector.extract_strided_slice %23 {offsets = [0, 2, 0], sizes = [16, 16, 8], strides = [1, 1, 1]} : vector<16x18x8xbf16> to vector<16x16x8xbf16>
    %27 = tpu.concatenate %24, %25, %26 in 2 : vector<16x16x8xbf16>, vector<16x16x8xbf16>, vector<16x16x8xbf16> -> vector<16x16x24xbf16>
    %28 = vector.shape_cast %27 : vector<16x16x24xbf16> to vector<256x24xbf16>
    %c2 = arith.constant 2 : index
    %c0_10 = arith.constant 0 : index
    %c0_11 = arith.constant 0 : index
    %29 = vector.load %arg3[%c2, %c0_10, %c0_11] : memref<3x24x64xbf16, #tpu.memory_space<vmem>>, vector<1x24x64xbf16>
    %30 = vector.shape_cast %29 : vector<1x24x64xbf16> to vector<24x64xbf16>
    %cst_12 = arith.constant dense<0.000000e+00> : vector<256x64xf32>
    %31 = tpu.matmul %28, %30, %cst_12 {dimension_numbers = #tpu.dot_dimension_numbers<[1], [0], [0], [1], [0, 0, 1, 1], [], []>} : vector<256x24xbf16>, vector<24x64xbf16>, vector<256x64xf32> -> vector<256x64xf32>
    %32 = arith.addf %22, %31 : vector<256x64xf32>
    %c0_13 = arith.constant 0 : index
    %c0_14 = arith.constant 0 : index
    %33 = vector.load %arg4[%c0_13, %c0_14] : memref<1x64xf32, #tpu.memory_space<vmem>>, vector<1x64xf32>
    %34 = vector.broadcast %33 : vector<1x64xf32> to vector<256x64xf32>
    %35 = arith.addf %32, %34 : vector<256x64xf32>
    %cst_15 = arith.constant 0.000000e+00 : f32
    %36 = vector.broadcast %cst_15 : f32 to vector<256x64xf32>
    %37 = arith.maximumf %35, %36 : vector<256x64xf32>
    %38 = vector.shape_cast %37 : vector<256x64xf32> to vector<16x16x64xf32>
    %c0_16 = arith.constant 0 : index
    %c0_17 = arith.constant 0 : index
    %c0_18 = arith.constant 0 : index
    %c0_19 = arith.constant 0 : index
    %39 = vector.load %arg5[%c0_16, %c0_17, %c0_18, %c0_19] : memref<1x16x16x64xf32, #tpu.memory_space<vmem>>, vector<1x16x16x64xf32>
    %40 = vector.shape_cast %39 : vector<1x16x16x64xf32> to vector<16x16x64xf32>
    %41 = vector.shape_cast %38 : vector<16x16x64xf32> to vector<1x16x16x64xf32>
    tpu.vector_store %arg5[%c0_16, %c0_17, %c0_18, %c0_19], %41 {strides = array<i32>} : memref<1x16x16x64xf32, #tpu.memory_space<vmem>>, vector<1x16x16x64xf32>,
    return
  }
  func.func @transform_0(%arg0: i32, %arg1: i32) -> (i32, i32, i32, i32) {
    %c1_i32 = arith.constant 1 : i32
    %0 = arith.muli %arg0, %c1_i32 : i32
    %1 = arith.addi %0, %arg1 : i32
    %c0_i32 = arith.constant 0 : i32
    %c0_i32_0 = arith.constant 0 : i32
    %c0_i32_1 = arith.constant 0 : i32
    %c0_i32_2 = arith.constant 0 : i32
    return %1, %c0_i32, %c0_i32_0, %c0_i32_1 : i32, i32, i32, i32
  }
  func.func @transform_1(%arg0: i32, %arg1: i32) -> (i32, i32, i32) {
    %c0_i32 = arith.constant 0 : i32
    %c0_i32_0 = arith.constant 0 : i32
    %c0_i32_1 = arith.constant 0 : i32
    %c0_i32_2 = arith.constant 0 : i32
    return %c0_i32, %c0_i32_0, %c0_i32_1 : i32, i32, i32
  }
  func.func @transform_2(%arg0: i32, %arg1: i32) -> (i32, i32) {
    %c0_i32 = arith.constant 0 : i32
    %c0_i32_0 = arith.constant 0 : i32
    %c0_i32_1 = arith.constant 0 : i32
    return %c0_i32, %c0_i32_0 : i32, i32
  }
  func.func @transform_3(%arg0: i32, %arg1: i32) -> (i32, i32, i32, i32) {
    %c0_i32 = arith.constant 0 : i32
    %c0_i32_0 = arith.constant 0 : i32
    %c0_i32_1 = arith.constant 0 : i32
    return %arg0, %arg1, %c0_i32, %c0_i32_0 : i32, i32, i32, i32
  }
}

module attributes {stable_mosaic.version = 11 : i64} {
  func.func @_conv3x3_kernel(%arg0: i32, %arg1: i32, %arg2: memref<1x18x18x64xbf16, #tpu.memory_space<vmem>>, %arg3: memref<3x192x64xbf16, #tpu.memory_space<vmem>>, %arg4: memref<1x64xf32, #tpu.memory_space<vmem>>, %arg5: memref<1x16x16x64xf32, #tpu.memory_space<vmem>>, %arg6: memref<1x16x16x64xf32, #tpu.memory_space<vmem>>) attributes {dimension_semantics = [#tpu.dimension_semantics<parallel>, #tpu.dimension_semantics<parallel>], iteration_bounds = array<i64: 2, 1>, scalar_prefetch = 0 : i64, scratch_operands = 0 : i64, tpu.core_type = #tpu.core_type<tc>, window_params = [{transform_indices = @transform_0, window_bounds = array<i64: 1, 18, 18, 64>}, {pipeline_mode = #tpu.pipeline_mode<synchronous>, transform_indices = @transform_1, window_bounds = array<i64: 3, 192, 64>}, {pipeline_mode = #tpu.pipeline_mode<synchronous>, transform_indices = @transform_2, window_bounds = array<i64: 1, 64>}, {transform_indices = @transform_3, window_bounds = array<i64: 1, 16, 16, 64>}, {transform_indices = @transform_4, window_bounds = array<i64: 1, 16, 16, 64>}]} {
    %c0 = arith.constant 0 : index
    %c0_0 = arith.constant 0 : index
    %c0_1 = arith.constant 0 : index
    %c0_2 = arith.constant 0 : index
    %0 = vector.load %arg2[%c0, %c0_0, %c0_1, %c0_2] : memref<1x18x18x64xbf16, #tpu.memory_space<vmem>>, vector<1x18x18x64xbf16>
    %1 = vector.shape_cast %0 : vector<1x18x18x64xbf16> to vector<18x18x64xbf16>
    %cst = arith.constant 0.000000e+00 : f32
    %2 = vector.broadcast %cst : f32 to vector<256x64xf32>
    %3 = vector.extract_strided_slice %1 {offsets = [0, 0, 0], sizes = [16, 18, 64], strides = [1, 1, 1]} : vector<18x18x64xbf16> to vector<16x18x64xbf16>
    %4 = vector.extract_strided_slice %3 {offsets = [0, 0, 0], sizes = [16, 16, 64], strides = [1, 1, 1]} : vector<16x18x64xbf16> to vector<16x16x64xbf16>
    %5 = vector.extract_strided_slice %3 {offsets = [0, 1, 0], sizes = [16, 16, 64], strides = [1, 1, 1]} : vector<16x18x64xbf16> to vector<16x16x64xbf16>
    %6 = vector.extract_strided_slice %3 {offsets = [0, 2, 0], sizes = [16, 16, 64], strides = [1, 1, 1]} : vector<16x18x64xbf16> to vector<16x16x64xbf16>
    %7 = tpu.concatenate %4, %5, %6 in 2 : vector<16x16x64xbf16>, vector<16x16x64xbf16>, vector<16x16x64xbf16> -> vector<16x16x192xbf16>
    %8 = vector.shape_cast %7 : vector<16x16x192xbf16> to vector<256x192xbf16>
    %c0_3 = arith.constant 0 : index
    %c0_4 = arith.constant 0 : index
    %c0_5 = arith.constant 0 : index
    %9 = vector.load %arg3[%c0_3, %c0_4, %c0_5] : memref<3x192x64xbf16, #tpu.memory_space<vmem>>, vector<1x192x64xbf16>
    %10 = vector.shape_cast %9 : vector<1x192x64xbf16> to vector<192x64xbf16>
    %cst_6 = arith.constant dense<0.000000e+00> : vector<256x64xf32>
    %11 = tpu.matmul %8, %10, %cst_6 {dimension_numbers = #tpu.dot_dimension_numbers<[1], [0], [0], [1], [0, 0, 1, 1], [], []>} : vector<256x192xbf16>, vector<192x64xbf16>, vector<256x64xf32> -> vector<256x64xf32>
    %12 = arith.addf %2, %11 : vector<256x64xf32>
    %13 = vector.extract_strided_slice %1 {offsets = [1, 0, 0], sizes = [16, 18, 64], strides = [1, 1, 1]} : vector<18x18x64xbf16> to vector<16x18x64xbf16>
    %14 = vector.extract_strided_slice %13 {offsets = [0, 0, 0], sizes = [16, 16, 64], strides = [1, 1, 1]} : vector<16x18x64xbf16> to vector<16x16x64xbf16>
    %15 = vector.extract_strided_slice %13 {offsets = [0, 1, 0], sizes = [16, 16, 64], strides = [1, 1, 1]} : vector<16x18x64xbf16> to vector<16x16x64xbf16>
    %16 = vector.extract_strided_slice %13 {offsets = [0, 2, 0], sizes = [16, 16, 64], strides = [1, 1, 1]} : vector<16x18x64xbf16> to vector<16x16x64xbf16>
    %17 = tpu.concatenate %14, %15, %16 in 2 : vector<16x16x64xbf16>, vector<16x16x64xbf16>, vector<16x16x64xbf16> -> vector<16x16x192xbf16>
    %18 = vector.shape_cast %17 : vector<16x16x192xbf16> to vector<256x192xbf16>
    %c1 = arith.constant 1 : index
    %c0_7 = arith.constant 0 : index
    %c0_8 = arith.constant 0 : index
    %19 = vector.load %arg3[%c1, %c0_7, %c0_8] : memref<3x192x64xbf16, #tpu.memory_space<vmem>>, vector<1x192x64xbf16>
    %20 = vector.shape_cast %19 : vector<1x192x64xbf16> to vector<192x64xbf16>
    %cst_9 = arith.constant dense<0.000000e+00> : vector<256x64xf32>
    %21 = tpu.matmul %18, %20, %cst_9 {dimension_numbers = #tpu.dot_dimension_numbers<[1], [0], [0], [1], [0, 0, 1, 1], [], []>} : vector<256x192xbf16>, vector<192x64xbf16>, vector<256x64xf32> -> vector<256x64xf32>
    %22 = arith.addf %12, %21 : vector<256x64xf32>
    %23 = vector.extract_strided_slice %1 {offsets = [2, 0, 0], sizes = [16, 18, 64], strides = [1, 1, 1]} : vector<18x18x64xbf16> to vector<16x18x64xbf16>
    %24 = vector.extract_strided_slice %23 {offsets = [0, 0, 0], sizes = [16, 16, 64], strides = [1, 1, 1]} : vector<16x18x64xbf16> to vector<16x16x64xbf16>
    %25 = vector.extract_strided_slice %23 {offsets = [0, 1, 0], sizes = [16, 16, 64], strides = [1, 1, 1]} : vector<16x18x64xbf16> to vector<16x16x64xbf16>
    %26 = vector.extract_strided_slice %23 {offsets = [0, 2, 0], sizes = [16, 16, 64], strides = [1, 1, 1]} : vector<16x18x64xbf16> to vector<16x16x64xbf16>
    %27 = tpu.concatenate %24, %25, %26 in 2 : vector<16x16x64xbf16>, vector<16x16x64xbf16>, vector<16x16x64xbf16> -> vector<16x16x192xbf16>
    %28 = vector.shape_cast %27 : vector<16x16x192xbf16> to vector<256x192xbf16>
    %c2 = arith.constant 2 : index
    %c0_10 = arith.constant 0 : index
    %c0_11 = arith.constant 0 : index
    %29 = vector.load %arg3[%c2, %c0_10, %c0_11] : memref<3x192x64xbf16, #tpu.memory_space<vmem>>, vector<1x192x64xbf16>
    %30 = vector.shape_cast %29 : vector<1x192x64xbf16> to vector<192x64xbf16>
    %cst_12 = arith.constant dense<0.000000e+00> : vector<256x64xf32>
    %31 = tpu.matmul %28, %30, %cst_12 {dimension_numbers = #tpu.dot_dimension_numbers<[1], [0], [0], [1], [0, 0, 1, 1], [], []>} : vector<256x192xbf16>, vector<192x64xbf16>, vector<256x64xf32> -> vector<256x64xf32>
    %32 = arith.addf %22, %31 : vector<256x64xf32>
    %c0_13 = arith.constant 0 : index
    %c0_14 = arith.constant 0 : index
    %33 = vector.load %arg4[%c0_13, %c0_14] : memref<1x64xf32, #tpu.memory_space<vmem>>, vector<1x64xf32>
    %34 = vector.broadcast %33 : vector<1x64xf32> to vector<256x64xf32>
    %35 = arith.addf %32, %34 : vector<256x64xf32>
    %cst_15 = arith.constant 0.000000e+00 : f32
    %36 = vector.broadcast %cst_15 : f32 to vector<256x64xf32>
    %37 = arith.maximumf %35, %36 : vector<256x64xf32>
    %38 = vector.shape_cast %37 : vector<256x64xf32> to vector<16x16x64xf32>
    %c0_16 = arith.constant 0 : index
    %c0_17 = arith.constant 0 : index
    %c0_18 = arith.constant 0 : index
    %c0_19 = arith.constant 0 : index
    %39 = vector.load %arg5[%c0_16, %c0_17, %c0_18, %c0_19] : memref<1x16x16x64xf32, #tpu.memory_space<vmem>>, vector<1x16x16x64xf32>
    %40 = vector.shape_cast %39 : vector<1x16x16x64xf32> to vector<16x16x64xf32>
    %41 = arith.addf %38, %40 : vector<16x16x64xf32>
    %c0_20 = arith.constant 0 : index
    %c0_21 = arith.constant 0 : index
    %c0_22 = arith.constant 0 : index
    %c0_23 = arith.constant 0 : index
    %42 = vector.load %arg6[%c0_20, %c0_21, %c0_22, %c0_23] : memref<1x16x16x64xf32, #tpu.memory_space<vmem>>, vector<1x16x16x64xf32>
    %43 = vector.shape_cast %42 : vector<1x16x16x64xf32> to vector<16x16x64xf32>
    %44 = vector.shape_cast %41 : vector<16x16x64xf32> to vector<1x16x16x64xf32>
    tpu.vector_store %arg6[%c0_20, %c0_21, %c0_22, %c0_23], %44 {strides = array<i32>} : memref<1x16x16x64xf32, #tpu.memory_space<vmem>>, vector<1x16x16x64xf32>,
    return
  }
  func.func @transform_0(%arg0: i32, %arg1: i32) -> (i32, i32, i32, i32) {
    %c1_i32 = arith.constant 1 : i32
    %0 = arith.muli %arg0, %c1_i32 : i32
    %1 = arith.addi %0, %arg1 : i32
    %c0_i32 = arith.constant 0 : i32
    %c0_i32_0 = arith.constant 0 : i32
    %c0_i32_1 = arith.constant 0 : i32
    %c0_i32_2 = arith.constant 0 : i32
    return %1, %c0_i32, %c0_i32_0, %c0_i32_1 : i32, i32, i32, i32
  }
  func.func @transform_1(%arg0: i32, %arg1: i32) -> (i32, i32, i32) {
    %c0_i32 = arith.constant 0 : i32
    %c0_i32_0 = arith.constant 0 : i32
    %c0_i32_1 = arith.constant 0 : i32
    %c0_i32_2 = arith.constant 0 : i32
    return %c0_i32, %c0_i32_0, %c0_i32_1 : i32, i32, i32
  }
  func.func @transform_2(%arg0: i32, %arg1: i32) -> (i32, i32) {
    %c0_i32 = arith.constant 0 : i32
    %c0_i32_0 = arith.constant 0 : i32
    %c0_i32_1 = arith.constant 0 : i32
    return %c0_i32, %c0_i32_0 : i32, i32
  }
  func.func @transform_3(%arg0: i32, %arg1: i32) -> (i32, i32, i32, i32) {
    %c0_i32 = arith.constant 0 : i32
    %c0_i32_0 = arith.constant 0 : i32
    %c0_i32_1 = arith.constant 0 : i32
    return %arg0, %arg1, %c0_i32, %c0_i32_0 : i32, i32, i32, i32
  }
  func.func @transform_4(%arg0: i32, %arg1: i32) -> (i32, i32, i32, i32) {
    %c0_i32 = arith.constant 0 : i32
    %c0_i32_0 = arith.constant 0 : i32
    %c0_i32_1 = arith.constant 0 : i32
    return %arg0, %arg1, %c0_i32, %c0_i32_0 : i32, i32, i32, i32
  }
}

module attributes {stable_mosaic.version = 11 : i64} {
  func.func @_conv3x3_kernel(%arg0: i32, %arg1: i32, %arg2: memref<1x18x18x64xbf16, #tpu.memory_space<vmem>>, %arg3: memref<3x192x3xbf16, #tpu.memory_space<vmem>>, %arg4: memref<1x3xf32, #tpu.memory_space<vmem>>, %arg5: memref<1x16x16x3xf32, #tpu.memory_space<vmem>>) attributes {dimension_semantics = [#tpu.dimension_semantics<parallel>, #tpu.dimension_semantics<parallel>], iteration_bounds = array<i64: 2, 1>, scalar_prefetch = 0 : i64, scratch_operands = 0 : i64, tpu.core_type = #tpu.core_type<tc>, window_params = [{transform_indices = @transform_0, window_bounds = array<i64: 1, 18, 18, 64>}, {pipeline_mode = #tpu.pipeline_mode<synchronous>, transform_indices = @transform_1, window_bounds = array<i64: 3, 192, 3>}, {pipeline_mode = #tpu.pipeline_mode<synchronous>, transform_indices = @transform_2, window_bounds = array<i64: 1, 3>}, {transform_indices = @transform_3, window_bounds = array<i64: 1, 16, 16, 3>}]} {
    %c0 = arith.constant 0 : index
    %c0_0 = arith.constant 0 : index
    %c0_1 = arith.constant 0 : index
    %c0_2 = arith.constant 0 : index
    %0 = vector.load %arg2[%c0, %c0_0, %c0_1, %c0_2] : memref<1x18x18x64xbf16, #tpu.memory_space<vmem>>, vector<1x18x18x64xbf16>
    %1 = vector.shape_cast %0 : vector<1x18x18x64xbf16> to vector<18x18x64xbf16>
    %cst = arith.constant 0.000000e+00 : f32
    %2 = vector.broadcast %cst : f32 to vector<256x3xf32>
    %3 = vector.extract_strided_slice %1 {offsets = [0, 0, 0], sizes = [16, 18, 64], strides = [1, 1, 1]} : vector<18x18x64xbf16> to vector<16x18x64xbf16>
    %4 = vector.extract_strided_slice %3 {offsets = [0, 0, 0], sizes = [16, 16, 64], strides = [1, 1, 1]} : vector<16x18x64xbf16> to vector<16x16x64xbf16>
    %5 = vector.extract_strided_slice %3 {offsets = [0, 1, 0], sizes = [16, 16, 64], strides = [1, 1, 1]} : vector<16x18x64xbf16> to vector<16x16x64xbf16>
    %6 = vector.extract_strided_slice %3 {offsets = [0, 2, 0], sizes = [16, 16, 64], strides = [1, 1, 1]} : vector<16x18x64xbf16> to vector<16x16x64xbf16>
    %7 = tpu.concatenate %4, %5, %6 in 2 : vector<16x16x64xbf16>, vector<16x16x64xbf16>, vector<16x16x64xbf16> -> vector<16x16x192xbf16>
    %8 = vector.shape_cast %7 : vector<16x16x192xbf16> to vector<256x192xbf16>
    %c0_3 = arith.constant 0 : index
    %c0_4 = arith.constant 0 : index
    %c0_5 = arith.constant 0 : index
    %9 = vector.load %arg3[%c0_3, %c0_4, %c0_5] : memref<3x192x3xbf16, #tpu.memory_space<vmem>>, vector<1x192x3xbf16>
    %10 = vector.shape_cast %9 : vector<1x192x3xbf16> to vector<192x3xbf16>
    %cst_6 = arith.constant dense<0.000000e+00> : vector<256x3xf32>
    %11 = tpu.matmul %8, %10, %cst_6 {dimension_numbers = #tpu.dot_dimension_numbers<[1], [0], [0], [1], [0, 0, 1, 1], [], []>} : vector<256x192xbf16>, vector<192x3xbf16>, vector<256x3xf32> -> vector<256x3xf32>
    %12 = arith.addf %2, %11 : vector<256x3xf32>
    %13 = vector.extract_strided_slice %1 {offsets = [1, 0, 0], sizes = [16, 18, 64], strides = [1, 1, 1]} : vector<18x18x64xbf16> to vector<16x18x64xbf16>
    %14 = vector.extract_strided_slice %13 {offsets = [0, 0, 0], sizes = [16, 16, 64], strides = [1, 1, 1]} : vector<16x18x64xbf16> to vector<16x16x64xbf16>
    %15 = vector.extract_strided_slice %13 {offsets = [0, 1, 0], sizes = [16, 16, 64], strides = [1, 1, 1]} : vector<16x18x64xbf16> to vector<16x16x64xbf16>
    %16 = vector.extract_strided_slice %13 {offsets = [0, 2, 0], sizes = [16, 16, 64], strides = [1, 1, 1]} : vector<16x18x64xbf16> to vector<16x16x64xbf16>
    %17 = tpu.concatenate %14, %15, %16 in 2 : vector<16x16x64xbf16>, vector<16x16x64xbf16>, vector<16x16x64xbf16> -> vector<16x16x192xbf16>
    %18 = vector.shape_cast %17 : vector<16x16x192xbf16> to vector<256x192xbf16>
    %c1 = arith.constant 1 : index
    %c0_7 = arith.constant 0 : index
    %c0_8 = arith.constant 0 : index
    %19 = vector.load %arg3[%c1, %c0_7, %c0_8] : memref<3x192x3xbf16, #tpu.memory_space<vmem>>, vector<1x192x3xbf16>
    %20 = vector.shape_cast %19 : vector<1x192x3xbf16> to vector<192x3xbf16>
    %cst_9 = arith.constant dense<0.000000e+00> : vector<256x3xf32>
    %21 = tpu.matmul %18, %20, %cst_9 {dimension_numbers = #tpu.dot_dimension_numbers<[1], [0], [0], [1], [0, 0, 1, 1], [], []>} : vector<256x192xbf16>, vector<192x3xbf16>, vector<256x3xf32> -> vector<256x3xf32>
    %22 = arith.addf %12, %21 : vector<256x3xf32>
    %23 = vector.extract_strided_slice %1 {offsets = [2, 0, 0], sizes = [16, 18, 64], strides = [1, 1, 1]} : vector<18x18x64xbf16> to vector<16x18x64xbf16>
    %24 = vector.extract_strided_slice %23 {offsets = [0, 0, 0], sizes = [16, 16, 64], strides = [1, 1, 1]} : vector<16x18x64xbf16> to vector<16x16x64xbf16>
    %25 = vector.extract_strided_slice %23 {offsets = [0, 1, 0], sizes = [16, 16, 64], strides = [1, 1, 1]} : vector<16x18x64xbf16> to vector<16x16x64xbf16>
    %26 = vector.extract_strided_slice %23 {offsets = [0, 2, 0], sizes = [16, 16, 64], strides = [1, 1, 1]} : vector<16x18x64xbf16> to vector<16x16x64xbf16>
    %27 = tpu.concatenate %24, %25, %26 in 2 : vector<16x16x64xbf16>, vector<16x16x64xbf16>, vector<16x16x64xbf16> -> vector<16x16x192xbf16>
    %28 = vector.shape_cast %27 : vector<16x16x192xbf16> to vector<256x192xbf16>
    %c2 = arith.constant 2 : index
    %c0_10 = arith.constant 0 : index
    %c0_11 = arith.constant 0 : index
    %29 = vector.load %arg3[%c2, %c0_10, %c0_11] : memref<3x192x3xbf16, #tpu.memory_space<vmem>>, vector<1x192x3xbf16>
    %30 = vector.shape_cast %29 : vector<1x192x3xbf16> to vector<192x3xbf16>
    %cst_12 = arith.constant dense<0.000000e+00> : vector<256x3xf32>
    %31 = tpu.matmul %28, %30, %cst_12 {dimension_numbers = #tpu.dot_dimension_numbers<[1], [0], [0], [1], [0, 0, 1, 1], [], []>} : vector<256x192xbf16>, vector<192x3xbf16>, vector<256x3xf32> -> vector<256x3xf32>
    %32 = arith.addf %22, %31 : vector<256x3xf32>
    %c0_13 = arith.constant 0 : index
    %c0_14 = arith.constant 0 : index
    %33 = vector.load %arg4[%c0_13, %c0_14] : memref<1x3xf32, #tpu.memory_space<vmem>>, vector<1x3xf32>
    %34 = vector.broadcast %33 : vector<1x3xf32> to vector<256x3xf32>
    %35 = arith.addf %32, %34 : vector<256x3xf32>
    %cst_15 = arith.constant 0.000000e+00 : f32
    %36 = vector.broadcast %cst_15 : f32 to vector<256x3xf32>
    %37 = arith.subf %36, %35 : vector<256x3xf32>
    %38 = math.exp %37 : vector<256x3xf32>
    %cst_16 = arith.constant 1.000000e+00 : f32
    %39 = vector.broadcast %cst_16 : f32 to vector<256x3xf32>
    %40 = arith.addf %39, %38 : vector<256x3xf32>
    %41 = tpu.reciprocal %40 {approx = true} : vector<256x3xf32> -> vector<256x3xf32>
    %cst_17 = arith.constant 9.99999974E-5 : f32
    %cst_18 = arith.constant 1.000000e+00 : f32
    %42 = vector.broadcast %cst_17 : f32 to vector<256x3xf32>
    %43 = arith.maximumf %42, %41 : vector<256x3xf32>
    %44 = vector.broadcast %cst_18 : f32 to vector<256x3xf32>
    %45 = arith.minimumf %44, %43 : vector<256x3xf32>
    %46 = vector.shape_cast %45 : vector<256x3xf32> to vector<16x16x3xf32>
    %c0_19 = arith.constant 0 : index
    %c0_20 = arith.constant 0 : index
    %c0_21 = arith.constant 0 : index
    %c0_22 = arith.constant 0 : index
    %47 = vector.load %arg5[%c0_19, %c0_20, %c0_21, %c0_22] : memref<1x16x16x3xf32, #tpu.memory_space<vmem>>, vector<1x16x16x3xf32>
    %48 = vector.shape_cast %47 : vector<1x16x16x3xf32> to vector<16x16x3xf32>
    %49 = vector.shape_cast %46 : vector<16x16x3xf32> to vector<1x16x16x3xf32>
    tpu.vector_store %arg5[%c0_19, %c0_20, %c0_21, %c0_22], %49 {strides = array<i32>} : memref<1x16x16x3xf32, #tpu.memory_space<vmem>>, vector<1x16x16x3xf32>,
    return
  }
  func.func @transform_0(%arg0: i32, %arg1: i32) -> (i32, i32, i32, i32) {
    %c1_i32 = arith.constant 1 : i32
    %0 = arith.muli %arg0, %c1_i32 : i32
    %1 = arith.addi %0, %arg1 : i32
    %c0_i32 = arith.constant 0 : i32
    %c0_i32_0 = arith.constant 0 : i32
    %c0_i32_1 = arith.constant 0 : i32
    %c0_i32_2 = arith.constant 0 : i32
    return %1, %c0_i32, %c0_i32_0, %c0_i32_1 : i32, i32, i32, i32
  }
  func.func @transform_1(%arg0: i32, %arg1: i32) -> (i32, i32, i32) {
    %c0_i32 = arith.constant 0 : i32
    %c0_i32_0 = arith.constant 0 : i32
    %c0_i32_1 = arith.constant 0 : i32
    %c0_i32_2 = arith.constant 0 : i32
    return %c0_i32, %c0_i32_0, %c0_i32_1 : i32, i32, i32
  }
  func.func @transform_2(%arg0: i32, %arg1: i32) -> (i32, i32) {
    %c0_i32 = arith.constant 0 : i32
    %c0_i32_0 = arith.constant 0 : i32
    %c0_i32_1 = arith.constant 0 : i32
    return %c0_i32, %c0_i32_0 : i32, i32
  }
  func.func @transform_3(%arg0: i32, %arg1: i32) -> (i32, i32, i32, i32) {
    %c0_i32 = arith.constant 0 : i32
    %c0_i32_0 = arith.constant 0 : i32
    %c0_i32_1 = arith.constant 0 : i32
    return %arg0, %arg1, %c0_i32, %c0_i32_0 : i32, i32, i32, i32
  }
}

</mosaic_0001>

<llo_original>
// kernel: enhancer_forward.5
$region0: #{enhancer_forward.5}
  #allocation0 [shape = 'u32[]', space=smem, size = 0x4, offset = 0x4, fixed_abs, tag = 'smem constant byte address 0x4 - core index']
  #allocation1 [shape = 'u32[72,128]{1,0:T(1,128)}', space=vmem, size = 0x9000, scoped, tag = 'internal scratch']
  %s0 = inlined_call_operand.vmem [shape: bf16[2,18,18,8], index: 0, kind: input, shape index: {}]
  %s1 = inlined_call_operand.vmem [shape: bf16[3,24,64], index: 1, kind: input, shape index: {}]
  %s2 = inlined_call_operand.vmem [shape: f32[1,64], index: 2, kind: input, shape index: {}]
  %s3 = inlined_call_operand.vmem [shape: f32[2,16,16,64], index: 3, kind: output, shape index: {}]
  %s4 = sld [smem:[#allocation0]]
  $region45: #{enhancer_forward.5} parent=0
    _
  %s6 = ssub.s32 1, %s4
  %s7 = scalar_select 0, %s6, %s4
  loop: start=0, step=1, limit=4
  $region2: #{enhancer_forward.5} parent=0 // loop_pre_header
    _
  $region3: #{enhancer_forward.5} parent=0 // loop_header
    %s9 = sphi 0, %s13
    %p10 = scmp.ge.s32.totalorder %s9, 4
    %s16 = sphi 0, %s28
    %s17 = sphi 0, %s24
    %s18 = sphi 0, %s16
    %s19 = sphi 0, %s17
    %s20 = sphi 0, %s18
    %s21 = sphi 0, %s19
    %s33 = sphi 0, %s35
    %s36 = sphi 0, %s33
    %s37 = sphi 0, %s36
    %s53 = sphi 0, %s37
    %s57 = sphi 0, %s57
    %s59 = sphi 0, %s57
    %s60 = sphi 0, %s59
    %s74 = sphi 0, %s60
    %s78 = sphi 0, %s78
    %s80 = sphi 0, %s78
    %s81 = sphi 0, %s80
    %s95 = sphi 0, %s81
    %s103 = sphi 0, %s105
    %s106 = sphi 0, %s103
    %s107 = sphi 0, %s106
    %s123 = sphi 0, %s107
  $region4: #{enhancer_forward.5} parent=0 // loop_header_branch
    %12 = sbr.rel (%p10) target = $region8
  $region5: #{enhancer_forward.5} parent=0 // loop_body
    %s14 = ssub.s32 %s9, 1
    %s15 = ssub.s32 %s9, 2
    %s22 = sadd.s32 1, %s17
    %p23 = scmp.ge.s32.totalorder %s22, 1
    %s24 = scalar_select %p23, 0, %s22
    %s25 = sadd.s32 1, %s16
    %s26 = scalar_select %p23, %s25, %s16
    %p27 = scmp.ge.s32.totalorder %s26, 2
    %s28 = scalar_select %p27, 0, %s26
    %s29 = sadd.s32 %s16, %s17
    %s30 = sadd.s32 %s28, %s24
    %s31 = ssub.s32 %s29, %s30
    %p32 = scmp.eq.s32.totalorder %s31, 0
    %s34 = sadd.s32 %s33, 1
    %s35 = scalar_select %p32, %s33, %s34
    %p38 = pneg %p32
    %p39 = scmp.eq.s32.totalorder %s9, 1
    %p40 = por %p38, %p39
    %p41 = scmp.ne.s32.totalorder %s33, %s36
    %p42 = scmp.eq.s32.totalorder %s9, 0
    %p43 = por %p41, %p42
    %p44 = scmp.ne.s32.totalorder %s33, %s36
    %p45 = scmp.eq.s32.totalorder %s14, 1
    %p46 = por %p44, %p45
    %p47 = scmp.ne.s32.totalorder %s36, %s37
    %p48 = scmp.eq.s32.totalorder %s14, 0
    %p49 = por %p47, %p48
    %p50 = scmp.ne.s32.totalorder %s36, %s37
    %p51 = scmp.eq.s32.totalorder %s15, 1
    %p52 = por %p50, %p51
    %p54 = scmp.ne.s32.totalorder %s37, %s53
    %p55 = scmp.eq.s32.totalorder %s15, 0
    %p56 = por %p54, %p55
    %s58 = sadd.s32 %s57, 1
    %p61 = scmp.eq.s32.totalorder %s9, 1
    %p62 = scmp.ne.s32.totalorder %s57, %s59
    %p63 = scmp.eq.s32.totalorder %s9, 0
    %p64 = por %p62, %p63
    %p65 = scmp.ne.s32.totalorder %s57, %s59
    %p66 = scmp.eq.s32.totalorder %s14, 1
    %p67 = por %p65, %p66
    %p68 = scmp.ne.s32.totalorder %s59, %s60
    %p69 = scmp.eq.s32.totalorder %s14, 0
    %p70 = por %p68, %p69
    %p71 = scmp.ne.s32.totalorder %s59, %s60
    %p72 = scmp.eq.s32.totalorder %s15, 1
    %p73 = por %p71, %p72
    %p75 = scmp.ne.s32.totalorder %s60, %s74
    %p76 = scmp.eq.s32.totalorder %s15, 0
    %p77 = por %p75, %p76
    %s79 = sadd.s32 %s78, 1
    %p82 = scmp.eq.s32.totalorder %s9, 1
    %p83 = scmp.ne.s32.totalorder %s78, %s80
    %p84 = scmp.eq.s32.totalorder %s9, 0
    %p85 = por %p83, %p84
    %p86 = scmp.ne.s32.totalorder %s78, %s80
    %p87 = scmp.eq.s32.totalorder %s14, 1
    %p88 = por %p86, %p87
    %p89 = scmp.ne.s32.totalorder %s80, %s81
    %p90 = scmp.eq.s32.totalorder %s14, 0
    %p91 = por %p89, %p90
    %p92 = scmp.ne.s32.totalorder %s80, %s81
    %p93 = scmp.eq.s32.totalorder %s15, 1
    %p94 = por %p92, %p93
    %p96 = scmp.ne.s32.totalorder %s81, %s95
    %p97 = scmp.eq.s32.totalorder %s15, 0
    %p98 = por %p96, %p97
    %s99 = ssub.s32 %s16, %s28
    %s100 = ssub.s32 %s17, %s24
    %s101 = sor.u32 %s99, %s100
    %p102 = scmp.eq.s32.totalorder %s101, 0
    %s104 = sadd.s32 %s103, 1
    %s105 = scalar_select %p102, %s103, %s104
    %p108 = pneg %p102
    %p109 = scmp.eq.s32.totalorder %s9, 1
    %p110 = por %p108, %p109
    %p111 = scmp.ne.s32.totalorder %s103, %s106
    %p112 = scmp.eq.s32.totalorder %s9, 0
    %p113 = por %p111, %p112
    %p114 = scmp.ne.s32.totalorder %s103, %s106
    %p115 = scmp.eq.s32.totalorder %s14, 1
    %p116 = por %p114, %p115
    %p117 = scmp.ne.s32.totalorder %s106, %s107
    %p118 = scmp.eq.s32.totalorder %s14, 0
    %p119 = por %p117, %p118
    %p120 = scmp.ne.s32.totalorder %s106, %s107
    %p121 = scmp.eq.s32.totalorder %s15, 1
    %p122 = por %p120, %p121
    %p124 = scmp.ne.s32.totalorder %s107, %s123
    %p125 = scmp.eq.s32.totalorder %s15, 0
    %p126 = por %p124, %p125
    %p127 = scmp.le.s32.totalorder 1, %s9
    %p128 = scmp.lt.s32.totalorder %s9, 3
    %p129 = pnand %p127, %p128
    %p130 = pneg %p129
    // Predicated region
    $region9: #{enhancer_forward.5} parent=5 // pred_check
      _
    $region10: #{enhancer_forward.5} parent=5 // pred_check_branch
      %132 = sbr.rel (%p129) target = $region12
    $region11: #{enhancer_forward.5} parent=5 // pred_region
      %s133 = ssub.s32 %s9, 1
      // Predicated region
      $region13: #{enhancer_forward.5} parent=11 // pred_check
        %p134 = pneg %p70
      $region14: #{enhancer_forward.5} parent=11 // pred_check_branch
        %136 = sbr.rel (%p134) target = $region16
      $region15: #{enhancer_forward.5} parent=11 // pred_region
        _
      $region16: #{enhancer_forward.5} parent=11 // pred_fallthru
        _
      // Predicated region
      $region17: #{enhancer_forward.5} parent=11 // pred_check
        %p137 = pneg %p91
      $region18: #{enhancer_forward.5} parent=11 // pred_check_branch
        %139 = sbr.rel (%p137) target = $region20
      $region19: #{enhancer_forward.5} parent=11 // pred_region
        _
      $region20: #{enhancer_forward.5} parent=11 // pred_fallthru
        _
    $region12: #{enhancer_forward.5} parent=5 // pred_fallthru
      _
    %p140 = scmp.lt.s32.totalorder %s9, 2
    // Predicated region
    $region21: #{enhancer_forward.5} parent=5 // pred_check
      %p141 = pneg %p140
    $region22: #{enhancer_forward.5} parent=5 // pred_check_branch
      %143 = sbr.rel (%p141) target = $region24
    $region23: #{enhancer_forward.5} parent=5 // pred_region
      // Predicated region
      $region25: #{enhancer_forward.5} parent=23 // pred_check
        %p144 = pneg %p43
      $region26: #{enhancer_forward.5} parent=23 // pred_check_branch
        %146 = sbr.rel (%p144) target = $region28
      $region27: #{enhancer_forward.5} parent=23 // pred_region
        %s147 = sadd.s32 %s16, %s17
        %p148 = scmp.lt.s32.totalorder %s147, 1
        %s149 = scalar_select %p148, %s147, 1
        %s150 = smul.addr %s149, 54
        %s151 = smul.addr %s150, 4
        %s152 = scalar_lea.vmem %s0, %s151
        %s153 = sadd.s32 %s16, %s17
      $region28: #{enhancer_forward.5} parent=23 // pred_fallthru
        _
    $region24: #{enhancer_forward.5} parent=5 // pred_fallthru
      _
    %p154 = scmp.le.s32.totalorder 1, %s9
    %p155 = scmp.lt.s32.totalorder %s9, 3
    %p156 = pnand %p154, %p155
    %p157 = pneg %p156
    // Predicated region
    $region29: #{enhancer_forward.5} parent=5 // pred_check
      _
    $region30: #{enhancer_forward.5} parent=5 // pred_check_branch
      %159 = sbr.rel (%p156) target = $region32
    $region31: #{enhancer_forward.5} parent=5 // pred_region
      %s160 = ssub.s32 %s9, 1
      %s161 = sadd.s32 %s18, %s19
      %p162 = scmp.lt.s32.totalorder %s161, 1
      %s163 = scalar_select %p162, %s161, 1
      %s164 = smul.addr %s163, 54
      %s165 = smul.addr %s164, 4
      %s166 = scalar_lea.vmem %s0, %s165
      %p167 = pneg %p49
      %p168 = pneg %p46
      %p169 = pneg %p70
      %p170 = pneg %p67
      %p171 = pneg %p91
      %p172 = pneg %p88
      %p173 = pneg %p119
      %p174 = pneg %p116
      %s175 = smul.u32 16, %s19
      %p176 = scmp.lt.s32.totalorder %s18, 1
      %s177 = scalar_select %p176, %s18, 1
      %p178 = scmp.lt.s32.totalorder %s175, 15
      %s179 = scalar_select %p178, %s175, 15
      %s180 = smul.addr %s179, 2
      %s181 = smul.addr %s177, 32
      %s182 = sadd.s32 %s180, %s181
      %s183 = smul.addr %s182, 8
      %s184 = scalar_lea.vmem %s3, %s183
      %s185 = sadd.s32 %s18, %s19
      %p186 = scmp.lt.s32.totalorder %s185, 1
      %s187 = scalar_select %p186, %s185, 1
      %s188 = smul.addr %s187, 54
      %s189 = smul.addr %s188, 4
      %s190 = scalar_lea.vmem %s0, %s189
      %s191 = sadd.s32 %s18, %s19
      %s192 = smul.u32 16, %s19
      %p193 = scmp.lt.s32.totalorder %s18, 1
      %s194 = scalar_select %p193, %s18, 1
      %p195 = scmp.lt.s32.totalorder %s192, 15
      %s196 = scalar_select %p195, %s192, 15
      %s197 = smul.addr %s196, 2
      %s198 = smul.addr %s194, 32
      %s199 = sadd.s32 %s197, %s198
      %s200 = smul.addr %s199, 8
      %s201 = scalar_lea.vmem %s3, %s200
      %s202 = smul.u32 16, %s19
      %v204 = vld [vmem:[%s190] sm:$0xf]
      %v205 = vld [vmem:[%s190 + $0x4] sm:$0xf]
      %v206 = vld [vmem:[%s190 + $0x8] sm:$0x1]
      %v207 = vld [vmem:[%s190 + $0xc] sm:$0xf]
      %v208 = vld [vmem:[%s190 + $0x10] sm:$0xf]
      %v209 = vld [vmem:[%s190 + $0x14] sm:$0x1]
      %v210 = vld [vmem:[%s190 + $0x18] sm:$0xf]
      %v211 = vld [vmem:[%s190 + $0x1c] sm:$0xf]
      %v212 = vld [vmem:[%s190 + $0x20] sm:$0x1]
      %v213 = vld [vmem:[%s190 + $0x24] sm:$0xf]
      %v214 = vld [vmem:[%s190 + $0x28] sm:$0xf]
      %v215 = vld [vmem:[%s190 + $0x2c] sm:$0x1]
      %v216 = vld [vmem:[%s190 + $0x30] sm:$0xf]
      %v217 = vld [vmem:[%s190 + $0x34] sm:$0xf]
      %v218 = vld [vmem:[%s190 + $0x38] sm:$0x1]
      %v219 = vld [vmem:[%s190 + $0x3c] sm:$0xf]
      %v220 = vld [vmem:[%s190 + $0x40] sm:$0xf]
      %v221 = vld [vmem:[%s190 + $0x44] sm:$0x1]
      %v222 = vld [vmem:[%s190 + $0x48] sm:$0xf]
      %v223 = vld [vmem:[%s190 + $0x4c] sm:$0xf]
      %v224 = vld [vmem:[%s190 + $0x50] sm:$0x1]
      %v225 = vld [vmem:[%s190 + $0x54] sm:$0xf]
      %v226 = vld [vmem:[%s190 + $0x58] sm:$0xf]
      %v227 = vld [vmem:[%s190 + $0x5c] sm:$0x1]
      %v228 = vld [vmem:[%s190 + $0x60] sm:$0xf]
      %v229 = vld [vmem:[%s190 + $0x64] sm:$0xf]
      %v230 = vld [vmem:[%s190 + $0x68] sm:$0x1]
      %v231 = vld [vmem:[%s190 + $0x6c] sm:$0xf]
      %v232 = vld [vmem:[%s190 + $0x70] sm:$0xf]
      %v233 = vld [vmem:[%s190 + $0x74] sm:$0x1]
      %v234 = vld [vmem:[%s190 + $0x78] sm:$0xf]
      %v235 = vld [vmem:[%s190 + $0x7c] sm:$0xf]
      %v236 = vld [vmem:[%s190 + $0x80] sm:$0x1]
      %v237 = vld [vmem:[%s190 + $0x84] sm:$0xf]
      %v238 = vld [vmem:[%s190 + $0x88] sm:$0xf]
      %v239 = vld [vmem:[%s190 + $0x8c] sm:$0x1]
      %v240 = vld [vmem:[%s190 + $0x90] sm:$0xf]
      %v241 = vld [vmem:[%s190 + $0x94] sm:$0xf]
      %v242 = vld [vmem:[%s190 + $0x98] sm:$0x1]
      %v243 = vld [vmem:[%s190 + $0x9c] sm:$0xf]
      %v244 = vld [vmem:[%s190 + $0xa0] sm:$0xf]
      %v245 = vld [vmem:[%s190 + $0xa4] sm:$0x1]
      %v246 = vld [vmem:[%s190 + $0xa8] sm:$0xf]
      %v247 = vld [vmem:[%s190 + $0xac] sm:$0xf]
      %v248 = vld [vmem:[%s190 + $0xb0] sm:$0x1]
      %v249 = vld [vmem:[%s190 + $0xb4] sm:$0xf]
      %v250 = vld [vmem:[%s190 + $0xb8] sm:$0xf]
      %v251 = vld [vmem:[%s190 + $0xbc] sm:$0x1]
      %v252 = vld [vmem:[%s190 + $0xc0] sm:$0xf]
      %v253 = vld [vmem:[%s190 + $0xc4] sm:$0xf]
      %v254 = vld [vmem:[%s190 + $0xc8] sm:$0x1]
      %v255 = vld [vmem:[%s190 + $0xcc] sm:$0xf]
      %v256 = vld [vmem:[%s190 + $0xd0] sm:$0xf]
      %v257 = vld [vmem:[%s190 + $0xd4] sm:$0x1]
      %v290 = vunpack.c.l.b16 %v204
      %v291 = vunpack.c.l.b16 %v205
      %v292 = vunpack.c.l.b16 %v207
      %v293 = vunpack.c.l.b16 %v208
      %v294 = vunpack.c.l.b16 %v210
      %v295 = vunpack.c.l.b16 %v211
      %v296 = vunpack.c.l.b16 %v213
      %v297 = vunpack.c.l.b16 %v214
      %v298 = vunpack.c.l.b16 %v216
      %v299 = vunpack.c.l.b16 %v217
      %v300 = vunpack.c.l.b16 %v219
      %v301 = vunpack.c.l.b16 %v220
      %v302 = vunpack.c.l.b16 %v222
      %v303 = vunpack.c.l.b16 %v223
      %v304 = vunpack.c.l.b16 %v225
      %v305 = vunpack.c.l.b16 %v226
      %v306 = vunpack.c.l.b16 %v228
      %v307 = vunpack.c.l.b16 %v229
      %v308 = vunpack.c.l.b16 %v231
      %v309 = vunpack.c.l.b16 %v232
      %v310 = vunpack.c.l.b16 %v234
      %v311 = vunpack.c.l.b16 %v235
      %v312 = vunpack.c.l.b16 %v237
      %v313 = vunpack.c.l.b16 %v238
      %v314 = vunpack.c.l.b16 %v240
      %v315 = vunpack.c.l.b16 %v241
      %v316 = vunpack.c.l.b16 %v243
      %v317 = vunpack.c.l.b16 %v244
      %v318 = vunpack.c.l.b16 %v246
      %v319 = vunpack.c.l.b16 %v247
      %v320 = vunpack.c.l.b16 %v249
      %v321 = vunpack.c.l.b16 %v250
      %v322 = vpack.c.b16 %v291, %v290
      %v323 = vpack.c.b16 %v293, %v292
      %v324 = vpack.c.b16 %v295, %v294
      %v325 = vpack.c.b16 %v297, %v296
      %v326 = vpack.c.b16 %v299, %v298
      %v327 = vpack.c.b16 %v301, %v300
      %v328 = vpack.c.b16 %v303, %v302
      %v329 = vpack.c.b16 %v305, %v304
      %v330 = vpack.c.b16 %v307, %v306
      %v331 = vpack.c.b16 %v309, %v308
      %v332 = vpack.c.b16 %v311, %v310
      %v333 = vpack.c.b16 %v313, %v312
      %v334 = vpack.c.b16 %v315, %v314
      %v335 = vpack.c.b16 %v317, %v316
      %v336 = vpack.c.b16 %v319, %v318
      %v337 = vpack.c.b16 %v321, %v320
      %v354 = vunpack.c.l.b16 %v206
      %v355 = vunpack.c.l.b16 %v209
      %v356 = vunpack.c.l.b16 %v212
      %v357 = vunpack.c.l.b16 %v215
      %v358 = vunpack.c.l.b16 %v218
      %v359 = vunpack.c.l.b16 %v221
      %v360 = vunpack.c.l.b16 %v224
      %v361 = vunpack.c.l.b16 %v227
      %v362 = vunpack.c.l.b16 %v230
      %v363 = vunpack.c.l.b16 %v233
      %v364 = vunpack.c.l.b16 %v236
      %v365 = vunpack.c.l.b16 %v239
      %v366 = vunpack.c.l.b16 %v242
      %v367 = vunpack.c.l.b16 %v245
      %v368 = vunpack.c.l.b16 %v248
      %v369 = vunpack.c.l.b16 %v251
      %v370 = vpack.c.b16 %v354, %v354
      %v371 = vpack.c.b16 %v355, %v355
      %v372 = vpack.c.b16 %v356, %v356
      %v373 = vpack.c.b16 %v357, %v357
      %v374 = vpack.c.b16 %v358, %v358
      %v375 = vpack.c.b16 %v359, %v359
      %v376 = vpack.c.b16 %v360, %v360
      %v377 = vpack.c.b16 %v361, %v361
      %v378 = vpack.c.b16 %v362, %v362
      %v379 = vpack.c.b16 %v363, %v363
      %v380 = vpack.c.b16 %v364, %v364
      %v381 = vpack.c.b16 %v365, %v365
      %v382 = vpack.c.b16 %v366, %v366
      %v383 = vpack.c.b16 %v367, %v367
      %v384 = vpack.c.b16 %v368, %v368
      %v385 = vpack.c.b16 %v369, %v369
      %vm386 = vsmask.f32 7424
      %v388 = vshrl.u32 %v322, 16
      %v390 = vshll.u32 %v322, 16
      %v392 = vrot.slane %v390, 1
      %v393 = vor.u32 %v388, %v392
      %v395 = vshll.u32 %v370, 16
      %v397 = vrot.slane %v395, 1
      %v398 = vsel %vm386, %v393, %v397
      %v400 = vshrl.u32 %v323, 16
      %v402 = vshll.u32 %v323, 16
      %v404 = vrot.slane %v402, 1
      %v405 = vor.u32 %v400, %v404
      %v407 = vshll.u32 %v371, 16
      %v409 = vrot.slane %v407, 1
      %v410 = vsel %vm386, %v405, %v409
      %v412 = vshrl.u32 %v324, 16
      %v414 = vshll.u32 %v324, 16
      %v416 = vrot.slane %v414, 1
      %v417 = vor.u32 %v412, %v416
      %v419 = vshll.u32 %v372, 16
      %v421 = vrot.slane %v419, 1
      %v422 = vsel %vm386, %v417, %v421
      %v424 = vshrl.u32 %v325, 16
      %v426 = vshll.u32 %v325, 16
      %v428 = vrot.slane %v426, 1
      %v429 = vor.u32 %v424, %v428
      %v431 = vshll.u32 %v373, 16
      %v433 = vrot.slane %v431, 1
      %v434 = vsel %vm386, %v429, %v433
      %v436 = vshrl.u32 %v326, 16
      %v438 = vshll.u32 %v326, 16
      %v440 = vrot.slane %v438, 1
      %v441 = vor.u32 %v436, %v440
      %v443 = vshll.u32 %v374, 16
      %v445 = vrot.slane %v443, 1
      %v446 = vsel %vm386, %v441, %v445
      %v448 = vshrl.u32 %v327, 16
      %v450 = vshll.u32 %v327, 16
      %v452 = vrot.slane %v450, 1
      %v453 = vor.u32 %v448, %v452
      %v455 = vshll.u32 %v375, 16
      %v457 = vrot.slane %v455, 1
      %v458 = vsel %vm386, %v453, %v457
      %v460 = vshrl.u32 %v328, 16
      %v462 = vshll.u32 %v328, 16
      %v464 = vrot.slane %v462, 1
      %v465 = vor.u32 %v460, %v464
      %v467 = vshll.u32 %v376, 16
      %v469 = vrot.slane %v467, 1
      %v470 = vsel %vm386, %v465, %v469
      %v472 = vshrl.u32 %v329, 16
      %v474 = vshll.u32 %v329, 16
      %v476 = vrot.slane %v474, 1
      %v477 = vor.u32 %v472, %v476
      %v479 = vshll.u32 %v377, 16
      %v481 = vrot.slane %v479, 1
      %v482 = vsel %vm386, %v477, %v481
      %v484 = vshrl.u32 %v330, 16
      %v486 = vshll.u32 %v330, 16
      %v488 = vrot.slane %v486, 1
      %v489 = vor.u32 %v484, %v488
      %v491 = vshll.u32 %v378, 16
      %v493 = vrot.slane %v491, 1
      %v494 = vsel %vm386, %v489, %v493
      %v496 = vshrl.u32 %v331, 16
      %v498 = vshll.u32 %v331, 16
      %v500 = vrot.slane %v498, 1
      %v501 = vor.u32 %v496, %v500
      %v503 = vshll.u32 %v379, 16
      %v505 = vrot.slane %v503, 1
      %v506 = vsel %vm386, %v501, %v505
      %v508 = vshrl.u32 %v332, 16
      %v510 = vshll.u32 %v332, 16
      %v512 = vrot.slane %v510, 1
      %v513 = vor.u32 %v508, %v512
      %v515 = vshll.u32 %v380, 16
      %v517 = vrot.slane %v515, 1
      %v518 = vsel %vm386, %v513, %v517
      %v520 = vshrl.u32 %v333, 16
      %v522 = vshll.u32 %v333, 16
      %v524 = vrot.slane %v522, 1
      %v525 = vor.u32 %v520, %v524
      %v527 = vshll.u32 %v381, 16
      %v529 = vrot.slane %v527, 1
      %v530 = vsel %vm386, %v525, %v529
      %v532 = vshrl.u32 %v334, 16
      %v534 = vshll.u32 %v334, 16
      %v536 = vrot.slane %v534, 1
      %v537 = vor.u32 %v532, %v536
      %v539 = vshll.u32 %v382, 16
      %v541 = vrot.slane %v539, 1
      %v542 = vsel %vm386, %v537, %v541
      %v544 = vshrl.u32 %v335, 16
      %v546 = vshll.u32 %v335, 16
      %v548 = vrot.slane %v546, 1
      %v549 = vor.u32 %v544, %v548
      %v551 = vshll.u32 %v383, 16
      %v553 = vrot.slane %v551, 1
      %v554 = vsel %vm386, %v549, %v553
      %v556 = vshrl.u32 %v336, 16
      %v558 = vshll.u32 %v336, 16
      %v560 = vrot.slane %v558, 1
      %v561 = vor.u32 %v556, %v560
      %v563 = vshll.u32 %v384, 16
      %v565 = vrot.slane %v563, 1
      %v566 = vsel %vm386, %v561, %v565
      %v568 = vshrl.u32 %v337, 16
      %v570 = vshll.u32 %v337, 16
      %v572 = vrot.slane %v570, 1
      %v573 = vor.u32 %v568, %v572
      %v575 = vshll.u32 %v385, 16
      %v577 = vrot.slane %v575, 1
      %v578 = vsel %vm386, %v573, %v577
      %579 = vrot.lane.b32.xlu0 %v398, 8
      %v580 = vpop.permute.xlu0 %579
      %581 = vrot.lane.b32.xlu0 %v410, 8
      %v582 = vpop.permute.xlu0 %581
      %583 = vrot.lane.b32.xlu0 %v422, 8
      %v584 = vpop.permute.xlu0 %583
      %585 = vrot.lane.b32.xlu0 %v434, 8
      %v586 = vpop.permute.xlu0 %585
      %587 = vrot.lane.b32.xlu0 %v446, 8
      %v588 = vpop.permute.xlu0 %587
      %589 = vrot.lane.b32.xlu0 %v458, 8
      %v590 = vpop.permute.xlu0 %589
      %591 = vrot.lane.b32.xlu0 %v470, 8
      %v592 = vpop.permute.xlu0 %591
      %593 = vrot.lane.b32.xlu0 %v482, 8
      %v594 = vpop.permute.xlu0 %593
      %595 = vrot.lane.b32.xlu0 %v494, 8
      %v596 = vpop.permute.xlu0 %595
      %597 = vrot.lane.b32.xlu0 %v506, 8
      %v598 = vpop.permute.xlu0 %597
      %599 = vrot.lane.b32.xlu0 %v518, 8
      %v600 = vpop.permute.xlu0 %599
      %601 = vrot.lane.b32.xlu0 %v530, 8
      %v602 = vpop.permute.xlu0 %601
      %603 = vrot.lane.b32.xlu0 %v542, 8
      %v604 = vpop.permute.xlu0 %603
      %605 = vrot.lane.b32.xlu0 %v554, 8
      %v606 = vpop.permute.xlu0 %605
      %607 = vrot.lane.b32.xlu0 %v566, 8
      %v608 = vpop.permute.xlu0 %607
      %609 = vrot.lane.b32.xlu0 %v578, 8
      %v610 = vpop.permute.xlu0 %609
      %vm611 = vcmask 1046528
      %v612 = vrot.slane %v322, 1
      %v613 = vrot.slane %v370, 1
      %v614 = vsel %vm611, %v612, %v613
      %v615 = vrot.slane %v323, 1
      %v616 = vrot.slane %v371, 1
      %v617 = vsel %vm611, %v615, %v616
      %v618 = vrot.slane %v324, 1
      %v619 = vrot.slane %v372, 1
      %v620 = vsel %vm611, %v618, %v619
      %v621 = vrot.slane %v325, 1
      %v622 = vrot.slane %v373, 1
      %v623 = vsel %vm611, %v621, %v622
      %v624 = vrot.slane %v326, 1
      %v625 = vrot.slane %v374, 1
      %v626 = vsel %vm611, %v624, %v625
      %v627 = vrot.slane %v327, 1
      %v628 = vrot.slane %v375, 1
      %v629 = vsel %vm611, %v627, %v628
      %v630 = vrot.slane %v328, 1
      %v631 = vrot.slane %v376, 1
      %v632 = vsel %vm611, %v630, %v631
      %v633 = vrot.slane %v329, 1
      %v634 = vrot.slane %v377, 1
      %v635 = vsel %vm611, %v633, %v634
      %v636 = vrot.slane %v330, 1
      %v637 = vrot.slane %v378, 1
      %v638 = vsel %vm611, %v636, %v637
      %v639 = vrot.slane %v331, 1
      %v640 = vrot.slane %v379, 1
      %v641 = vsel %vm611, %v639, %v640
      %v642 = vrot.slane %v332, 1
      %v643 = vrot.slane %v380, 1
      %v644 = vsel %vm611, %v642, %v643
      %v645 = vrot.slane %v333, 1
      %v646 = vrot.slane %v381, 1
      %v647 = vsel %vm611, %v645, %v646
      %v648 = vrot.slane %v334, 1
      %v649 = vrot.slane %v382, 1
      %v650 = vsel %vm611, %v648, %v649
      %v651 = vrot.slane %v335, 1
      %v652 = vrot.slane %v383, 1
      %v653 = vsel %vm611, %v651, %v652
      %v654 = vrot.slane %v336, 1
      %v655 = vrot.slane %v384, 1
      %v656 = vsel %vm611, %v654, %v655
      %v657 = vrot.slane %v337, 1
      %v658 = vrot.slane %v385, 1
      %v659 = vsel %vm611, %v657, %v658
      %660 = vrot.lane.b32.xlu0 %v614, 16
      %v661 = vpop.permute.xlu0 %660
      %662 = vrot.lane.b32.xlu0 %v617, 16
      %v663 = vpop.permute.xlu0 %662
      %664 = vrot.lane.b32.xlu0 %v620, 16
      %v665 = vpop.permute.xlu0 %664
      %666 = vrot.lane.b32.xlu0 %v623, 16
      %v667 = vpop.permute.xlu0 %666
      %668 = vrot.lane.b32.xlu0 %v626, 16
      %v669 = vpop.permute.xlu0 %668
      %670 = vrot.lane.b32.xlu0 %v629, 16
      %v671 = vpop.permute.xlu0 %670
      %672 = vrot.lane.b32.xlu0 %v632, 16
      %v673 = vpop.permute.xlu0 %672
      %674 = vrot.lane.b32.xlu0 %v635, 16
      %v675 = vpop.permute.xlu0 %674
      %676 = vrot.lane.b32.xlu0 %v638, 16
      %v677 = vpop.permute.xlu0 %676
      %678 = vrot.lane.b32.xlu0 %v641, 16
      %v679 = vpop.permute.xlu0 %678
      %680 = vrot.lane.b32.xlu0 %v644, 16
      %v681 = vpop.permute.xlu0 %680
      %682 = vrot.lane.b32.xlu0 %v647, 16
      %v683 = vpop.permute.xlu0 %682
      %684 = vrot.lane.b32.xlu0 %v650, 16
      %v685 = vpop.permute.xlu0 %684
      %686 = vrot.lane.b32.xlu0 %v653, 16
      %v687 = vpop.permute.xlu0 %686
      %688 = vrot.lane.b32.xlu0 %v656, 16
      %v689 = vpop.permute.xlu0 %688
      %690 = vrot.lane.b32.xlu0 %v659, 16
      %v691 = vpop.permute.xlu0 %690
      %vm692 = vcmask 64512
      %v694 = vsel %vm692, %v322, %v580
      %v696 = vsel %vm692, %v323, %v582
      %v698 = vsel %vm692, %v324, %v584
      %v700 = vsel %vm692, %v325, %v586
      %v702 = vsel %vm692, %v326, %v588
      %v704 = vsel %vm692, %v327, %v590
      %v706 = vsel %vm692, %v328, %v592
      %v708 = vsel %vm692, %v329, %v594
      %v710 = vsel %vm692, %v330, %v596
      %v712 = vsel %vm692, %v331, %v598
      %v714 = vsel %vm692, %v332, %v600
      %v716 = vsel %vm692, %v333, %v602
      %v718 = vsel %vm692, %v334, %v604
      %v720 = vsel %vm692, %v335, %v606
      %v722 = vsel %vm692, %v336, %v608
      %v724 = vsel %vm692, %v337, %v610
      %vm725 = vcmask 130048
      %v727 = vsel %vm725, %v694, %v661
      %v729 = vsel %vm725, %v696, %v663
      %v731 = vsel %vm725, %v698, %v665
      %v733 = vsel %vm725, %v700, %v667
      %v735 = vsel %vm725, %v702, %v669
      %v737 = vsel %vm725, %v704, %v671
      %v739 = vsel %vm725, %v706, %v673
      %v741 = vsel %vm725, %v708, %v675
      %v743 = vsel %vm725, %v710, %v677
      %v745 = vsel %vm725, %v712, %v679
      %v747 = vsel %vm725, %v714, %v681
      %v749 = vsel %vm725, %v716, %v683
      %v751 = vsel %vm725, %v718, %v685
      %v753 = vsel %vm725, %v720, %v687
      %v755 = vsel %vm725, %v722, %v689
      %v757 = vsel %vm725, %v724, %v691
      %v758 = vld [vmem:[%s1] sm:$0xf]
      %v759 = vld [vmem:[%s1 + $0x4] sm:$0xf]
      %v760 = vld [vmem:[%s1 + $0x8] sm:$0xf]
      %v763 = vunpack.c.l.b16 %v252
      %v764 = vunpack.c.l.b16 %v253
      %v765 = vpack.c.b16 %v764, %v763
      %v767 = vunpack.c.l.b16 %v254
      %v768 = vpack.c.b16 %v767, %v767
      %v770 = vshrl.u32 %v765, 16
      %v772 = vshll.u32 %v765, 16
      %v774 = vrot.slane %v772, 1
      %v775 = vor.u32 %v770, %v774
      %v777 = vshll.u32 %v768, 16
      %v779 = vrot.slane %v777, 1
      %v780 = vsel %vm386, %v775, %v779
      %781 = vrot.lane.b32.xlu0 %v780, 8
      %v782 = vpop.permute.xlu0 %781
      %v783 = vrot.slane %v765, 1
      %v784 = vrot.slane %v768, 1
      %v785 = vsel %vm611, %v783, %v784
      %786 = vrot.lane.b32.xlu0 %v785, 16
      %v787 = vpop.permute.xlu0 %786
      %v789 = vsel %vm692, %v765, %v782
      %v791 = vsel %vm725, %v789, %v787
      %s792 = scalar_lea.vmem %s1, 12
      %v793 = vld [vmem:[%s792] sm:$0xf]
      %v794 = vld [vmem:[%s792 + $0x4] sm:$0xf]
      %v795 = vld [vmem:[%s792 + $0x8] sm:$0xf]
      %v799 = vunpack.c.l.b16 %v793
      %v800 = vunpack.c.l.b16 %v794
      %v801 = vunpack.c.l.b16 %v795
      %v802 = vpack.c.b16 %v800, %v799
      %v803 = vpack.c.b16 %v801, %v801
      %vm805 = vcmask 195584
      %v806 = vsel %vm805, %v729, 0
      %v808 = vsel %vm805, %v731, 0
      %v810 = vsel %vm805, %v733, 0
      %v812 = vsel %vm805, %v735, 0
      %v814 = vsel %vm805, %v737, 0
      %v816 = vsel %vm805, %v739, 0
      %v818 = vsel %vm805, %v741, 0
      %v820 = vsel %vm805, %v743, 0
      %v822 = vsel %vm805, %v745, 0
      %v824 = vsel %vm805, %v747, 0
      %v826 = vsel %vm805, %v749, 0
      %v828 = vsel %vm805, %v751, 0
      %v830 = vsel %vm805, %v753, 0
      %v832 = vsel %vm805, %v755, 0
      %v834 = vsel %vm805, %v757, 0
      %v836 = vsel %vm805, %v791, 0
      %vm838 = vcmask 1043456
      %v840 = vsel %vm838, %v803, 0
      %842 = vmatpush.bf16.msra.mxu0 0
      %843 = vmatpush.bf16.msra.mxu0 0
      %844 = vmatpush.bf16.msra.mxu0 0
      %845 = vmatpush.bf16.msra.mxu0 0
      %846 = vmatpush.bf16.msra.mxu0 0
      %847 = vmatpush.bf16.msra.mxu0 0
      %848 = vmatpush.bf16.msra.mxu0 %v840
      %849 = vmatpush.bf16.msra.mxu0 %v802
      %850 = vmatmul.bf16.gmra.mxu0 %v806
      %v851 = vpop.f32.mrf.mxu0
      %v852 = vadd.f32 0.0, %v851
      %v853 = vpop.f32.mrf.mxu0
      %v854 = vadd.f32 0.0, %v853
      %855 = vmatmul.bf16.gmra.mxu0 %v808
      %v856 = vpop.f32.mrf.mxu0
      %v857 = vadd.f32 0.0, %v856
      %v858 = vpop.f32.mrf.mxu0
      %v859 = vadd.f32 0.0, %v858
      %860 = vmatmul.bf16.gmra.mxu0 %v810
      %v861 = vpop.f32.mrf.mxu0
      %v862 = vadd.f32 0.0, %v861
      %v863 = vpop.f32.mrf.mxu0
      %v864 = vadd.f32 0.0, %v863
      %865 = vmatmul.bf16.gmra.mxu0 %v812
      %v866 = vpop.f32.mrf.mxu0
      %v867 = vadd.f32 0.0, %v866
      %v868 = vpop.f32.mrf.mxu0
      %v869 = vadd.f32 0.0, %v868
      %870 = vmatmul.bf16.gmra.mxu0 %v814
      %v871 = vpop.f32.mrf.mxu0
      %v872 = vadd.f32 0.0, %v871
      %v873 = vpop.f32.mrf.mxu0
      %v874 = vadd.f32 0.0, %v873
      %875 = vmatmul.bf16.gmra.mxu0 %v816
      %v876 = vpop.f32.mrf.mxu0
      %v877 = vadd.f32 0.0, %v876
      %v878 = vpop.f32.mrf.mxu0
      %v879 = vadd.f32 0.0, %v878
      %880 = vmatmul.bf16.gmra.mxu0 %v818
      %v881 = vpop.f32.mrf.mxu0
      %v882 = vadd.f32 0.0, %v881
      %v883 = vpop.f32.mrf.mxu0
      %v884 = vadd.f32 0.0, %v883
      %885 = vmatmul.bf16.gmra.mxu0 %v820
      %v886 = vpop.f32.mrf.mxu0
      %v887 = vadd.f32 0.0, %v886
      %v888 = vpop.f32.mrf.mxu0
      %v889 = vadd.f32 0.0, %v888
      %890 = vmatmul.bf16.gmra.mxu0 %v822
      %v891 = vpop.f32.mrf.mxu0
      %v892 = vadd.f32 0.0, %v891
      %v893 = vpop.f32.mrf.mxu0
      %v894 = vadd.f32 0.0, %v893
      %895 = vmatmul.bf16.gmra.mxu0 %v824
      %v896 = vpop.f32.mrf.mxu0
      %v897 = vadd.f32 0.0, %v896
      %v898 = vpop.f32.mrf.mxu0
      %v899 = vadd.f32 0.0, %v898
      %900 = vmatmul.bf16.gmra.mxu0 %v826
      %v901 = vpop.f32.mrf.mxu0
      %v902 = vadd.f32 0.0, %v901
      %v903 = vpop.f32.mrf.mxu0
      %v904 = vadd.f32 0.0, %v903
      %905 = vmatmul.bf16.gmra.mxu0 %v828
      %v906 = vpop.f32.mrf.mxu0
      %v907 = vadd.f32 0.0, %v906
      %v908 = vpop.f32.mrf.mxu0
      %v909 = vadd.f32 0.0, %v908
      %910 = vmatmul.bf16.gmra.mxu0 %v830
      %v911 = vpop.f32.mrf.mxu0
      %v912 = vadd.f32 0.0, %v911
      %v913 = vpop.f32.mrf.mxu0
      %v914 = vadd.f32 0.0, %v913
      %915 = vmatmul.bf16.gmra.mxu0 %v832
      %v916 = vpop.f32.mrf.mxu0
      %v917 = vadd.f32 0.0, %v916
      %v918 = vpop.f32.mrf.mxu0
      %v919 = vadd.f32 0.0, %v918
      %920 = vmatmul.bf16.gmra.mxu0 %v834
      %v921 = vpop.f32.mrf.mxu0
      %v922 = vadd.f32 0.0, %v921
      %v923 = vpop.f32.mrf.mxu0
      %v924 = vadd.f32 0.0, %v923
      %925 = vmatmul.bf16.gmra.mxu0 %v836
      %v926 = vpop.f32.mrf.mxu0
      %v927 = vadd.f32 0.0, %v926
      %v928 = vpop.f32.mrf.mxu0
      %v929 = vadd.f32 0.0, %v928
      %930 = vdwg.mxu0
      %v934 = vunpack.c.l.b16 %v758
      %v935 = vunpack.c.l.b16 %v759
      %v936 = vunpack.c.l.b16 %v760
      %v937 = vpack.c.b16 %v935, %v934
      %v938 = vpack.c.b16 %v936, %v936
      %v940 = vsel %vm805, %v727, 0
      %v943 = vsel %vm838, %v938, 0
      %945 = vmatpush.bf16.msra.mxu0 0
      %946 = vmatpush.bf16.msra.mxu0 0
      %947 = vmatpush.bf16.msra.mxu0 0
      %948 = vmatpush.bf16.msra.mxu0 0
      %949 = vmatpush.bf16.msra.mxu0 0
      %950 = vmatpush.bf16.msra.mxu0 0
      %951 = vmatpush.bf16.msra.mxu0 %v943
      %952 = vmatpush.bf16.msra.mxu0 %v937
      %953 = vmatmul.bf16.gmra.mxu0 %v940
      %v954 = vpop.f32.mrf.mxu0
      %v955 = vadd.f32 %v852, %v954
      %v956 = vpop.f32.mrf.mxu0
      %v957 = vadd.f32 %v854, %v956
      %958 = vmatmul.bf16.gmra.mxu0 %v806
      %v959 = vpop.f32.mrf.mxu0
      %v960 = vadd.f32 %v857, %v959
      %v961 = vpop.f32.mrf.mxu0
      %v962 = vadd.f32 %v859, %v961
      %963 = vmatmul.bf16.gmra.mxu0 %v808
      %v964 = vpop.f32.mrf.mxu0
      %v965 = vadd.f32 %v862, %v964
      %v966 = vpop.f32.mrf.mxu0
      %v967 = vadd.f32 %v864, %v966
      %968 = vmatmul.bf16.gmra.mxu0 %v810
      %v969 = vpop.f32.mrf.mxu0
      %v970 = vadd.f32 %v867, %v969
      %v971 = vpop.f32.mrf.mxu0
      %v972 = vadd.f32 %v869, %v971
      %973 = vmatmul.bf16.gmra.mxu0 %v812
      %v974 = vpop.f32.mrf.mxu0
      %v975 = vadd.f32 %v872, %v974
      %v976 = vpop.f32.mrf.mxu0
      %v977 = vadd.f32 %v874, %v976
      %978 = vmatmul.bf16.gmra.mxu0 %v814
      %v979 = vpop.f32.mrf.mxu0
      %v980 = vadd.f32 %v877, %v979
      %v981 = vpop.f32.mrf.mxu0
      %v982 = vadd.f32 %v879, %v981
      %983 = vmatmul.bf16.gmra.mxu0 %v816
      %v984 = vpop.f32.mrf.mxu0
      %v985 = vadd.f32 %v882, %v984
      %v986 = vpop.f32.mrf.mxu0
      %v987 = vadd.f32 %v884, %v986
      %988 = vmatmul.bf16.gmra.mxu0 %v818
      %v989 = vpop.f32.mrf.mxu0
      %v990 = vadd.f32 %v887, %v989
      %v991 = vpop.f32.mrf.mxu0
      %v992 = vadd.f32 %v889, %v991
      %993 = vmatmul.bf16.gmra.mxu0 %v820
      %v994 = vpop.f32.mrf.mxu0
      %v995 = vadd.f32 %v892, %v994
      %v996 = vpop.f32.mrf.mxu0
      %v997 = vadd.f32 %v894, %v996
      %998 = vmatmul.bf16.gmra.mxu0 %v822
      %v999 = vpop.f32.mrf.mxu0
      %v1000 = vadd.f32 %v897, %v999
      %v1001 = vpop.f32.mrf.mxu0
      %v1002 = vadd.f32 %v899, %v1001
      %1003 = vmatmul.bf16.gmra.mxu0 %v824
      %v1004 = vpop.f32.mrf.mxu0
      %v1005 = vadd.f32 %v902, %v1004
      %v1006 = vpop.f32.mrf.mxu0
      %v1007 = vadd.f32 %v904, %v1006
      %1008 = vmatmul.bf16.gmra.mxu0 %v826
      %v1009 = vpop.f32.mrf.mxu0
      %v1010 = vadd.f32 %v907, %v1009
      %v1011 = vpop.f32.mrf.mxu0
      %v1012 = vadd.f32 %v909, %v1011
      %1013 = vmatmul.bf16.gmra.mxu0 %v828
      %v1014 = vpop.f32.mrf.mxu0
      %v1015 = vadd.f32 %v912, %v1014
      %v1016 = vpop.f32.mrf.mxu0
      %v1017 = vadd.f32 %v914, %v1016
      %1018 = vmatmul.bf16.gmra.mxu0 %v830
      %v1019 = vpop.f32.mrf.mxu0
      %v1020 = vadd.f32 %v917, %v1019
      %v1021 = vpop.f32.mrf.mxu0
      %v1022 = vadd.f32 %v919, %v1021
      %1023 = vmatmul.bf16.gmra.mxu0 %v832
      %v1024 = vpop.f32.mrf.mxu0
      %v1025 = vadd.f32 %v922, %v1024
      %v1026 = vpop.f32.mrf.mxu0
      %v1027 = vadd.f32 %v924, %v1026
      %1028 = vmatmul.bf16.gmra.mxu0 %v834
      %v1029 = vpop.f32.mrf.mxu0
      %v1030 = vadd.f32 %v927, %v1029
      %v1031 = vpop.f32.mrf.mxu0
      %v1032 = vadd.f32 %v929, %v1031
      %1033 = vdwg.mxu0
      %v1036 = vunpack.c.l.b16 %v255
      %v1037 = vunpack.c.l.b16 %v256
      %v1038 = vpack.c.b16 %v1037, %v1036
      %v1040 = vunpack.c.l.b16 %v257
      %v1041 = vpack.c.b16 %v1040, %v1040
      %v1043 = vshrl.u32 %v1038, 16
      %v1045 = vshll.u32 %v1038, 16
      %v1047 = vrot.slane %v1045, 1
      %v1048 = vor.u32 %v1043, %v1047
      %v1050 = vshll.u32 %v1041, 16
      %v1052 = vrot.slane %v1050, 1
      %v1053 = vsel %vm386, %v1048, %v1052
      %1054 = vrot.lane.b32.xlu0 %v1053, 8
      %v1055 = vpop.permute.xlu0 %1054
      %v1056 = vrot.slane %v1038, 1
      %v1057 = vrot.slane %v1041, 1
      %v1058 = vsel %vm611, %v1056, %v1057
      %1059 = vrot.lane.b32.xlu0 %v1058, 16
      %v1060 = vpop.permute.xlu0 %1059
      %v1062 = vsel %vm692, %v1038, %v1055
      %v1064 = vsel %vm725, %v1062, %v1060
      %s1065 = scalar_lea.vmem %s1, 24
      %v1066 = vld [vmem:[%s1065] sm:$0xf]
      %v1067 = vld [vmem:[%s1065 + $0x4] sm:$0xf]
      %v1068 = vld [vmem:[%s1065 + $0x8] sm:$0xf]
      %v1072 = vunpack.c.l.b16 %v1066
      %v1073 = vunpack.c.l.b16 %v1067
      %v1074 = vunpack.c.l.b16 %v1068
      %v1075 = vpack.c.b16 %v1073, %v1072
      %v1076 = vpack.c.b16 %v1074, %v1074
      %v1078 = vsel %vm805, %v1064, 0
      %v1081 = vsel %vm838, %v1076, 0
      %1083 = vmatpush.bf16.msra.mxu0 0
      %1084 = vmatpush.bf16.msra.mxu0 0
      %1085 = vmatpush.bf16.msra.mxu0 0
      %1086 = vmatpush.bf16.msra.mxu0 0
      %1087 = vmatpush.bf16.msra.mxu0 0
      %1088 = vmatpush.bf16.msra.mxu0 0
      %1089 = vmatpush.bf16.msra.mxu0 %v1081
      %1090 = vmatpush.bf16.msra.mxu0 %v1075
      %1091 = vmatmul.bf16.gmra.mxu0 %v808
      %v1092 = vpop.f32.mrf.mxu0
      %v1093 = vadd.f32 0.0, %v1092
      %v1094 = vpop.f32.mrf.mxu0
      %v1095 = vadd.f32 0.0, %v1094
      %1096 = vmatmul.bf16.gmra.mxu0 %v810
      %v1097 = vpop.f32.mrf.mxu0
      %v1098 = vadd.f32 0.0, %v1097
      %v1099 = vpop.f32.mrf.mxu0
      %v1100 = vadd.f32 0.0, %v1099
      %1101 = vmatmul.bf16.gmra.mxu0 %v812
      %v1102 = vpop.f32.mrf.mxu0
      %v1103 = vadd.f32 0.0, %v1102
      %v1104 = vpop.f32.mrf.mxu0
      %v1105 = vadd.f32 0.0, %v1104
      %1106 = vmatmul.bf16.gmra.mxu0 %v814
      %v1107 = vpop.f32.mrf.mxu0
      %v1108 = vadd.f32 0.0, %v1107
      %v1109 = vpop.f32.mrf.mxu0
      %v1110 = vadd.f32 0.0, %v1109
      %1111 = vmatmul.bf16.gmra.mxu0 %v816
      %v1112 = vpop.f32.mrf.mxu0
      %v1113 = vadd.f32 0.0, %v1112
      %v1114 = vpop.f32.mrf.mxu0
      %v1115 = vadd.f32 0.0, %v1114
      %1116 = vmatmul.bf16.gmra.mxu0 %v818
      %v1117 = vpop.f32.mrf.mxu0
      %v1118 = vadd.f32 0.0, %v1117
      %v1119 = vpop.f32.mrf.mxu0
      %v1120 = vadd.f32 0.0, %v1119
      %1121 = vmatmul.bf16.gmra.mxu0 %v820
      %v1122 = vpop.f32.mrf.mxu0
      %v1123 = vadd.f32 0.0, %v1122
      %v1124 = vpop.f32.mrf.mxu0
      %v1125 = vadd.f32 0.0, %v1124
      %1126 = vmatmul.bf16.gmra.mxu0 %v822
      %v1127 = vpop.f32.mrf.mxu0
      %v1128 = vadd.f32 0.0, %v1127
      %v1129 = vpop.f32.mrf.mxu0
      %v1130 = vadd.f32 0.0, %v1129
      %1131 = vmatmul.bf16.gmra.mxu0 %v824
      %v1132 = vpop.f32.mrf.mxu0
      %v1133 = vadd.f32 0.0, %v1132
      %v1134 = vpop.f32.mrf.mxu0
      %v1135 = vadd.f32 0.0, %v1134
      %1136 = vmatmul.bf16.gmra.mxu0 %v826
      %v1137 = vpop.f32.mrf.mxu0
      %v1138 = vadd.f32 0.0, %v1137
      %v1139 = vpop.f32.mrf.mxu0
      %v1140 = vadd.f32 0.0, %v1139
      %1141 = vmatmul.bf16.gmra.mxu0 %v828
      %v1142 = vpop.f32.mrf.mxu0
      %v1143 = vadd.f32 0.0, %v1142
      %v1144 = vpop.f32.mrf.mxu0
      %v1145 = vadd.f32 0.0, %v1144
      %1146 = vmatmul.bf16.gmra.mxu0 %v830
      %v1147 = vpop.f32.mrf.mxu0
      %v1148 = vadd.f32 0.0, %v1147
      %v1149 = vpop.f32.mrf.mxu0
      %v1150 = vadd.f32 0.0, %v1149
      %1151 = vmatmul.bf16.gmra.mxu0 %v832
      %v1152 = vpop.f32.mrf.mxu0
      %v1153 = vadd.f32 0.0, %v1152
      %v1154 = vpop.f32.mrf.mxu0
      %v1155 = vadd.f32 0.0, %v1154
      %1156 = vmatmul.bf16.gmra.mxu0 %v834
      %v1157 = vpop.f32.mrf.mxu0
      %v1158 = vadd.f32 0.0, %v1157
      %v1159 = vpop.f32.mrf.mxu0
      %v1160 = vadd.f32 0.0, %v1159
      %1161 = vmatmul.bf16.gmra.mxu0 %v836
      %v1162 = vpop.f32.mrf.mxu0
      %v1163 = vadd.f32 0.0, %v1162
      %v1164 = vpop.f32.mrf.mxu0
      %v1165 = vadd.f32 0.0, %v1164
      %1166 = vmatmul.bf16.gmra.mxu0 %v1078
      %v1167 = vpop.f32.mrf.mxu0
      %v1168 = vadd.f32 0.0, %v1167
      %v1169 = vpop.f32.mrf.mxu0
      %v1170 = vadd.f32 0.0, %v1169
      %1171 = vdwg.mxu0
      %v1172 = vadd.f32 %v955, %v1093
      %v1173 = vadd.f32 %v957, %v1095
      %v1174 = vadd.f32 %v960, %v1098
      %v1175 = vadd.f32 %v962, %v1100
      %v1176 = vadd.f32 %v965, %v1103
      %v1177 = vadd.f32 %v967, %v1105
      %v1178 = vadd.f32 %v970, %v1108
      %v1179 = vadd.f32 %v972, %v1110
      %v1180 = vadd.f32 %v975, %v1113
      %v1181 = vadd.f32 %v977, %v1115
      %v1182 = vadd.f32 %v980, %v1118
      %v1183 = vadd.f32 %v982, %v1120
      %v1184 = vadd.f32 %v985, %v1123
      %v1185 = vadd.f32 %v987, %v1125
      %v1186 = vadd.f32 %v990, %v1128
      %v1187 = vadd.f32 %v992, %v1130
      %v1188 = vadd.f32 %v995, %v1133
      %v1189 = vadd.f32 %v997, %v1135
      %v1190 = vadd.f32 %v1000, %v1138
      %v1191 = vadd.f32 %v1002, %v1140
      %v1192 = vadd.f32 %v1005, %v1143
      %v1193 = vadd.f32 %v1007, %v1145
      %v1194 = vadd.f32 %v1010, %v1148
      %v1195 = vadd.f32 %v1012, %v1150
      %v1196 = vadd.f32 %v1015, %v1153
      %v1197 = vadd.f32 %v1017, %v1155
      %v1198 = vadd.f32 %v1020, %v1158
      %v1199 = vadd.f32 %v1022, %v1160
      %v1200 = vadd.f32 %v1025, %v1163
      %v1201 = vadd.f32 %v1027, %v1165
      %v1202 = vadd.f32 %v1030, %v1168
      %v1203 = vadd.f32 %v1032, %v1170
      %v1204 = vld [vmem:[%s2] sm:$0x1]
      %v1206 = vperm.slane %v1204, 0
      %v1208 = vadd.f32 %v1172, %v1206
      %v1209 = vadd.f32 %v1173, %v1206
      %v1210 = vadd.f32 %v1174, %v1206
      %v1211 = vadd.f32 %v1175, %v1206
      %v1212 = vadd.f32 %v1176, %v1206
      %v1213 = vadd.f32 %v1177, %v1206
      %v1214 = vadd.f32 %v1178, %v1206
      %v1215 = vadd.f32 %v1179, %v1206
      %v1216 = vadd.f32 %v1180, %v1206
      %v1217 = vadd.f32 %v1181, %v1206
      %v1218 = vadd.f32 %v1182, %v1206
      %v1219 = vadd.f32 %v1183, %v1206
      %v1220 = vadd.f32 %v1184, %v1206
      %v1221 = vadd.f32 %v1185, %v1206
      %v1222 = vadd.f32 %v1186, %v1206
      %v1223 = vadd.f32 %v1187, %v1206
      %v1224 = vadd.f32 %v1188, %v1206
      %v1225 = vadd.f32 %v1189, %v1206
      %v1226 = vadd.f32 %v1190, %v1206
      %v1227 = vadd.f32 %v1191, %v1206
      %v1228 = vadd.f32 %v1192, %v1206
      %v1229 = vadd.f32 %v1193, %v1206
      %v1230 = vadd.f32 %v1194, %v1206
      %v1231 = vadd.f32 %v1195, %v1206
      %v1232 = vadd.f32 %v1196, %v1206
      %v1233 = vadd.f32 %v1197, %v1206
      %v1234 = vadd.f32 %v1198, %v1206
      %v1235 = vadd.f32 %v1199, %v1206
      %v1236 = vadd.f32 %v1200, %v1206
      %v1237 = vadd.f32 %v1201, %v1206
      %v1238 = vadd.f32 %v1202, %v1206
      %v1239 = vadd.f32 %v1203, %v1206
      %v1240 = vmax.f32 %v1208, 0.0
      %v1241 = vmax.f32 %v1209, 0.0
      %v1242 = vmax.f32 %v1210, 0.0
      %v1243 = vmax.f32 %v1211, 0.0
      %v1244 = vmax.f32 %v1212, 0.0
      %v1245 = vmax.f32 %v1213, 0.0
      %v1246 = vmax.f32 %v1214, 0.0
      %v1247 = vmax.f32 %v1215, 0.0
      %v1248 = vmax.f32 %v1216, 0.0
      %v1249 = vmax.f32 %v1217, 0.0
      %v1250 = vmax.f32 %v1218, 0.0
      %v1251 = vmax.f32 %v1219, 0.0
      %v1252 = vmax.f32 %v1220, 0.0
      %v1253 = vmax.f32 %v1221, 0.0
      %v1254 = vmax.f32 %v1222, 0.0
      %v1255 = vmax.f32 %v1223, 0.0
      %v1256 = vmax.f32 %v1224, 0.0
      %v1257 = vmax.f32 %v1225, 0.0
      %v1258 = vmax.f32 %v1226, 0.0
      %v1259 = vmax.f32 %v1227, 0.0
      %v1260 = vmax.f32 %v1228, 0.0
      %v1261 = vmax.f32 %v1229, 0.0
      %v1262 = vmax.f32 %v1230, 0.0
      %v1263 = vmax.f32 %v1231, 0.0
      %v1264 = vmax.f32 %v1232, 0.0
      %v1265 = vmax.f32 %v1233, 0.0
      %v1266 = vmax.f32 %v1234, 0.0
      %v1267 = vmax.f32 %v1235, 0.0
      %v1268 = vmax.f32 %v1236, 0.0
      %v1269 = vmax.f32 %v1237, 0.0
      %v1270 = vmax.f32 %v1238, 0.0
      %v1271 = vmax.f32 %v1239, 0.0
      %vm1272 = vcmask 523264
      %1273 = vst.msk [vmem:[%s201] sm:$0xff] %vm1272, %v1240
      %1274 = vst.msk [vmem:[%s201 + $0x8] sm:$0xff] %vm1272, %v1241
      %1275 = vst.msk [vmem:[%s201 + $0x10] sm:$0xff] %vm1272, %v1242
      %1276 = vst.msk [vmem:[%s201 + $0x18] sm:$0xff] %vm1272, %v1243
      %1277 = vst.msk [vmem:[%s201 + $0x20] sm:$0xff] %vm1272, %v1244
      %1278 = vst.msk [vmem:[%s201 + $0x28] sm:$0xff] %vm1272, %v1245
      %1279 = vst.msk [vmem:[%s201 + $0x30] sm:$0xff] %vm1272, %v1246
      %1280 = vst.msk [vmem:[%s201 + $0x38] sm:$0xff] %vm1272, %v1247
      %1281 = vst.msk [vmem:[%s201 + $0x40] sm:$0xff] %vm1272, %v1248
      %1282 = vst.msk [vmem:[%s201 + $0x48] sm:$0xff] %vm1272, %v1249
      %1283 = vst.msk [vmem:[%s201 + $0x50] sm:$0xff] %vm1272, %v1250
      %1284 = vst.msk [vmem:[%s201 + $0x58] sm:$0xff] %vm1272, %v1251
      %1285 = vst.msk [vmem:[%s201 + $0x60] sm:$0xff] %vm1272, %v1252
      %1286 = vst.msk [vmem:[%s201 + $0x68] sm:$0xff] %vm1272, %v1253
      %1287 = vst.msk [vmem:[%s201 + $0x70] sm:$0xff] %vm1272, %v1254
      %1288 = vst.msk [vmem:[%s201 + $0x78] sm:$0xff] %vm1272, %v1255
      %1289 = vst.msk [vmem:[%s201 + $0x80] sm:$0xff] %vm1272, %v1256
      %1290 = vst.msk [vmem:[%s201 + $0x88] sm:$0xff] %vm1272, %v1257
      %1291 = vst.msk [vmem:[%s201 + $0x90] sm:$0xff] %vm1272, %v1258
      %1292 = vst.msk [vmem:[%s201 + $0x98] sm:$0xff] %vm1272, %v1259
      %1293 = vst.msk [vmem:[%s201 + $0xa0] sm:$0xff] %vm1272, %v1260
      %1294 = vst.msk [vmem:[%s201 + $0xa8] sm:$0xff] %vm1272, %v1261
      %1295 = vst.msk [vmem:[%s201 + $0xb0] sm:$0xff] %vm1272, %v1262
      %1296 = vst.msk [vmem:[%s201 + $0xb8] sm:$0xff] %vm1272, %v1263
      %1297 = vst.msk [vmem:[%s201 + $0xc0] sm:$0xff] %vm1272, %v1264
      %1298 = vst.msk [vmem:[%s201 + $0xc8] sm:$0xff] %vm1272, %v1265
      %1299 = vst.msk [vmem:[%s201 + $0xd0] sm:$0xff] %vm1272, %v1266
      %1300 = vst.msk [vmem:[%s201 + $0xd8] sm:$0xff] %vm1272, %v1267
      %1301 = vst.msk [vmem:[%s201 + $0xe0] sm:$0xff] %vm1272, %v1268
      %1302 = vst.msk [vmem:[%s201 + $0xe8] sm:$0xff] %vm1272, %v1269
      %1303 = vst.msk [vmem:[%s201 + $0xf0] sm:$0xff] %vm1272, %v1270
      %1304 = vst.msk [vmem:[%s201 + $0xf8] sm:$0xff] %vm1272, %v1271
      %s1305 = smul.u32 16, %s19
      %p1306 = scmp.lt.s32.totalorder %s18, 1
      %s1307 = scalar_select %p1306, %s18, 1
      %p1308 = scmp.lt.s32.totalorder %s1305, 15
      %s1309 = scalar_select %p1308, %s1305, 15
      %s1310 = smul.addr %s1309, 2
      %s1311 = smul.addr %s1307, 32
      %s1312 = sadd.s32 %s1310, %s1311
      %s1313 = smul.addr %s1312, 8
      %s1314 = scalar_lea.vmem %s3, %s1313
      // Predicated region
      $region33: #{enhancer_forward.5} parent=31 // pred_check
        %p1315 = pneg %p116
      $region34: #{enhancer_forward.5} parent=31 // pred_check_branch
        %1317 = sbr.rel (%p1315) target = $region36
      $region35: #{enhancer_forward.5} parent=31 // pred_region
        %s1318 = smul.u32 16, %s19
      $region36: #{enhancer_forward.5} parent=31 // pred_fallthru
        _
    $region32: #{enhancer_forward.5} parent=5 // pred_fallthru
      _
    %p1319 = scmp.le.s32.totalorder 2, %s9
    // Predicated region
    $region37: #{enhancer_forward.5} parent=5 // pred_check
      %p1320 = pneg %p1319
    $region38: #{enhancer_forward.5} parent=5 // pred_check_branch
      %1322 = sbr.rel (%p1320) target = $region40
    $region39: #{enhancer_forward.5} parent=5 // pred_region
      %s1323 = ssub.s32 %s9, 2
      // Predicated region
      $region41: #{enhancer_forward.5} parent=39 // pred_check
        %p1324 = pneg %p122
      $region42: #{enhancer_forward.5} parent=39 // pred_check_branch
        %1326 = sbr.rel (%p1324) target = $region44
      $region43: #{enhancer_forward.5} parent=39 // pred_region
        %s1327 = smul.u32 16, %s21
        %p1328 = scmp.lt.s32.totalorder %s20, 1
        %s1329 = scalar_select %p1328, %s20, 1
        %p1330 = scmp.lt.s32.totalorder %s1327, 15
        %s1331 = scalar_select %p1330, %s1327, 15
        %s1332 = smul.addr %s1331, 2
        %s1333 = smul.addr %s1329, 32
        %s1334 = sadd.s32 %s1332, %s1333
        %s1335 = smul.addr %s1334, 8
        %s1336 = scalar_lea.vmem %s3, %s1335
      $region44: #{enhancer_forward.5} parent=39 // pred_fallthru
        _
    $region40: #{enhancer_forward.5} parent=5 // pred_fallthru
      _
  $region6: #{enhancer_forward.5} parent=0 // loop_footer
    %s13 = sadd.s32 1, %s9
  $region7: #{enhancer_forward.5} parent=0 // loop_footer_branch
    %8 = sbr.rel target = $region3
  $region8: #{enhancer_forward.5} parent=0 // loop_exit
    _

// kernel: enhancer_forward.6
$region0: #{enhancer_forward.6}
  #allocation0 [shape = 'u32[]', space=smem, size = 0x4, offset = 0x4, fixed_abs, tag = 'smem constant byte address 0x4 - core index']
  #allocation1 [shape = 'u32[72,128]{1,0:T(1,128)}', space=vmem, size = 0x9000, scoped, tag = 'internal scratch']
  %s0 = inlined_call_operand.vmem [shape: bf16[2,18,18,64], index: 0, kind: input, shape index: {}]
  %s1 = inlined_call_operand.vmem [shape: bf16[3,192,64], index: 1, kind: input, shape index: {}]
  %s2 = inlined_call_operand.vmem [shape: f32[1,64], index: 2, kind: input, shape index: {}]
  %s3 = inlined_call_operand.vmem [shape: f32[2,16,16,64], index: 3, kind: input, shape index: {}]
  %s4 = inlined_call_operand.vmem [shape: f32[2,16,16,64], index: 4, kind: output, shape index: {}]
  %s5 = sld [smem:[#allocation0]]
  $region49: #{enhancer_forward.6} parent=0
    _
  %s7 = ssub.s32 1, %s5
  %s8 = scalar_select 0, %s7, %s5
  loop: start=0, step=1, limit=4
  $region2: #{enhancer_forward.6} parent=0 // loop_pre_header
    _
  $region3: #{enhancer_forward.6} parent=0 // loop_header
    %s10 = sphi 0, %s14
    %p11 = scmp.ge.s32.totalorder %s10, 4
    %s17 = sphi 0, %s29
    %s18 = sphi 0, %s25
    %s19 = sphi 0, %s17
    %s20 = sphi 0, %s18
    %s21 = sphi 0, %s19
    %s22 = sphi 0, %s20
    %s34 = sphi 0, %s36
    %s37 = sphi 0, %s34
    %s38 = sphi 0, %s37
    %s54 = sphi 0, %s38
    %s58 = sphi 0, %s58
    %s60 = sphi 0, %s58
    %s61 = sphi 0, %s60
    %s75 = sphi 0, %s61
    %s79 = sphi 0, %s79
    %s81 = sphi 0, %s79
    %s82 = sphi 0, %s81
    %s96 = sphi 0, %s82
    %s104 = sphi 0, %s106
    %s107 = sphi 0, %s104
    %s108 = sphi 0, %s107
    %s124 = sphi 0, %s108
    %s132 = sphi 0, %s134
    %s135 = sphi 0, %s132
    %s136 = sphi 0, %s135
    %s152 = sphi 0, %s136
  $region4: #{enhancer_forward.6} parent=0 // loop_header_branch
    %13 = sbr.rel (%p11) target = $region8
  $region5: #{enhancer_forward.6} parent=0 // loop_body
    %s15 = ssub.s32 %s10, 1
    %s16 = ssub.s32 %s10, 2
    %s23 = sadd.s32 1, %s18
    %p24 = scmp.ge.s32.totalorder %s23, 1
    %s25 = scalar_select %p24, 0, %s23
    %s26 = sadd.s32 1, %s17
    %s27 = scalar_select %p24, %s26, %s17
    %p28 = scmp.ge.s32.totalorder %s27, 2
    %s29 = scalar_select %p28, 0, %s27
    %s30 = sadd.s32 %s17, %s18
    %s31 = sadd.s32 %s29, %s25
    %s32 = ssub.s32 %s30, %s31
    %p33 = scmp.eq.s32.totalorder %s32, 0
    %s35 = sadd.s32 %s34, 1
    %s36 = scalar_select %p33, %s34, %s35
    %p39 = pneg %p33
    %p40 = scmp.eq.s32.totalorder %s10, 1
    %p41 = por %p39, %p40
    %p42 = scmp.ne.s32.totalorder %s34, %s37
    %p43 = scmp.eq.s32.totalorder %s10, 0
    %p44 = por %p42, %p43
    %p45 = scmp.ne.s32.totalorder %s34, %s37
    %p46 = scmp.eq.s32.totalorder %s15, 1
    %p47 = por %p45, %p46
    %p48 = scmp.ne.s32.totalorder %s37, %s38
    %p49 = scmp.eq.s32.totalorder %s15, 0
    %p50 = por %p48, %p49
    %p51 = scmp.ne.s32.totalorder %s37, %s38
    %p52 = scmp.eq.s32.totalorder %s16, 1
    %p53 = por %p51, %p52
    %p55 = scmp.ne.s32.totalorder %s38, %s54
    %p56 = scmp.eq.s32.totalorder %s16, 0
    %p57 = por %p55, %p56
    %s59 = sadd.s32 %s58, 1
    %p62 = scmp.eq.s32.totalorder %s10, 1
    %p63 = scmp.ne.s32.totalorder %s58, %s60
    %p64 = scmp.eq.s32.totalorder %s10, 0
    %p65 = por %p63, %p64
    %p66 = scmp.ne.s32.totalorder %s58, %s60
    %p67 = scmp.eq.s32.totalorder %s15, 1
    %p68 = por %p66, %p67
    %p69 = scmp.ne.s32.totalorder %s60, %s61
    %p70 = scmp.eq.s32.totalorder %s15, 0
    %p71 = por %p69, %p70
    %p72 = scmp.ne.s32.totalorder %s60, %s61
    %p73 = scmp.eq.s32.totalorder %s16, 1
    %p74 = por %p72, %p73
    %p76 = scmp.ne.s32.totalorder %s61, %s75
    %p77 = scmp.eq.s32.totalorder %s16, 0
    %p78 = por %p76, %p77
    %s80 = sadd.s32 %s79, 1
    %p83 = scmp.eq.s32.totalorder %s10, 1
    %p84 = scmp.ne.s32.totalorder %s79, %s81
    %p85 = scmp.eq.s32.totalorder %s10, 0
    %p86 = por %p84, %p85
    %p87 = scmp.ne.s32.totalorder %s79, %s81
    %p88 = scmp.eq.s32.totalorder %s15, 1
    %p89 = por %p87, %p88
    %p90 = scmp.ne.s32.totalorder %s81, %s82
    %p91 = scmp.eq.s32.totalorder %s15, 0
    %p92 = por %p90, %p91
    %p93 = scmp.ne.s32.totalorder %s81, %s82
    %p94 = scmp.eq.s32.totalorder %s16, 1
    %p95 = por %p93, %p94
    %p97 = scmp.ne.s32.totalorder %s82, %s96
    %p98 = scmp.eq.s32.totalorder %s16, 0
    %p99 = por %p97, %p98
    %s100 = ssub.s32 %s17, %s29
    %s101 = ssub.s32 %s18, %s25
    %s102 = sor.u32 %s100, %s101
    %p103 = scmp.eq.s32.totalorder %s102, 0
    %s105 = sadd.s32 %s104, 1
    %s106 = scalar_select %p103, %s104, %s105
    %p109 = pneg %p103
    %p110 = scmp.eq.s32.totalorder %s10, 1
    %p111 = por %p109, %p110
    %p112 = scmp.ne.s32.totalorder %s104, %s107
    %p113 = scmp.eq.s32.totalorder %s10, 0
    %p114 = por %p112, %p113
    %p115 = scmp.ne.s32.totalorder %s104, %s107
    %p116 = scmp.eq.s32.totalorder %s15, 1
    %p117 = por %p115, %p116
    %p118 = scmp.ne.s32.totalorder %s107, %s108
    %p119 = scmp.eq.s32.totalorder %s15, 0
    %p120 = por %p118, %p119
    %p121 = scmp.ne.s32.totalorder %s107, %s108
    %p122 = scmp.eq.s32.totalorder %s16, 1
    %p123 = por %p121, %p122
    %p125 = scmp.ne.s32.totalorder %s108, %s124
    %p126 = scmp.eq.s32.totalorder %s16, 0
    %p127 = por %p125, %p126
    %s128 = ssub.s32 %s17, %s29
    %s129 = ssub.s32 %s18, %s25
    %s130 = sor.u32 %s128, %s129
    %p131 = scmp.eq.s32.totalorder %s130, 0
    %s133 = sadd.s32 %s132, 1
    %s134 = scalar_select %p131, %s132, %s133
    %p137 = pneg %p131
    %p138 = scmp.eq.s32.totalorder %s10, 1
    %p139 = por %p137, %p138
    %p140 = scmp.ne.s32.totalorder %s132, %s135
    %p141 = scmp.eq.s32.totalorder %s10, 0
    %p142 = por %p140, %p141
    %p143 = scmp.ne.s32.totalorder %s132, %s135
    %p144 = scmp.eq.s32.totalorder %s15, 1
    %p145 = por %p143, %p144
    %p146 = scmp.ne.s32.totalorder %s135, %s136
    %p147 = scmp.eq.s32.totalorder %s15, 0
    %p148 = por %p146, %p147
    %p149 = scmp.ne.s32.totalorder %s135, %s136
    %p150 = scmp.eq.s32.totalorder %s16, 1
    %p151 = por %p149, %p150
    %p153 = scmp.ne.s32.totalorder %s136, %s152
    %p154 = scmp.eq.s32.totalorder %s16, 0
    %p155 = por %p153, %p154
    %p156 = scmp.le.s32.totalorder 1, %s10
    %p157 = scmp.lt.s32.totalorder %s10, 3
    %p158 = pnand %p156, %p157
    %p159 = pneg %p158
    // Predicated region
    $region9: #{enhancer_forward.6} parent=5 // pred_check
      _
    $region10: #{enhancer_forward.6} parent=5 // pred_check_branch
      %161 = sbr.rel (%p158) target = $region12
    $region11: #{enhancer_forward.6} parent=5 // pred_region
      %s162 = ssub.s32 %s10, 1
      // Predicated region
      $region13: #{enhancer_forward.6} parent=11 // pred_check
        %p163 = pneg %p71
      $region14: #{enhancer_forward.6} parent=11 // pred_check_branch
        %165 = sbr.rel (%p163) target = $region16
      $region15: #{enhancer_forward.6} parent=11 // pred_region
        _
      $region16: #{enhancer_forward.6} parent=11 // pred_fallthru
        _
      // Predicated region
      $region17: #{enhancer_forward.6} parent=11 // pred_check
        %p166 = pneg %p92
      $region18: #{enhancer_forward.6} parent=11 // pred_check_branch
        %168 = sbr.rel (%p166) target = $region20
      $region19: #{enhancer_forward.6} parent=11 // pred_region
        _
      $region20: #{enhancer_forward.6} parent=11 // pred_fallthru
        _
    $region12: #{enhancer_forward.6} parent=5 // pred_fallthru
      _
    %p169 = scmp.lt.s32.totalorder %s10, 2
    // Predicated region
    $region21: #{enhancer_forward.6} parent=5 // pred_check
      %p170 = pneg %p169
    $region22: #{enhancer_forward.6} parent=5 // pred_check_branch
      %172 = sbr.rel (%p170) target = $region24
    $region23: #{enhancer_forward.6} parent=5 // pred_region
      // Predicated region
      $region25: #{enhancer_forward.6} parent=23 // pred_check
        %p173 = pneg %p44
      $region26: #{enhancer_forward.6} parent=23 // pred_check_branch
        %175 = sbr.rel (%p173) target = $region28
      $region27: #{enhancer_forward.6} parent=23 // pred_region
        %s176 = sadd.s32 %s17, %s18
        %p177 = scmp.lt.s32.totalorder %s176, 1
        %s178 = scalar_select %p177, %s176, 1
        %s179 = smul.addr %s178, 54
        %s180 = smul.addr %s179, 4
        %s181 = scalar_lea.vmem %s0, %s180
        %s182 = sadd.s32 %s17, %s18
      $region28: #{enhancer_forward.6} parent=23 // pred_fallthru
        _
      // Predicated region
      $region29: #{enhancer_forward.6} parent=23 // pred_check
        %p183 = pneg %p114
      $region30: #{enhancer_forward.6} parent=23 // pred_check_branch
        %185 = sbr.rel (%p183) target = $region32
      $region31: #{enhancer_forward.6} parent=23 // pred_region
        %s186 = smul.u32 16, %s18
        %p187 = scmp.lt.s32.totalorder %s17, 1
        %s188 = scalar_select %p187, %s17, 1
        %p189 = scmp.lt.s32.totalorder %s186, 15
        %s190 = scalar_select %p189, %s186, 15
        %s191 = smul.addr %s190, 2
        %s192 = smul.addr %s188, 32
        %s193 = sadd.s32 %s191, %s192
        %s194 = smul.addr %s193, 8
        %s195 = scalar_lea.vmem %s3, %s194
        %s196 = smul.u32 16, %s18
      $region32: #{enhancer_forward.6} parent=23 // pred_fallthru
        _
    $region24: #{enhancer_forward.6} parent=5 // pred_fallthru
      _
    %p197 = scmp.le.s32.totalorder 1, %s10
    %p198 = scmp.lt.s32.totalorder %s10, 3
    %p199 = pnand %p197, %p198
    %p200 = pneg %p199
    // Predicated region
    $region33: #{enhancer_forward.6} parent=5 // pred_check
      _
    $region34: #{enhancer_forward.6} parent=5 // pred_check_branch
      %202 = sbr.rel (%p199) target = $region36
    $region35: #{enhancer_forward.6} parent=5 // pred_region
      %s203 = ssub.s32 %s10, 1
      %s204 = sadd.s32 %s19, %s20
      %p205 = scmp.lt.s32.totalorder %s204, 1
      %s206 = scalar_select %p205, %s204, 1
      %s207 = smul.addr %s206, 54
      %s208 = smul.addr %s207, 4
      %s209 = scalar_lea.vmem %s0, %s208
      %p210 = pneg %p50
      %p211 = pneg %p47
      %p212 = pneg %p71
      %p213 = pneg %p68
      %p214 = pneg %p92
      %p215 = pneg %p89
      %s216 = smul.u32 16, %s20
      %p217 = scmp.lt.s32.totalorder %s19, 1
      %s218 = scalar_select %p217, %s19, 1
      %p219 = scmp.lt.s32.totalorder %s216, 15
      %s220 = scalar_select %p219, %s216, 15
      %s221 = smul.addr %s220, 2
      %s222 = smul.addr %s218, 32
      %s223 = sadd.s32 %s221, %s222
      %s224 = smul.addr %s223, 8
      %s225 = scalar_lea.vmem %s3, %s224
      %p226 = pneg %p120
      %p227 = pneg %p117
      %p228 = pneg %p148
      %p229 = pneg %p145
      %s230 = smul.u32 16, %s20
      %p231 = scmp.lt.s32.totalorder %s19, 1
      %s232 = scalar_select %p231, %s19, 1
      %p233 = scmp.lt.s32.totalorder %s230, 15
      %s234 = scalar_select %p233, %s230, 15
      %s235 = smul.addr %s234, 2
      %s236 = smul.addr %s232, 32
      %s237 = sadd.s32 %s235, %s236
      %s238 = smul.addr %s237, 8
      %s239 = scalar_lea.vmem %s4, %s238
      %s240 = sadd.s32 %s19, %s20
      %p241 = scmp.lt.s32.totalorder %s240, 1
      %s242 = scalar_select %p241, %s240, 1
      %s243 = smul.addr %s242, 54
      %s244 = smul.addr %s243, 4
      %s245 = scalar_lea.vmem %s0, %s244
      %s246 = sadd.s32 %s19, %s20
      %s247 = smul.u32 16, %s20
      %p248 = scmp.lt.s32.totalorder %s19, 1
      %s249 = scalar_select %p248, %s19, 1
      %p250 = scmp.lt.s32.totalorder %s247, 15
      %s251 = scalar_select %p250, %s247, 15
      %s252 = smul.addr %s251, 2
      %s253 = smul.addr %s249, 32
      %s254 = sadd.s32 %s252, %s253
      %s255 = smul.addr %s254, 8
      %s256 = scalar_lea.vmem %s3, %s255
      %s257 = smul.u32 16, %s20
      %s258 = smul.u32 16, %s20
      %p259 = scmp.lt.s32.totalorder %s19, 1
      %s260 = scalar_select %p259, %s19, 1
      %p261 = scmp.lt.s32.totalorder %s258, 15
      %s262 = scalar_select %p261, %s258, 15
      %s263 = smul.addr %s262, 2
      %s264 = smul.addr %s260, 32
      %s265 = sadd.s32 %s263, %s264
      %s266 = smul.addr %s265, 8
      %s267 = scalar_lea.vmem %s4, %s266
      %s268 = smul.u32 16, %s20
      %v270 = vld [vmem:[%s245] sm:$0xf]
      %v271 = vld [vmem:[%s245 + $0x4] sm:$0xf]
      %v272 = vld [vmem:[%s245 + $0x8] sm:$0x1]
      %v273 = vld [vmem:[%s245 + $0xc] sm:$0xf]
      %v274 = vld [vmem:[%s245 + $0x10] sm:$0xf]
      %v275 = vld [vmem:[%s245 + $0x14] sm:$0x1]
      %v276 = vld [vmem:[%s245 + $0x18] sm:$0xf]
      %v277 = vld [vmem:[%s245 + $0x1c] sm:$0xf]
      %v278 = vld [vmem:[%s245 + $0x20] sm:$0x1]
      %v279 = vld [vmem:[%s245 + $0x24] sm:$0xf]
      %v280 = vld [vmem:[%s245 + $0x28] sm:$0xf]
      %v281 = vld [vmem:[%s245 + $0x2c] sm:$0x1]
      %v282 = vld [vmem:[%s245 + $0x30] sm:$0xf]
      %v283 = vld [vmem:[%s245 + $0x34] sm:$0xf]
      %v284 = vld [vmem:[%s245 + $0x38] sm:$0x1]
      %v285 = vld [vmem:[%s245 + $0x3c] sm:$0xf]
      %v286 = vld [vmem:[%s245 + $0x40] sm:$0xf]
      %v287 = vld [vmem:[%s245 + $0x44] sm:$0x1]
      %v288 = vld [vmem:[%s245 + $0x48] sm:$0xf]
      %v289 = vld [vmem:[%s245 + $0x4c] sm:$0xf]
      %v290 = vld [vmem:[%s245 + $0x50] sm:$0x1]
      %v291 = vld [vmem:[%s245 + $0x54] sm:$0xf]
      %v292 = vld [vmem:[%s245 + $0x58] sm:$0xf]
      %v293 = vld [vmem:[%s245 + $0x5c] sm:$0x1]
      %v294 = vld [vmem:[%s245 + $0x60] sm:$0xf]
      %v295 = vld [vmem:[%s245 + $0x64] sm:$0xf]
      %v296 = vld [vmem:[%s245 + $0x68] sm:$0x1]
      %v297 = vld [vmem:[%s245 + $0x6c] sm:$0xf]
      %v298 = vld [vmem:[%s245 + $0x70] sm:$0xf]
      %v299 = vld [vmem:[%s245 + $0x74] sm:$0x1]
      %v300 = vld [vmem:[%s245 + $0x78] sm:$0xf]
      %v301 = vld [vmem:[%s245 + $0x7c] sm:$0xf]
      %v302 = vld [vmem:[%s245 + $0x80] sm:$0x1]
      %v303 = vld [vmem:[%s245 + $0x84] sm:$0xf]
      %v304 = vld [vmem:[%s245 + $0x88] sm:$0xf]
      %v305 = vld [vmem:[%s245 + $0x8c] sm:$0x1]
      %v306 = vld [vmem:[%s245 + $0x90] sm:$0xf]
      %v307 = vld [vmem:[%s245 + $0x94] sm:$0xf]
      %v308 = vld [vmem:[%s245 + $0x98] sm:$0x1]
      %v309 = vld [vmem:[%s245 + $0x9c] sm:$0xf]
      %v310 = vld [vmem:[%s245 + $0xa0] sm:$0xf]
      %v311 = vld [vmem:[%s245 + $0xa4] sm:$0x1]
      %v312 = vld [vmem:[%s245 + $0xa8] sm:$0xf]
      %v313 = vld [vmem:[%s245 + $0xac] sm:$0xf]
      %v314 = vld [vmem:[%s245 + $0xb0] sm:$0x1]
      %v315 = vld [vmem:[%s245 + $0xb4] sm:$0xf]
      %v316 = vld [vmem:[%s245 + $0xb8] sm:$0xf]
      %v317 = vld [vmem:[%s245 + $0xbc] sm:$0x1]
      %v318 = vld [vmem:[%s245 + $0xc0] sm:$0xf]
      %v319 = vld [vmem:[%s245 + $0xc4] sm:$0xf]
      %v320 = vld [vmem:[%s245 + $0xc8] sm:$0x1]
      %v321 = vld [vmem:[%s245 + $0xcc] sm:$0xf]
      %v322 = vld [vmem:[%s245 + $0xd0] sm:$0xf]
      %v323 = vld [vmem:[%s245 + $0xd4] sm:$0x1]
      %v356 = vunpack.c.l.b16 %v270
      %v357 = vunpack.c.l.b16 %v271
      %v358 = vunpack.c.l.b16 %v273
      %v359 = vunpack.c.l.b16 %v274
      %v360 = vunpack.c.l.b16 %v276
      %v361 = vunpack.c.l.b16 %v277
      %v362 = vunpack.c.l.b16 %v279
      %v363 = vunpack.c.l.b16 %v280
      %v364 = vunpack.c.l.b16 %v282
      %v365 = vunpack.c.l.b16 %v283
      %v366 = vunpack.c.l.b16 %v285
      %v367 = vunpack.c.l.b16 %v286
      %v368 = vunpack.c.l.b16 %v288
      %v369 = vunpack.c.l.b16 %v289
      %v370 = vunpack.c.l.b16 %v291
      %v371 = vunpack.c.l.b16 %v292
      %v372 = vunpack.c.l.b16 %v294
      %v373 = vunpack.c.l.b16 %v295
      %v374 = vunpack.c.l.b16 %v297
      %v375 = vunpack.c.l.b16 %v298
      %v376 = vunpack.c.l.b16 %v300
      %v377 = vunpack.c.l.b16 %v301
      %v378 = vunpack.c.l.b16 %v303
      %v379 = vunpack.c.l.b16 %v304
      %v380 = vunpack.c.l.b16 %v306
      %v381 = vunpack.c.l.b16 %v307
      %v382 = vunpack.c.l.b16 %v309
      %v383 = vunpack.c.l.b16 %v310
      %v384 = vunpack.c.l.b16 %v312
      %v385 = vunpack.c.l.b16 %v313
      %v386 = vunpack.c.l.b16 %v315
      %v387 = vunpack.c.l.b16 %v316
      %v388 = vpack.c.b16 %v357, %v356
      %v389 = vpack.c.b16 %v359, %v358
      %v390 = vpack.c.b16 %v361, %v360
      %v391 = vpack.c.b16 %v363, %v362
      %v392 = vpack.c.b16 %v365, %v364
      %v393 = vpack.c.b16 %v367, %v366
      %v394 = vpack.c.b16 %v369, %v368
      %v395 = vpack.c.b16 %v371, %v370
      %v396 = vpack.c.b16 %v373, %v372
      %v397 = vpack.c.b16 %v375, %v374
      %v398 = vpack.c.b16 %v377, %v376
      %v399 = vpack.c.b16 %v379, %v378
      %v400 = vpack.c.b16 %v381, %v380
      %v401 = vpack.c.b16 %v383, %v382
      %v402 = vpack.c.b16 %v385, %v384
      %v403 = vpack.c.b16 %v387, %v386
      %v420 = vunpack.c.l.b16 %v272
      %v421 = vunpack.c.l.b16 %v275
      %v422 = vunpack.c.l.b16 %v278
      %v423 = vunpack.c.l.b16 %v281
      %v424 = vunpack.c.l.b16 %v284
      %v425 = vunpack.c.l.b16 %v287
      %v426 = vunpack.c.l.b16 %v290
      %v427 = vunpack.c.l.b16 %v293
      %v428 = vunpack.c.l.b16 %v296
      %v429 = vunpack.c.l.b16 %v299
      %v430 = vunpack.c.l.b16 %v302
      %v431 = vunpack.c.l.b16 %v305
      %v432 = vunpack.c.l.b16 %v308
      %v433 = vunpack.c.l.b16 %v311
      %v434 = vunpack.c.l.b16 %v314
      %v435 = vunpack.c.l.b16 %v317
      %v436 = vpack.c.b16 %v420, %v420
      %v437 = vpack.c.b16 %v421, %v421
      %v438 = vpack.c.b16 %v422, %v422
      %v439 = vpack.c.b16 %v423, %v423
      %v440 = vpack.c.b16 %v424, %v424
      %v441 = vpack.c.b16 %v425, %v425
      %v442 = vpack.c.b16 %v426, %v426
      %v443 = vpack.c.b16 %v427, %v427
      %v444 = vpack.c.b16 %v428, %v428
      %v445 = vpack.c.b16 %v429, %v429
      %v446 = vpack.c.b16 %v430, %v430
      %v447 = vpack.c.b16 %v431, %v431
      %v448 = vpack.c.b16 %v432, %v432
      %v449 = vpack.c.b16 %v433, %v433
      %v450 = vpack.c.b16 %v434, %v434
      %v451 = vpack.c.b16 %v435, %v435
      %vm452 = vsmask.f32 7424
      %v454 = vshrl.u32 %v388, 16
      %v456 = vshll.u32 %v388, 16
      %v458 = vrot.slane %v456, 1
      %v459 = vor.u32 %v454, %v458
      %v461 = vshll.u32 %v436, 16
      %v463 = vrot.slane %v461, 1
      %v464 = vsel %vm452, %v459, %v463
      %v466 = vshrl.u32 %v389, 16
      %v468 = vshll.u32 %v389, 16
      %v470 = vrot.slane %v468, 1
      %v471 = vor.u32 %v466, %v470
      %v473 = vshll.u32 %v437, 16
      %v475 = vrot.slane %v473, 1
      %v476 = vsel %vm452, %v471, %v475
      %v478 = vshrl.u32 %v390, 16
      %v480 = vshll.u32 %v390, 16
      %v482 = vrot.slane %v480, 1
      %v483 = vor.u32 %v478, %v482
      %v485 = vshll.u32 %v438, 16
      %v487 = vrot.slane %v485, 1
      %v488 = vsel %vm452, %v483, %v487
      %v490 = vshrl.u32 %v391, 16
      %v492 = vshll.u32 %v391, 16
      %v494 = vrot.slane %v492, 1
      %v495 = vor.u32 %v490, %v494
      %v497 = vshll.u32 %v439, 16
      %v499 = vrot.slane %v497, 1
      %v500 = vsel %vm452, %v495, %v499
      %v502 = vshrl.u32 %v392, 16
      %v504 = vshll.u32 %v392, 16
      %v506 = vrot.slane %v504, 1
      %v507 = vor.u32 %v502, %v506
      %v509 = vshll.u32 %v440, 16
      %v511 = vrot.slane %v509, 1
      %v512 = vsel %vm452, %v507, %v511
      %v514 = vshrl.u32 %v393, 16
      %v516 = vshll.u32 %v393, 16
      %v518 = vrot.slane %v516, 1
      %v519 = vor.u32 %v514, %v518
      %v521 = vshll.u32 %v441, 16
      %v523 = vrot.slane %v521, 1
      %v524 = vsel %vm452, %v519, %v523
      %v526 = vshrl.u32 %v394, 16
      %v528 = vshll.u32 %v394, 16
      %v530 = vrot.slane %v528, 1
      %v531 = vor.u32 %v526, %v530
      %v533 = vshll.u32 %v442, 16
      %v535 = vrot.slane %v533, 1
      %v536 = vsel %vm452, %v531, %v535
      %v538 = vshrl.u32 %v395, 16
      %v540 = vshll.u32 %v395, 16
      %v542 = vrot.slane %v540, 1
      %v543 = vor.u32 %v538, %v542
      %v545 = vshll.u32 %v443, 16
      %v547 = vrot.slane %v545, 1
      %v548 = vsel %vm452, %v543, %v547
      %v550 = vshrl.u32 %v396, 16
      %v552 = vshll.u32 %v396, 16
      %v554 = vrot.slane %v552, 1
      %v555 = vor.u32 %v550, %v554
      %v557 = vshll.u32 %v444, 16
      %v559 = vrot.slane %v557, 1
      %v560 = vsel %vm452, %v555, %v559
      %v562 = vshrl.u32 %v397, 16
      %v564 = vshll.u32 %v397, 16
      %v566 = vrot.slane %v564, 1
      %v567 = vor.u32 %v562, %v566
      %v569 = vshll.u32 %v445, 16
      %v571 = vrot.slane %v569, 1
      %v572 = vsel %vm452, %v567, %v571
      %v574 = vshrl.u32 %v398, 16
      %v576 = vshll.u32 %v398, 16
      %v578 = vrot.slane %v576, 1
      %v579 = vor.u32 %v574, %v578
      %v581 = vshll.u32 %v446, 16
      %v583 = vrot.slane %v581, 1
      %v584 = vsel %vm452, %v579, %v583
      %v586 = vshrl.u32 %v399, 16
      %v588 = vshll.u32 %v399, 16
      %v590 = vrot.slane %v588, 1
      %v591 = vor.u32 %v586, %v590
      %v593 = vshll.u32 %v447, 16
      %v595 = vrot.slane %v593, 1
      %v596 = vsel %vm452, %v591, %v595
      %v598 = vshrl.u32 %v400, 16
      %v600 = vshll.u32 %v400, 16
      %v602 = vrot.slane %v600, 1
      %v603 = vor.u32 %v598, %v602
      %v605 = vshll.u32 %v448, 16
      %v607 = vrot.slane %v605, 1
      %v608 = vsel %vm452, %v603, %v607
      %v610 = vshrl.u32 %v401, 16
      %v612 = vshll.u32 %v401, 16
      %v614 = vrot.slane %v612, 1
      %v615 = vor.u32 %v610, %v614
      %v617 = vshll.u32 %v449, 16
      %v619 = vrot.slane %v617, 1
      %v620 = vsel %vm452, %v615, %v619
      %v622 = vshrl.u32 %v402, 16
      %v624 = vshll.u32 %v402, 16
      %v626 = vrot.slane %v624, 1
      %v627 = vor.u32 %v622, %v626
      %v629 = vshll.u32 %v450, 16
      %v631 = vrot.slane %v629, 1
      %v632 = vsel %vm452, %v627, %v631
      %v634 = vshrl.u32 %v403, 16
      %v636 = vshll.u32 %v403, 16
      %v638 = vrot.slane %v636, 1
      %v639 = vor.u32 %v634, %v638
      %v641 = vshll.u32 %v451, 16
      %v643 = vrot.slane %v641, 1
      %v644 = vsel %vm452, %v639, %v643
      %645 = vrot.lane.b32.xlu0 %v464, 64
      %v646 = vpop.permute.xlu0 %645
      %647 = vrot.lane.b32.xlu0 %v476, 64
      %v648 = vpop.permute.xlu0 %647
      %649 = vrot.lane.b32.xlu0 %v488, 64
      %v650 = vpop.permute.xlu0 %649
      %651 = vrot.lane.b32.xlu0 %v500, 64
      %v652 = vpop.permute.xlu0 %651
      %653 = vrot.lane.b32.xlu0 %v512, 64
      %v654 = vpop.permute.xlu0 %653
      %655 = vrot.lane.b32.xlu0 %v524, 64
      %v656 = vpop.permute.xlu0 %655
      %657 = vrot.lane.b32.xlu0 %v536, 64
      %v658 = vpop.permute.xlu0 %657
      %659 = vrot.lane.b32.xlu0 %v548, 64
      %v660 = vpop.permute.xlu0 %659
      %661 = vrot.lane.b32.xlu0 %v560, 64
      %v662 = vpop.permute.xlu0 %661
      %663 = vrot.lane.b32.xlu0 %v572, 64
      %v664 = vpop.permute.xlu0 %663
      %665 = vrot.lane.b32.xlu0 %v584, 64
      %v666 = vpop.permute.xlu0 %665
      %667 = vrot.lane.b32.xlu0 %v596, 64
      %v668 = vpop.permute.xlu0 %667
      %669 = vrot.lane.b32.xlu0 %v608, 64
      %v670 = vpop.permute.xlu0 %669
      %671 = vrot.lane.b32.xlu0 %v620, 64
      %v672 = vpop.permute.xlu0 %671
      %673 = vrot.lane.b32.xlu0 %v632, 64
      %v674 = vpop.permute.xlu0 %673
      %675 = vrot.lane.b32.xlu0 %v644, 64
      %v676 = vpop.permute.xlu0 %675
      %vm677 = vcmask 1046528
      %v678 = vrot.slane %v388, 1
      %v679 = vrot.slane %v436, 1
      %v680 = vsel %vm677, %v678, %v679
      %v681 = vrot.slane %v389, 1
      %v682 = vrot.slane %v437, 1
      %v683 = vsel %vm677, %v681, %v682
      %v684 = vrot.slane %v390, 1
      %v685 = vrot.slane %v438, 1
      %v686 = vsel %vm677, %v684, %v685
      %v687 = vrot.slane %v391, 1
      %v688 = vrot.slane %v439, 1
      %v689 = vsel %vm677, %v687, %v688
      %v690 = vrot.slane %v392, 1
      %v691 = vrot.slane %v440, 1
      %v692 = vsel %vm677, %v690, %v691
      %v693 = vrot.slane %v393, 1
      %v694 = vrot.slane %v441, 1
      %v695 = vsel %vm677, %v693, %v694
      %v696 = vrot.slane %v394, 1
      %v697 = vrot.slane %v442, 1
      %v698 = vsel %vm677, %v696, %v697
      %v699 = vrot.slane %v395, 1
      %v700 = vrot.slane %v443, 1
      %v701 = vsel %vm677, %v699, %v700
      %v702 = vrot.slane %v396, 1
      %v703 = vrot.slane %v444, 1
      %v704 = vsel %vm677, %v702, %v703
      %v705 = vrot.slane %v397, 1
      %v706 = vrot.slane %v445, 1
      %v707 = vsel %vm677, %v705, %v706
      %v708 = vrot.slane %v398, 1
      %v709 = vrot.slane %v446, 1
      %v710 = vsel %vm677, %v708, %v709
      %v711 = vrot.slane %v399, 1
      %v712 = vrot.slane %v447, 1
      %v713 = vsel %vm677, %v711, %v712
      %v714 = vrot.slane %v400, 1
      %v715 = vrot.slane %v448, 1
      %v716 = vsel %vm677, %v714, %v715
      %v717 = vrot.slane %v401, 1
      %v718 = vrot.slane %v449, 1
      %v719 = vsel %vm677, %v717, %v718
      %v720 = vrot.slane %v402, 1
      %v721 = vrot.slane %v450, 1
      %v722 = vsel %vm677, %v720, %v721
      %v723 = vrot.slane %v403, 1
      %v724 = vrot.slane %v451, 1
      %v725 = vsel %vm677, %v723, %v724
      %vm726 = vcmask 523264
      %v728 = vsel %vm726, %v388, %v646
      %v731 = vsel %vm726, %v389, %v648
      %v734 = vsel %vm726, %v390, %v650
      %v737 = vsel %vm726, %v391, %v652
      %v740 = vsel %vm726, %v392, %v654
      %v743 = vsel %vm726, %v393, %v656
      %v746 = vsel %vm726, %v394, %v658
      %v749 = vsel %vm726, %v395, %v660
      %v752 = vsel %vm726, %v396, %v662
      %v755 = vsel %vm726, %v397, %v664
      %v758 = vsel %vm726, %v398, %v666
      %v761 = vsel %vm726, %v399, %v668
      %v764 = vsel %vm726, %v400, %v670
      %v767 = vsel %vm726, %v401, %v672
      %v770 = vsel %vm726, %v402, %v674
      %v773 = vsel %vm726, %v403, %v676
      %v775 = vld [vmem:[%s1] sm:$0xf]
      %v776 = vld [vmem:[%s1 + $0x4] sm:$0xf]
      %v777 = vld [vmem:[%s1 + $0x8] sm:$0xf]
      %v778 = vld [vmem:[%s1 + $0xc] sm:$0xf]
      %v779 = vld [vmem:[%s1 + $0x10] sm:$0xf]
      %v780 = vld [vmem:[%s1 + $0x14] sm:$0xf]
      %v781 = vld [vmem:[%s1 + $0x18] sm:$0xf]
      %v782 = vld [vmem:[%s1 + $0x1c] sm:$0xf]
      %v783 = vld [vmem:[%s1 + $0x20] sm:$0xf]
      %v784 = vld [vmem:[%s1 + $0x24] sm:$0xf]
      %v785 = vld [vmem:[%s1 + $0x28] sm:$0xf]
      %v786 = vld [vmem:[%s1 + $0x2c] sm:$0xf]
      %v787 = vld [vmem:[%s1 + $0x30] sm:$0xf]
      %v788 = vld [vmem:[%s1 + $0x34] sm:$0xf]
      %v789 = vld [vmem:[%s1 + $0x38] sm:$0xf]
      %v790 = vld [vmem:[%s1 + $0x3c] sm:$0xf]
      %v791 = vld [vmem:[%s1 + $0x40] sm:$0xf]
      %v792 = vld [vmem:[%s1 + $0x44] sm:$0xf]
      %v793 = vld [vmem:[%s1 + $0x48] sm:$0xf]
      %v794 = vld [vmem:[%s1 + $0x4c] sm:$0xf]
      %v795 = vld [vmem:[%s1 + $0x50] sm:$0xf]
      %v796 = vld [vmem:[%s1 + $0x54] sm:$0xf]
      %v797 = vld [vmem:[%s1 + $0x58] sm:$0xf]
      %v798 = vld [vmem:[%s1 + $0x5c] sm:$0xf]
      %v801 = vunpack.c.l.b16 %v318
      %v802 = vunpack.c.l.b16 %v319
      %v803 = vpack.c.b16 %v802, %v801
      %v805 = vunpack.c.l.b16 %v320
      %v806 = vpack.c.b16 %v805, %v805
      %v808 = vshrl.u32 %v803, 16
      %v810 = vshll.u32 %v803, 16
      %v812 = vrot.slane %v810, 1
      %v813 = vor.u32 %v808, %v812
      %v815 = vshll.u32 %v806, 16
      %v817 = vrot.slane %v815, 1
      %v818 = vsel %vm452, %v813, %v817
      %819 = vrot.lane.b32.xlu0 %v818, 64
      %v820 = vpop.permute.xlu0 %819
      %v821 = vrot.slane %v803, 1
      %v822 = vrot.slane %v806, 1
      %v823 = vsel %vm677, %v821, %v822
      %v825 = vsel %vm726, %v803, %v820
      %s827 = scalar_lea.vmem %s1, 96
      %v828 = vld [vmem:[%s827] sm:$0xf]
      %v829 = vld [vmem:[%s827 + $0x4] sm:$0xf]
      %v830 = vld [vmem:[%s827 + $0x8] sm:$0xf]
      %v831 = vld [vmem:[%s827 + $0xc] sm:$0xf]
      %v832 = vld [vmem:[%s827 + $0x10] sm:$0xf]
      %v833 = vld [vmem:[%s827 + $0x14] sm:$0xf]
      %v834 = vld [vmem:[%s827 + $0x18] sm:$0xf]
      %v835 = vld [vmem:[%s827 + $0x1c] sm:$0xf]
      %v836 = vld [vmem:[%s827 + $0x20] sm:$0xf]
      %v837 = vld [vmem:[%s827 + $0x24] sm:$0xf]
      %v838 = vld [vmem:[%s827 + $0x28] sm:$0xf]
      %v839 = vld [vmem:[%s827 + $0x2c] sm:$0xf]
      %v840 = vld [vmem:[%s827 + $0x30] sm:$0xf]
      %v841 = vld [vmem:[%s827 + $0x34] sm:$0xf]
      %v842 = vld [vmem:[%s827 + $0x38] sm:$0xf]
      %v843 = vld [vmem:[%s827 + $0x3c] sm:$0xf]
      %v844 = vld [vmem:[%s827 + $0x40] sm:$0xf]
      %v845 = vld [vmem:[%s827 + $0x44] sm:$0xf]
      %v846 = vld [vmem:[%s827 + $0x48] sm:$0xf]
      %v847 = vld [vmem:[%s827 + $0x4c] sm:$0xf]
      %v848 = vld [vmem:[%s827 + $0x50] sm:$0xf]
      %v849 = vld [vmem:[%s827 + $0x54] sm:$0xf]
      %v850 = vld [vmem:[%s827 + $0x58] sm:$0xf]
      %v851 = vld [vmem:[%s827 + $0x5c] sm:$0xf]
      %v876 = vunpack.c.l.b16 %v828
      %v877 = vunpack.c.l.b16 %v829
      %v878 = vunpack.c.l.b16 %v830
      %v879 = vunpack.c.l.b16 %v831
      %v880 = vunpack.c.l.b16 %v832
      %v881 = vunpack.c.l.b16 %v833
      %v882 = vunpack.c.l.b16 %v834
      %v883 = vunpack.c.l.b16 %v835
      %v884 = vunpack.c.l.b16 %v836
      %v885 = vunpack.c.l.b16 %v837
      %v886 = vunpack.c.l.b16 %v838
      %v887 = vunpack.c.l.b16 %v839
      %v888 = vunpack.c.l.b16 %v840
      %v889 = vunpack.c.l.b16 %v841
      %v890 = vunpack.c.l.b16 %v842
      %v891 = vunpack.c.l.b16 %v843
      %v892 = vunpack.c.l.b16 %v844
      %v893 = vunpack.c.l.b16 %v845
      %v894 = vunpack.c.l.b16 %v846
      %v895 = vunpack.c.l.b16 %v847
      %v896 = vunpack.c.l.b16 %v848
      %v897 = vunpack.c.l.b16 %v849
      %v898 = vunpack.c.l.b16 %v850
      %v899 = vunpack.c.l.b16 %v851
      %v900 = vpack.c.b16 %v877, %v876
      %v901 = vpack.c.b16 %v879, %v878
      %v902 = vpack.c.b16 %v881, %v880
      %v903 = vpack.c.b16 %v883, %v882
      %v904 = vpack.c.b16 %v885, %v884
      %v905 = vpack.c.b16 %v887, %v886
      %v906 = vpack.c.b16 %v889, %v888
      %v907 = vpack.c.b16 %v891, %v890
      %v908 = vpack.c.b16 %v893, %v892
      %v909 = vpack.c.b16 %v895, %v894
      %v910 = vpack.c.b16 %v897, %v896
      %v911 = vpack.c.b16 %v899, %v898
      %v925 = vsel %vm726, %v683, 0
      %v928 = vsel %vm726, %v686, 0
      %v931 = vsel %vm726, %v689, 0
      %v934 = vsel %vm726, %v692, 0
      %v937 = vsel %vm726, %v695, 0
      %v940 = vsel %vm726, %v698, 0
      %v943 = vsel %vm726, %v701, 0
      %v946 = vsel %vm726, %v704, 0
      %v949 = vsel %vm726, %v707, 0
      %v952 = vsel %vm726, %v710, 0
      %v955 = vsel %vm726, %v713, 0
      %v958 = vsel %vm726, %v716, 0
      %v961 = vsel %vm726, %v719, 0
      %v964 = vsel %vm726, %v722, 0
      %v967 = vsel %vm726, %v725, 0
      %v970 = vsel %vm726, %v823, 0
      %972 = vmatpush.bf16.msra.mxu0 %v907
      %973 = vmatpush.bf16.msra.mxu0 %v906
      %974 = vmatpush.bf16.msra.mxu0 %v905
      %975 = vmatpush.bf16.msra.mxu0 %v904
      %976 = vmatpush.bf16.msra.mxu0 %v903
      %977 = vmatpush.bf16.msra.mxu0 %v902
      %978 = vmatpush.bf16.msra.mxu0 %v901
      %979 = vmatpush.bf16.msra.mxu0 %v900
      %980 = vmatmul.bf16.gmra.mxu0 %v731
      %v981 = vpop.f32.mrf.mxu0
      %v982 = vadd.f32 0.0, %v981
      %v983 = vpop.f32.mrf.mxu0
      %v984 = vadd.f32 0.0, %v983
      %985 = vmatmul.bf16.gmra.mxu0 %v734
      %v986 = vpop.f32.mrf.mxu0
      %v987 = vadd.f32 0.0, %v986
      %v988 = vpop.f32.mrf.mxu0
      %v989 = vadd.f32 0.0, %v988
      %990 = vmatmul.bf16.gmra.mxu0 %v737
      %v991 = vpop.f32.mrf.mxu0
      %v992 = vadd.f32 0.0, %v991
      %v993 = vpop.f32.mrf.mxu0
      %v994 = vadd.f32 0.0, %v993
      %995 = vmatmul.bf16.gmra.mxu0 %v740
      %v996 = vpop.f32.mrf.mxu0
      %v997 = vadd.f32 0.0, %v996
      %v998 = vpop.f32.mrf.mxu0
      %v999 = vadd.f32 0.0, %v998
      %1000 = vmatmul.bf16.gmra.mxu0 %v743
      %v1001 = vpop.f32.mrf.mxu0
      %v1002 = vadd.f32 0.0, %v1001
      %v1003 = vpop.f32.mrf.mxu0
      %v1004 = vadd.f32 0.0, %v1003
      %1005 = vmatmul.bf16.gmra.mxu0 %v746
      %v1006 = vpop.f32.mrf.mxu0
      %v1007 = vadd.f32 0.0, %v1006
      %v1008 = vpop.f32.mrf.mxu0
      %v1009 = vadd.f32 0.0, %v1008
      %1010 = vmatmul.bf16.gmra.mxu0 %v749
      %v1011 = vpop.f32.mrf.mxu0
      %v1012 = vadd.f32 0.0, %v1011
      %v1013 = vpop.f32.mrf.mxu0
      %v1014 = vadd.f32 0.0, %v1013
      %1015 = vmatmul.bf16.gmra.mxu0 %v752
      %v1016 = vpop.f32.mrf.mxu0
      %v1017 = vadd.f32 0.0, %v1016
      %v1018 = vpop.f32.mrf.mxu0
      %v1019 = vadd.f32 0.0, %v1018
      %1020 = vmatmul.bf16.gmra.mxu0 %v755
      %v1021 = vpop.f32.mrf.mxu0
      %v1022 = vadd.f32 0.0, %v1021
      %v1023 = vpop.f32.mrf.mxu0
      %v1024 = vadd.f32 0.0, %v1023
      %1025 = vmatmul.bf16.gmra.mxu0 %v758
      %v1026 = vpop.f32.mrf.mxu0
      %v1027 = vadd.f32 0.0, %v1026
      %v1028 = vpop.f32.mrf.mxu0
      %v1029 = vadd.f32 0.0, %v1028
      %1030 = vmatmul.bf16.gmra.mxu0 %v761
      %v1031 = vpop.f32.mrf.mxu0
      %v1032 = vadd.f32 0.0, %v1031
      %v1033 = vpop.f32.mrf.mxu0
      %v1034 = vadd.f32 0.0, %v1033
      %1035 = vmatmul.bf16.gmra.mxu0 %v764
      %v1036 = vpop.f32.mrf.mxu0
      %v1037 = vadd.f32 0.0, %v1036
      %v1038 = vpop.f32.mrf.mxu0
      %v1039 = vadd.f32 0.0, %v1038
      %1040 = vmatmul.bf16.gmra.mxu0 %v767
      %v1041 = vpop.f32.mrf.mxu0
      %v1042 = vadd.f32 0.0, %v1041
      %v1043 = vpop.f32.mrf.mxu0
      %v1044 = vadd.f32 0.0, %v1043
      %1045 = vmatmul.bf16.gmra.mxu0 %v770
      %v1046 = vpop.f32.mrf.mxu0
      %v1047 = vadd.f32 0.0, %v1046
      %v1048 = vpop.f32.mrf.mxu0
      %v1049 = vadd.f32 0.0, %v1048
      %1050 = vmatmul.bf16.gmra.mxu0 %v773
      %v1051 = vpop.f32.mrf.mxu0
      %v1052 = vadd.f32 0.0, %v1051
      %v1053 = vpop.f32.mrf.mxu0
      %v1054 = vadd.f32 0.0, %v1053
      %1055 = vmatmul.bf16.gmra.mxu0 %v825
      %v1056 = vpop.f32.mrf.mxu0
      %v1057 = vadd.f32 0.0, %v1056
      %v1058 = vpop.f32.mrf.mxu0
      %v1059 = vadd.f32 0.0, %v1058
      %1060 = vdwg.mxu0
      %1061 = vmatpush.bf16.msra.mxu0 0
      %1062 = vmatpush.bf16.msra.mxu0 0
      %1063 = vmatpush.bf16.msra.mxu0 0
      %1064 = vmatpush.bf16.msra.mxu0 0
      %1065 = vmatpush.bf16.msra.mxu0 %v911
      %1066 = vmatpush.bf16.msra.mxu0 %v910
      %1067 = vmatpush.bf16.msra.mxu0 %v909
      %1068 = vmatpush.bf16.msra.mxu0 %v908
      %1069 = vmatmul.bf16.gmra.mxu0 %v925
      %v1070 = vpop.f32.mrf.mxu0
      %v1071 = vadd.f32 %v982, %v1070
      %v1072 = vpop.f32.mrf.mxu0
      %v1073 = vadd.f32 %v984, %v1072
      %1074 = vmatmul.bf16.gmra.mxu0 %v928
      %v1075 = vpop.f32.mrf.mxu0
      %v1076 = vadd.f32 %v987, %v1075
      %v1077 = vpop.f32.mrf.mxu0
      %v1078 = vadd.f32 %v989, %v1077
      %1079 = vmatmul.bf16.gmra.mxu0 %v931
      %v1080 = vpop.f32.mrf.mxu0
      %v1081 = vadd.f32 %v992, %v1080
      %v1082 = vpop.f32.mrf.mxu0
      %v1083 = vadd.f32 %v994, %v1082
      %1084 = vmatmul.bf16.gmra.mxu0 %v934
      %v1085 = vpop.f32.mrf.mxu0
      %v1086 = vadd.f32 %v997, %v1085
      %v1087 = vpop.f32.mrf.mxu0
      %v1088 = vadd.f32 %v999, %v1087
      %1089 = vmatmul.bf16.gmra.mxu0 %v937
      %v1090 = vpop.f32.mrf.mxu0
      %v1091 = vadd.f32 %v1002, %v1090
      %v1092 = vpop.f32.mrf.mxu0
      %v1093 = vadd.f32 %v1004, %v1092
      %1094 = vmatmul.bf16.gmra.mxu0 %v940
      %v1095 = vpop.f32.mrf.mxu0
      %v1096 = vadd.f32 %v1007, %v1095
      %v1097 = vpop.f32.mrf.mxu0
      %v1098 = vadd.f32 %v1009, %v1097
      %1099 = vmatmul.bf16.gmra.mxu0 %v943
      %v1100 = vpop.f32.mrf.mxu0
      %v1101 = vadd.f32 %v1012, %v1100
      %v1102 = vpop.f32.mrf.mxu0
      %v1103 = vadd.f32 %v1014, %v1102
      %1104 = vmatmul.bf16.gmra.mxu0 %v946
      %v1105 = vpop.f32.mrf.mxu0
      %v1106 = vadd.f32 %v1017, %v1105
      %v1107 = vpop.f32.mrf.mxu0
      %v1108 = vadd.f32 %v1019, %v1107
      %1109 = vmatmul.bf16.gmra.mxu0 %v949
      %v1110 = vpop.f32.mrf.mxu0
      %v1111 = vadd.f32 %v1022, %v1110
      %v1112 = vpop.f32.mrf.mxu0
      %v1113 = vadd.f32 %v1024, %v1112
      %1114 = vmatmul.bf16.gmra.mxu0 %v952
      %v1115 = vpop.f32.mrf.mxu0
      %v1116 = vadd.f32 %v1027, %v1115
      %v1117 = vpop.f32.mrf.mxu0
      %v1118 = vadd.f32 %v1029, %v1117
      %1119 = vmatmul.bf16.gmra.mxu0 %v955
      %v1120 = vpop.f32.mrf.mxu0
      %v1121 = vadd.f32 %v1032, %v1120
      %v1122 = vpop.f32.mrf.mxu0
      %v1123 = vadd.f32 %v1034, %v1122
      %1124 = vmatmul.bf16.gmra.mxu0 %v958
      %v1125 = vpop.f32.mrf.mxu0
      %v1126 = vadd.f32 %v1037, %v1125
      %v1127 = vpop.f32.mrf.mxu0
      %v1128 = vadd.f32 %v1039, %v1127
      %1129 = vmatmul.bf16.gmra.mxu0 %v961
      %v1130 = vpop.f32.mrf.mxu0
      %v1131 = vadd.f32 %v1042, %v1130
      %v1132 = vpop.f32.mrf.mxu0
      %v1133 = vadd.f32 %v1044, %v1132
      %1134 = vmatmul.bf16.gmra.mxu0 %v964
      %v1135 = vpop.f32.mrf.mxu0
      %v1136 = vadd.f32 %v1047, %v1135
      %v1137 = vpop.f32.mrf.mxu0
      %v1138 = vadd.f32 %v1049, %v1137
      %1139 = vmatmul.bf16.gmra.mxu0 %v967
      %v1140 = vpop.f32.mrf.mxu0
      %v1141 = vadd.f32 %v1052, %v1140
      %v1142 = vpop.f32.mrf.mxu0
      %v1143 = vadd.f32 %v1054, %v1142
      %1144 = vmatmul.bf16.gmra.mxu0 %v970
      %v1145 = vpop.f32.mrf.mxu0
      %v1146 = vadd.f32 %v1057, %v1145
      %v1147 = vpop.f32.mrf.mxu0
      %v1148 = vadd.f32 %v1059, %v1147
      %1149 = vdwg.mxu0
      %v1174 = vunpack.c.l.b16 %v775
      %v1175 = vunpack.c.l.b16 %v776
      %v1176 = vunpack.c.l.b16 %v777
      %v1177 = vunpack.c.l.b16 %v778
      %v1178 = vunpack.c.l.b16 %v779
      %v1179 = vunpack.c.l.b16 %v780
      %v1180 = vunpack.c.l.b16 %v781
      %v1181 = vunpack.c.l.b16 %v782
      %v1182 = vunpack.c.l.b16 %v783
      %v1183 = vunpack.c.l.b16 %v784
      %v1184 = vunpack.c.l.b16 %v785
      %v1185 = vunpack.c.l.b16 %v786
      %v1186 = vunpack.c.l.b16 %v787
      %v1187 = vunpack.c.l.b16 %v788
      %v1188 = vunpack.c.l.b16 %v789
      %v1189 = vunpack.c.l.b16 %v790
      %v1190 = vunpack.c.l.b16 %v791
      %v1191 = vunpack.c.l.b16 %v792
      %v1192 = vunpack.c.l.b16 %v793
      %v1193 = vunpack.c.l.b16 %v794
      %v1194 = vunpack.c.l.b16 %v795
      %v1195 = vunpack.c.l.b16 %v796
      %v1196 = vunpack.c.l.b16 %v797
      %v1197 = vunpack.c.l.b16 %v798
      %v1198 = vpack.c.b16 %v1175, %v1174
      %v1199 = vpack.c.b16 %v1177, %v1176
      %v1200 = vpack.c.b16 %v1179, %v1178
      %v1201 = vpack.c.b16 %v1181, %v1180
      %v1202 = vpack.c.b16 %v1183, %v1182
      %v1203 = vpack.c.b16 %v1185, %v1184
      %v1204 = vpack.c.b16 %v1187, %v1186
      %v1205 = vpack.c.b16 %v1189, %v1188
      %v1206 = vpack.c.b16 %v1191, %v1190
      %v1207 = vpack.c.b16 %v1193, %v1192
      %v1208 = vpack.c.b16 %v1195, %v1194
      %v1209 = vpack.c.b16 %v1197, %v1196
      %v1223 = vsel %vm726, %v680, 0
      %1225 = vmatpush.bf16.msra.mxu0 %v1205
      %1226 = vmatpush.bf16.msra.mxu0 %v1204
      %1227 = vmatpush.bf16.msra.mxu0 %v1203
      %1228 = vmatpush.bf16.msra.mxu0 %v1202
      %1229 = vmatpush.bf16.msra.mxu0 %v1201
      %1230 = vmatpush.bf16.msra.mxu0 %v1200
      %1231 = vmatpush.bf16.msra.mxu0 %v1199
      %1232 = vmatpush.bf16.msra.mxu0 %v1198
      %1233 = vmatmul.bf16.gmra.mxu0 %v728
      %v1234 = vpop.f32.mrf.mxu0
      %v1235 = vadd.f32 %v1071, %v1234
      %v1236 = vpop.f32.mrf.mxu0
      %v1237 = vadd.f32 %v1073, %v1236
      %1238 = vmatmul.bf16.gmra.mxu0 %v731
      %v1239 = vpop.f32.mrf.mxu0
      %v1240 = vadd.f32 %v1076, %v1239
      %v1241 = vpop.f32.mrf.mxu0
      %v1242 = vadd.f32 %v1078, %v1241
      %1243 = vmatmul.bf16.gmra.mxu0 %v734
      %v1244 = vpop.f32.mrf.mxu0
      %v1245 = vadd.f32 %v1081, %v1244
      %v1246 = vpop.f32.mrf.mxu0
      %v1247 = vadd.f32 %v1083, %v1246
      %1248 = vmatmul.bf16.gmra.mxu0 %v737
      %v1249 = vpop.f32.mrf.mxu0
      %v1250 = vadd.f32 %v1086, %v1249
      %v1251 = vpop.f32.mrf.mxu0
      %v1252 = vadd.f32 %v1088, %v1251
      %1253 = vmatmul.bf16.gmra.mxu0 %v740
      %v1254 = vpop.f32.mrf.mxu0
      %v1255 = vadd.f32 %v1091, %v1254
      %v1256 = vpop.f32.mrf.mxu0
      %v1257 = vadd.f32 %v1093, %v1256
      %1258 = vmatmul.bf16.gmra.mxu0 %v743
      %v1259 = vpop.f32.mrf.mxu0
      %v1260 = vadd.f32 %v1096, %v1259
      %v1261 = vpop.f32.mrf.mxu0
      %v1262 = vadd.f32 %v1098, %v1261
      %1263 = vmatmul.bf16.gmra.mxu0 %v746
      %v1264 = vpop.f32.mrf.mxu0
      %v1265 = vadd.f32 %v1101, %v1264
      %v1266 = vpop.f32.mrf.mxu0
      %v1267 = vadd.f32 %v1103, %v1266
      %1268 = vmatmul.bf16.gmra.mxu0 %v749
      %v1269 = vpop.f32.mrf.mxu0
      %v1270 = vadd.f32 %v1106, %v1269
      %v1271 = vpop.f32.mrf.mxu0
      %v1272 = vadd.f32 %v1108, %v1271
      %1273 = vmatmul.bf16.gmra.mxu0 %v752
      %v1274 = vpop.f32.mrf.mxu0
      %v1275 = vadd.f32 %v1111, %v1274
      %v1276 = vpop.f32.mrf.mxu0
      %v1277 = vadd.f32 %v1113, %v1276
      %1278 = vmatmul.bf16.gmra.mxu0 %v755
      %v1279 = vpop.f32.mrf.mxu0
      %v1280 = vadd.f32 %v1116, %v1279
      %v1281 = vpop.f32.mrf.mxu0
      %v1282 = vadd.f32 %v1118, %v1281
      %1283 = vmatmul.bf16.gmra.mxu0 %v758
      %v1284 = vpop.f32.mrf.mxu0
      %v1285 = vadd.f32 %v1121, %v1284
      %v1286 = vpop.f32.mrf.mxu0
      %v1287 = vadd.f32 %v1123, %v1286
      %1288 = vmatmul.bf16.gmra.mxu0 %v761
      %v1289 = vpop.f32.mrf.mxu0
      %v1290 = vadd.f32 %v1126, %v1289
      %v1291 = vpop.f32.mrf.mxu0
      %v1292 = vadd.f32 %v1128, %v1291
      %1293 = vmatmul.bf16.gmra.mxu0 %v764
      %v1294 = vpop.f32.mrf.mxu0
      %v1295 = vadd.f32 %v1131, %v1294
      %v1296 = vpop.f32.mrf.mxu0
      %v1297 = vadd.f32 %v1133, %v1296
      %1298 = vmatmul.bf16.gmra.mxu0 %v767
      %v1299 = vpop.f32.mrf.mxu0
      %v1300 = vadd.f32 %v1136, %v1299
      %v1301 = vpop.f32.mrf.mxu0
      %v1302 = vadd.f32 %v1138, %v1301
      %1303 = vmatmul.bf16.gmra.mxu0 %v770
      %v1304 = vpop.f32.mrf.mxu0
      %v1305 = vadd.f32 %v1141, %v1304
      %v1306 = vpop.f32.mrf.mxu0
      %v1307 = vadd.f32 %v1143, %v1306
      %1308 = vmatmul.bf16.gmra.mxu0 %v773
      %v1309 = vpop.f32.mrf.mxu0
      %v1310 = vadd.f32 %v1146, %v1309
      %v1311 = vpop.f32.mrf.mxu0
      %v1312 = vadd.f32 %v1148, %v1311
      %1313 = vdwg.mxu0
      %1314 = vmatpush.bf16.msra.mxu0 0
      %1315 = vmatpush.bf16.msra.mxu0 0
      %1316 = vmatpush.bf16.msra.mxu0 0
      %1317 = vmatpush.bf16.msra.mxu0 0
      %1318 = vmatpush.bf16.msra.mxu0 %v1209
      %1319 = vmatpush.bf16.msra.mxu0 %v1208
      %1320 = vmatpush.bf16.msra.mxu0 %v1207
      %1321 = vmatpush.bf16.msra.mxu0 %v1206
      %1322 = vmatmul.bf16.gmra.mxu0 %v1223
      %v1323 = vpop.f32.mrf.mxu0
      %v1324 = vadd.f32 %v1235, %v1323
      %v1325 = vpop.f32.mrf.mxu0
      %v1326 = vadd.f32 %v1237, %v1325
      %1327 = vmatmul.bf16.gmra.mxu0 %v925
      %v1328 = vpop.f32.mrf.mxu0
      %v1329 = vadd.f32 %v1240, %v1328
      %v1330 = vpop.f32.mrf.mxu0
      %v1331 = vadd.f32 %v1242, %v1330
      %1332 = vmatmul.bf16.gmra.mxu0 %v928
      %v1333 = vpop.f32.mrf.mxu0
      %v1334 = vadd.f32 %v1245, %v1333
      %v1335 = vpop.f32.mrf.mxu0
      %v1336 = vadd.f32 %v1247, %v1335
      %1337 = vmatmul.bf16.gmra.mxu0 %v931
      %v1338 = vpop.f32.mrf.mxu0
      %v1339 = vadd.f32 %v1250, %v1338
      %v1340 = vpop.f32.mrf.mxu0
      %v1341 = vadd.f32 %v1252, %v1340
      %1342 = vmatmul.bf16.gmra.mxu0 %v934
      %v1343 = vpop.f32.mrf.mxu0
      %v1344 = vadd.f32 %v1255, %v1343
      %v1345 = vpop.f32.mrf.mxu0
      %v1346 = vadd.f32 %v1257, %v1345
      %1347 = vmatmul.bf16.gmra.mxu0 %v937
      %v1348 = vpop.f32.mrf.mxu0
      %v1349 = vadd.f32 %v1260, %v1348
      %v1350 = vpop.f32.mrf.mxu0
      %v1351 = vadd.f32 %v1262, %v1350
      %1352 = vmatmul.bf16.gmra.mxu0 %v940
      %v1353 = vpop.f32.mrf.mxu0
      %v1354 = vadd.f32 %v1265, %v1353
      %v1355 = vpop.f32.mrf.mxu0
      %v1356 = vadd.f32 %v1267, %v1355
      %1357 = vmatmul.bf16.gmra.mxu0 %v943
      %v1358 = vpop.f32.mrf.mxu0
      %v1359 = vadd.f32 %v1270, %v1358
      %v1360 = vpop.f32.mrf.mxu0
      %v1361 = vadd.f32 %v1272, %v1360
      %1362 = vmatmul.bf16.gmra.mxu0 %v946
      %v1363 = vpop.f32.mrf.mxu0
      %v1364 = vadd.f32 %v1275, %v1363
      %v1365 = vpop.f32.mrf.mxu0
      %v1366 = vadd.f32 %v1277, %v1365
      %1367 = vmatmul.bf16.gmra.mxu0 %v949
      %v1368 = vpop.f32.mrf.mxu0
      %v1369 = vadd.f32 %v1280, %v1368
      %v1370 = vpop.f32.mrf.mxu0
      %v1371 = vadd.f32 %v1282, %v1370
      %1372 = vmatmul.bf16.gmra.mxu0 %v952
      %v1373 = vpop.f32.mrf.mxu0
      %v1374 = vadd.f32 %v1285, %v1373
      %v1375 = vpop.f32.mrf.mxu0
      %v1376 = vadd.f32 %v1287, %v1375
      %1377 = vmatmul.bf16.gmra.mxu0 %v955
      %v1378 = vpop.f32.mrf.mxu0
      %v1379 = vadd.f32 %v1290, %v1378
      %v1380 = vpop.f32.mrf.mxu0
      %v1381 = vadd.f32 %v1292, %v1380
      %1382 = vmatmul.bf16.gmra.mxu0 %v958
      %v1383 = vpop.f32.mrf.mxu0
      %v1384 = vadd.f32 %v1295, %v1383
      %v1385 = vpop.f32.mrf.mxu0
      %v1386 = vadd.f32 %v1297, %v1385
      %1387 = vmatmul.bf16.gmra.mxu0 %v961
      %v1388 = vpop.f32.mrf.mxu0
      %v1389 = vadd.f32 %v1300, %v1388
      %v1390 = vpop.f32.mrf.mxu0
      %v1391 = vadd.f32 %v1302, %v1390
      %1392 = vmatmul.bf16.gmra.mxu0 %v964
      %v1393 = vpop.f32.mrf.mxu0
      %v1394 = vadd.f32 %v1305, %v1393
      %v1395 = vpop.f32.mrf.mxu0
      %v1396 = vadd.f32 %v1307, %v1395
      %1397 = vmatmul.bf16.gmra.mxu0 %v967
      %v1398 = vpop.f32.mrf.mxu0
      %v1399 = vadd.f32 %v1310, %v1398
      %v1400 = vpop.f32.mrf.mxu0
      %v1401 = vadd.f32 %v1312, %v1400
      %1402 = vdwg.mxu0
      %v1405 = vunpack.c.l.b16 %v321
      %v1406 = vunpack.c.l.b16 %v322
      %v1407 = vpack.c.b16 %v1406, %v1405
      %v1409 = vunpack.c.l.b16 %v323
      %v1410 = vpack.c.b16 %v1409, %v1409
      %v1412 = vshrl.u32 %v1407, 16
      %v1414 = vshll.u32 %v1407, 16
      %v1416 = vrot.slane %v1414, 1
      %v1417 = vor.u32 %v1412, %v1416
      %v1419 = vshll.u32 %v1410, 16
      %v1421 = vrot.slane %v1419, 1
      %v1422 = vsel %vm452, %v1417, %v1421
      %1423 = vrot.lane.b32.xlu0 %v1422, 64
      %v1424 = vpop.permute.xlu0 %1423
      %v1425 = vrot.slane %v1407, 1
      %v1426 = vrot.slane %v1410, 1
      %v1427 = vsel %vm677, %v1425, %v1426
      %v1429 = vsel %vm726, %v1407, %v1424
      %s1431 = scalar_lea.vmem %s1, 192
      %v1432 = vld [vmem:[%s1431] sm:$0xf]
      %v1433 = vld [vmem:[%s1431 + $0x4] sm:$0xf]
      %v1434 = vld [vmem:[%s1431 + $0x8] sm:$0xf]
      %v1435 = vld [vmem:[%s1431 + $0xc] sm:$0xf]
      %v1436 = vld [vmem:[%s1431 + $0x10] sm:$0xf]
      %v1437 = vld [vmem:[%s1431 + $0x14] sm:$0xf]
      %v1438 = vld [vmem:[%s1431 + $0x18] sm:$0xf]
      %v1439 = vld [vmem:[%s1431 + $0x1c] sm:$0xf]
      %v1440 = vld [vmem:[%s1431 + $0x20] sm:$0xf]
      %v1441 = vld [vmem:[%s1431 + $0x24] sm:$0xf]
      %v1442 = vld [vmem:[%s1431 + $0x28] sm:$0xf]
      %v1443 = vld [vmem:[%s1431 + $0x2c] sm:$0xf]
      %v1444 = vld [vmem:[%s1431 + $0x30] sm:$0xf]
      %v1445 = vld [vmem:[%s1431 + $0x34] sm:$0xf]
      %v1446 = vld [vmem:[%s1431 + $0x38] sm:$0xf]
      %v1447 = vld [vmem:[%s1431 + $0x3c] sm:$0xf]
      %v1448 = vld [vmem:[%s1431 + $0x40] sm:$0xf]
      %v1449 = vld [vmem:[%s1431 + $0x44] sm:$0xf]
      %v1450 = vld [vmem:[%s1431 + $0x48] sm:$0xf]
      %v1451 = vld [vmem:[%s1431 + $0x4c] sm:$0xf]
      %v1452 = vld [vmem:[%s1431 + $0x50] sm:$0xf]
      %v1453 = vld [vmem:[%s1431 + $0x54] sm:$0xf]
      %v1454 = vld [vmem:[%s1431 + $0x58] sm:$0xf]
      %v1455 = vld [vmem:[%s1431 + $0x5c] sm:$0xf]
      %v1480 = vunpack.c.l.b16 %v1432
      %v1481 = vunpack.c.l.b16 %v1433
      %v1482 = vunpack.c.l.b16 %v1434
      %v1483 = vunpack.c.l.b16 %v1435
      %v1484 = vunpack.c.l.b16 %v1436
      %v1485 = vunpack.c.l.b16 %v1437
      %v1486 = vunpack.c.l.b16 %v1438
      %v1487 = vunpack.c.l.b16 %v1439
      %v1488 = vunpack.c.l.b16 %v1440
      %v1489 = vunpack.c.l.b16 %v1441
      %v1490 = vunpack.c.l.b16 %v1442
      %v1491 = vunpack.c.l.b16 %v1443
      %v1492 = vunpack.c.l.b16 %v1444
      %v1493 = vunpack.c.l.b16 %v1445
      %v1494 = vunpack.c.l.b16 %v1446
      %v1495 = vunpack.c.l.b16 %v1447
      %v1496 = vunpack.c.l.b16 %v1448
      %v1497 = vunpack.c.l.b16 %v1449
      %v1498 = vunpack.c.l.b16 %v1450
      %v1499 = vunpack.c.l.b16 %v1451
      %v1500 = vunpack.c.l.b16 %v1452
      %v1501 = vunpack.c.l.b16 %v1453
      %v1502 = vunpack.c.l.b16 %v1454
      %v1503 = vunpack.c.l.b16 %v1455
      %v1504 = vpack.c.b16 %v1481, %v1480
      %v1505 = vpack.c.b16 %v1483, %v1482
      %v1506 = vpack.c.b16 %v1485, %v1484
      %v1507 = vpack.c.b16 %v1487, %v1486
      %v1508 = vpack.c.b16 %v1489, %v1488
      %v1509 = vpack.c.b16 %v1491, %v1490
      %v1510 = vpack.c.b16 %v1493, %v1492
      %v1511 = vpack.c.b16 %v1495, %v1494
      %v1512 = vpack.c.b16 %v1497, %v1496
      %v1513 = vpack.c.b16 %v1499, %v1498
      %v1514 = vpack.c.b16 %v1501, %v1500
      %v1515 = vpack.c.b16 %v1503, %v1502
      %v1529 = vsel %vm726, %v1427, 0
      %1531 = vmatpush.bf16.msra.mxu0 %v1511
      %1532 = vmatpush.bf16.msra.mxu0 %v1510
      %1533 = vmatpush.bf16.msra.mxu0 %v1509
      %1534 = vmatpush.bf16.msra.mxu0 %v1508
      %1535 = vmatpush.bf16.msra.mxu0 %v1507
      %1536 = vmatpush.bf16.msra.mxu0 %v1506
      %1537 = vmatpush.bf16.msra.mxu0 %v1505
      %1538 = vmatpush.bf16.msra.mxu0 %v1504
      %1539 = vmatmul.bf16.gmra.mxu0 %v734
      %v1540 = vpop.f32.mrf.mxu0
      %v1541 = vadd.f32 0.0, %v1540
      %v1542 = vpop.f32.mrf.mxu0
      %v1543 = vadd.f32 0.0, %v1542
      %1544 = vmatmul.bf16.gmra.mxu0 %v737
      %v1545 = vpop.f32.mrf.mxu0
      %v1546 = vadd.f32 0.0, %v1545
      %v1547 = vpop.f32.mrf.mxu0
      %v1548 = vadd.f32 0.0, %v1547
      %1549 = vmatmul.bf16.gmra.mxu0 %v740
      %v1550 = vpop.f32.mrf.mxu0
      %v1551 = vadd.f32 0.0, %v1550
      %v1552 = vpop.f32.mrf.mxu0
      %v1553 = vadd.f32 0.0, %v1552
      %1554 = vmatmul.bf16.gmra.mxu0 %v743
      %v1555 = vpop.f32.mrf.mxu0
      %v1556 = vadd.f32 0.0, %v1555
      %v1557 = vpop.f32.mrf.mxu0
      %v1558 = vadd.f32 0.0, %v1557
      %1559 = vmatmul.bf16.gmra.mxu0 %v746
      %v1560 = vpop.f32.mrf.mxu0
      %v1561 = vadd.f32 0.0, %v1560
      %v1562 = vpop.f32.mrf.mxu0
      %v1563 = vadd.f32 0.0, %v1562
      %1564 = vmatmul.bf16.gmra.mxu0 %v749
      %v1565 = vpop.f32.mrf.mxu0
      %v1566 = vadd.f32 0.0, %v1565
      %v1567 = vpop.f32.mrf.mxu0
      %v1568 = vadd.f32 0.0, %v1567
      %1569 = vmatmul.bf16.gmra.mxu0 %v752
      %v1570 = vpop.f32.mrf.mxu0
      %v1571 = vadd.f32 0.0, %v1570
      %v1572 = vpop.f32.mrf.mxu0
      %v1573 = vadd.f32 0.0, %v1572
      %1574 = vmatmul.bf16.gmra.mxu0 %v755
      %v1575 = vpop.f32.mrf.mxu0
      %v1576 = vadd.f32 0.0, %v1575
      %v1577 = vpop.f32.mrf.mxu0
      %v1578 = vadd.f32 0.0, %v1577
      %1579 = vmatmul.bf16.gmra.mxu0 %v758
      %v1580 = vpop.f32.mrf.mxu0
      %v1581 = vadd.f32 0.0, %v1580
      %v1582 = vpop.f32.mrf.mxu0
      %v1583 = vadd.f32 0.0, %v1582
      %1584 = vmatmul.bf16.gmra.mxu0 %v761
      %v1585 = vpop.f32.mrf.mxu0
      %v1586 = vadd.f32 0.0, %v1585
      %v1587 = vpop.f32.mrf.mxu0
      %v1588 = vadd.f32 0.0, %v1587
      %1589 = vmatmul.bf16.gmra.mxu0 %v764
      %v1590 = vpop.f32.mrf.mxu0
      %v1591 = vadd.f32 0.0, %v1590
      %v1592 = vpop.f32.mrf.mxu0
      %v1593 = vadd.f32 0.0, %v1592
      %1594 = vmatmul.bf16.gmra.mxu0 %v767
      %v1595 = vpop.f32.mrf.mxu0
      %v1596 = vadd.f32 0.0, %v1595
      %v1597 = vpop.f32.mrf.mxu0
      %v1598 = vadd.f32 0.0, %v1597
      %1599 = vmatmul.bf16.gmra.mxu0 %v770
      %v1600 = vpop.f32.mrf.mxu0
      %v1601 = vadd.f32 0.0, %v1600
      %v1602 = vpop.f32.mrf.mxu0
      %v1603 = vadd.f32 0.0, %v1602
      %1604 = vmatmul.bf16.gmra.mxu0 %v773
      %v1605 = vpop.f32.mrf.mxu0
      %v1606 = vadd.f32 0.0, %v1605
      %v1607 = vpop.f32.mrf.mxu0
      %v1608 = vadd.f32 0.0, %v1607
      %1609 = vmatmul.bf16.gmra.mxu0 %v825
      %v1610 = vpop.f32.mrf.mxu0
      %v1611 = vadd.f32 0.0, %v1610
      %v1612 = vpop.f32.mrf.mxu0
      %v1613 = vadd.f32 0.0, %v1612
      %1614 = vmatmul.bf16.gmra.mxu0 %v1429
      %v1615 = vpop.f32.mrf.mxu0
      %v1616 = vadd.f32 0.0, %v1615
      %v1617 = vpop.f32.mrf.mxu0
      %v1618 = vadd.f32 0.0, %v1617
      %1619 = vdwg.mxu0
      %1620 = vmatpush.bf16.msra.mxu0 0
      %1621 = vmatpush.bf16.msra.mxu0 0
      %1622 = vmatpush.bf16.msra.mxu0 0
      %1623 = vmatpush.bf16.msra.mxu0 0
      %1624 = vmatpush.bf16.msra.mxu0 %v1515
      %1625 = vmatpush.bf16.msra.mxu0 %v1514
      %1626 = vmatpush.bf16.msra.mxu0 %v1513
      %1627 = vmatpush.bf16.msra.mxu0 %v1512
      %1628 = vmatmul.bf16.gmra.mxu0 %v928
      %v1629 = vpop.f32.mrf.mxu0
      %v1630 = vadd.f32 %v1541, %v1629
      %v1631 = vpop.f32.mrf.mxu0
      %v1632 = vadd.f32 %v1543, %v1631
      %1633 = vmatmul.bf16.gmra.mxu0 %v931
      %v1634 = vpop.f32.mrf.mxu0
      %v1635 = vadd.f32 %v1546, %v1634
      %v1636 = vpop.f32.mrf.mxu0
      %v1637 = vadd.f32 %v1548, %v1636
      %1638 = vmatmul.bf16.gmra.mxu0 %v934
      %v1639 = vpop.f32.mrf.mxu0
      %v1640 = vadd.f32 %v1551, %v1639
      %v1641 = vpop.f32.mrf.mxu0
      %v1642 = vadd.f32 %v1553, %v1641
      %1643 = vmatmul.bf16.gmra.mxu0 %v937
      %v1644 = vpop.f32.mrf.mxu0
      %v1645 = vadd.f32 %v1556, %v1644
      %v1646 = vpop.f32.mrf.mxu0
      %v1647 = vadd.f32 %v1558, %v1646
      %1648 = vmatmul.bf16.gmra.mxu0 %v940
      %v1649 = vpop.f32.mrf.mxu0
      %v1650 = vadd.f32 %v1561, %v1649
      %v1651 = vpop.f32.mrf.mxu0
      %v1652 = vadd.f32 %v1563, %v1651
      %1653 = vmatmul.bf16.gmra.mxu0 %v943
      %v1654 = vpop.f32.mrf.mxu0
      %v1655 = vadd.f32 %v1566, %v1654
      %v1656 = vpop.f32.mrf.mxu0
      %v1657 = vadd.f32 %v1568, %v1656
      %1658 = vmatmul.bf16.gmra.mxu0 %v946
      %v1659 = vpop.f32.mrf.mxu0
      %v1660 = vadd.f32 %v1571, %v1659
      %v1661 = vpop.f32.mrf.mxu0
      %v1662 = vadd.f32 %v1573, %v1661
      %1663 = vmatmul.bf16.gmra.mxu0 %v949
      %v1664 = vpop.f32.mrf.mxu0
      %v1665 = vadd.f32 %v1576, %v1664
      %v1666 = vpop.f32.mrf.mxu0
      %v1667 = vadd.f32 %v1578, %v1666
      %1668 = vmatmul.bf16.gmra.mxu0 %v952
      %v1669 = vpop.f32.mrf.mxu0
      %v1670 = vadd.f32 %v1581, %v1669
      %v1671 = vpop.f32.mrf.mxu0
      %v1672 = vadd.f32 %v1583, %v1671
      %1673 = vmatmul.bf16.gmra.mxu0 %v955
      %v1674 = vpop.f32.mrf.mxu0
      %v1675 = vadd.f32 %v1586, %v1674
      %v1676 = vpop.f32.mrf.mxu0
      %v1677 = vadd.f32 %v1588, %v1676
      %1678 = vmatmul.bf16.gmra.mxu0 %v958
      %v1679 = vpop.f32.mrf.mxu0
      %v1680 = vadd.f32 %v1591, %v1679
      %v1681 = vpop.f32.mrf.mxu0
      %v1682 = vadd.f32 %v1593, %v1681
      %1683 = vmatmul.bf16.gmra.mxu0 %v961
      %v1684 = vpop.f32.mrf.mxu0
      %v1685 = vadd.f32 %v1596, %v1684
      %v1686 = vpop.f32.mrf.mxu0
      %v1687 = vadd.f32 %v1598, %v1686
      %1688 = vmatmul.bf16.gmra.mxu0 %v964
      %v1689 = vpop.f32.mrf.mxu0
      %v1690 = vadd.f32 %v1601, %v1689
      %v1691 = vpop.f32.mrf.mxu0
      %v1692 = vadd.f32 %v1603, %v1691
      %1693 = vmatmul.bf16.gmra.mxu0 %v967
      %v1694 = vpop.f32.mrf.mxu0
      %v1695 = vadd.f32 %v1606, %v1694
      %v1696 = vpop.f32.mrf.mxu0
      %v1697 = vadd.f32 %v1608, %v1696
      %1698 = vmatmul.bf16.gmra.mxu0 %v970
      %v1699 = vpop.f32.mrf.mxu0
      %v1700 = vadd.f32 %v1611, %v1699
      %v1701 = vpop.f32.mrf.mxu0
      %v1702 = vadd.f32 %v1613, %v1701
      %1703 = vmatmul.bf16.gmra.mxu0 %v1529
      %v1704 = vpop.f32.mrf.mxu0
      %v1705 = vadd.f32 %v1616, %v1704
      %v1706 = vpop.f32.mrf.mxu0
      %v1707 = vadd.f32 %v1618, %v1706
      %1708 = vdwg.mxu0
      %v1709 = vadd.f32 %v1324, %v1630
      %v1710 = vadd.f32 %v1326, %v1632
      %v1711 = vadd.f32 %v1329, %v1635
      %v1712 = vadd.f32 %v1331, %v1637
      %v1713 = vadd.f32 %v1334, %v1640
      %v1714 = vadd.f32 %v1336, %v1642
      %v1715 = vadd.f32 %v1339, %v1645
      %v1716 = vadd.f32 %v1341, %v1647
      %v1717 = vadd.f32 %v1344, %v1650
      %v1718 = vadd.f32 %v1346, %v1652
      %v1719 = vadd.f32 %v1349, %v1655
      %v1720 = vadd.f32 %v1351, %v1657
      %v1721 = vadd.f32 %v1354, %v1660
      %v1722 = vadd.f32 %v1356, %v1662
      %v1723 = vadd.f32 %v1359, %v1665
      %v1724 = vadd.f32 %v1361, %v1667
      %v1725 = vadd.f32 %v1364, %v1670
      %v1726 = vadd.f32 %v1366, %v1672
      %v1727 = vadd.f32 %v1369, %v1675
      %v1728 = vadd.f32 %v1371, %v1677
      %v1729 = vadd.f32 %v1374, %v1680
      %v1730 = vadd.f32 %v1376, %v1682
      %v1731 = vadd.f32 %v1379, %v1685
      %v1732 = vadd.f32 %v1381, %v1687
      %v1733 = vadd.f32 %v1384, %v1690
      %v1734 = vadd.f32 %v1386, %v1692
      %v1735 = vadd.f32 %v1389, %v1695
      %v1736 = vadd.f32 %v1391, %v1697
      %v1737 = vadd.f32 %v1394, %v1700
      %v1738 = vadd.f32 %v1396, %v1702
      %v1739 = vadd.f32 %v1399, %v1705
      %v1740 = vadd.f32 %v1401, %v1707
      %v1741 = vld [vmem:[%s2] sm:$0x1]
      %v1743 = vperm.slane %v1741, 0
      %v1745 = vadd.f32 %v1709, %v1743
      %v1746 = vadd.f32 %v1710, %v1743
      %v1747 = vadd.f32 %v1711, %v1743
      %v1748 = vadd.f32 %v1712, %v1743
      %v1749 = vadd.f32 %v1713, %v1743
      %v1750 = vadd.f32 %v1714, %v1743
      %v1751 = vadd.f32 %v1715, %v1743
      %v1752 = vadd.f32 %v1716, %v1743
      %v1753 = vadd.f32 %v1717, %v1743
      %v1754 = vadd.f32 %v1718, %v1743
      %v1755 = vadd.f32 %v1719, %v1743
      %v1756 = vadd.f32 %v1720, %v1743
      %v1757 = vadd.f32 %v1721, %v1743
      %v1758 = vadd.f32 %v1722, %v1743
      %v1759 = vadd.f32 %v1723, %v1743
      %v1760 = vadd.f32 %v1724, %v1743
      %v1761 = vadd.f32 %v1725, %v1743
      %v1762 = vadd.f32 %v1726, %v1743
      %v1763 = vadd.f32 %v1727, %v1743
      %v1764 = vadd.f32 %v1728, %v1743
      %v1765 = vadd.f32 %v1729, %v1743
      %v1766 = vadd.f32 %v1730, %v1743
      %v1767 = vadd.f32 %v1731, %v1743
      %v1768 = vadd.f32 %v1732, %v1743
      %v1769 = vadd.f32 %v1733, %v1743
      %v1770 = vadd.f32 %v1734, %v1743
      %v1771 = vadd.f32 %v1735, %v1743
      %v1772 = vadd.f32 %v1736, %v1743
      %v1773 = vadd.f32 %v1737, %v1743
      %v1774 = vadd.f32 %v1738, %v1743
      %v1775 = vadd.f32 %v1739, %v1743
      %v1776 = vadd.f32 %v1740, %v1743
      %v1777 = vmax.f32 %v1745, 0.0
      %v1778 = vmax.f32 %v1746, 0.0
      %v1779 = vmax.f32 %v1747, 0.0
      %v1780 = vmax.f32 %v1748, 0.0
      %v1781 = vmax.f32 %v1749, 0.0
      %v1782 = vmax.f32 %v1750, 0.0
      %v1783 = vmax.f32 %v1751, 0.0
      %v1784 = vmax.f32 %v1752, 0.0
      %v1785 = vmax.f32 %v1753, 0.0
      %v1786 = vmax.f32 %v1754, 0.0
      %v1787 = vmax.f32 %v1755, 0.0
      %v1788 = vmax.f32 %v1756, 0.0
      %v1789 = vmax.f32 %v1757, 0.0
      %v1790 = vmax.f32 %v1758, 0.0
      %v1791 = vmax.f32 %v1759, 0.0
      %v1792 = vmax.f32 %v1760, 0.0
      %v1793 = vmax.f32 %v1761, 0.0
      %v1794 = vmax.f32 %v1762, 0.0
      %v1795 = vmax.f32 %v1763, 0.0
      %v1796 = vmax.f32 %v1764, 0.0
      %v1797 = vmax.f32 %v1765, 0.0
      %v1798 = vmax.f32 %v1766, 0.0
      %v1799 = vmax.f32 %v1767, 0.0
      %v1800 = vmax.f32 %v1768, 0.0
      %v1801 = vmax.f32 %v1769, 0.0
      %v1802 = vmax.f32 %v1770, 0.0
      %v1803 = vmax.f32 %v1771, 0.0
      %v1804 = vmax.f32 %v1772, 0.0
      %v1805 = vmax.f32 %v1773, 0.0
      %v1806 = vmax.f32 %v1774, 0.0
      %v1807 = vmax.f32 %v1775, 0.0
      %v1808 = vmax.f32 %v1776, 0.0
      %v1809 = vld [vmem:[%s256] sm:$0xff]
      %v1810 = vld [vmem:[%s256 + $0x8] sm:$0xff]
      %v1811 = vld [vmem:[%s256 + $0x10] sm:$0xff]
      %v1812 = vld [vmem:[%s256 + $0x18] sm:$0xff]
      %v1813 = vld [vmem:[%s256 + $0x20] sm:$0xff]
      %v1814 = vld [vmem:[%s256 + $0x28] sm:$0xff]
      %v1815 = vld [vmem:[%s256 + $0x30] sm:$0xff]
      %v1816 = vld [vmem:[%s256 + $0x38] sm:$0xff]
      %v1817 = vld [vmem:[%s256 + $0x40] sm:$0xff]
      %v1818 = vld [vmem:[%s256 + $0x48] sm:$0xff]
      %v1819 = vld [vmem:[%s256 + $0x50] sm:$0xff]
      %v1820 = vld [vmem:[%s256 + $0x58] sm:$0xff]
      %v1821 = vld [vmem:[%s256 + $0x60] sm:$0xff]
      %v1822 = vld [vmem:[%s256 + $0x68] sm:$0xff]
      %v1823 = vld [vmem:[%s256 + $0x70] sm:$0xff]
      %v1824 = vld [vmem:[%s256 + $0x78] sm:$0xff]
      %v1825 = vld [vmem:[%s256 + $0x80] sm:$0xff]
      %v1826 = vld [vmem:[%s256 + $0x88] sm:$0xff]
      %v1827 = vld [vmem:[%s256 + $0x90] sm:$0xff]
      %v1828 = vld [vmem:[%s256 + $0x98] sm:$0xff]
      %v1829 = vld [vmem:[%s256 + $0xa0] sm:$0xff]
      %v1830 = vld [vmem:[%s256 + $0xa8] sm:$0xff]
      %v1831 = vld [vmem:[%s256 + $0xb0] sm:$0xff]
      %v1832 = vld [vmem:[%s256 + $0xb8] sm:$0xff]
      %v1833 = vld [vmem:[%s256 + $0xc0] sm:$0xff]
      %v1834 = vld [vmem:[%s256 + $0xc8] sm:$0xff]
      %v1835 = vld [vmem:[%s256 + $0xd0] sm:$0xff]
      %v1836 = vld [vmem:[%s256 + $0xd8] sm:$0xff]
      %v1837 = vld [vmem:[%s256 + $0xe0] sm:$0xff]
      %v1838 = vld [vmem:[%s256 + $0xe8] sm:$0xff]
      %v1839 = vld [vmem:[%s256 + $0xf0] sm:$0xff]
      %v1840 = vld [vmem:[%s256 + $0xf8] sm:$0xff]
      %v1841 = vadd.f32 %v1777, %v1809
      %v1842 = vadd.f32 %v1778, %v1810
      %v1843 = vadd.f32 %v1779, %v1811
      %v1844 = vadd.f32 %v1780, %v1812
      %v1845 = vadd.f32 %v1781, %v1813
      %v1846 = vadd.f32 %v1782, %v1814
      %v1847 = vadd.f32 %v1783, %v1815
      %v1848 = vadd.f32 %v1784, %v1816
      %v1849 = vadd.f32 %v1785, %v1817
      %v1850 = vadd.f32 %v1786, %v1818
      %v1851 = vadd.f32 %v1787, %v1819
      %v1852 = vadd.f32 %v1788, %v1820
      %v1853 = vadd.f32 %v1789, %v1821
      %v1854 = vadd.f32 %v1790, %v1822
      %v1855 = vadd.f32 %v1791, %v1823
      %v1856 = vadd.f32 %v1792, %v1824
      %v1857 = vadd.f32 %v1793, %v1825
      %v1858 = vadd.f32 %v1794, %v1826
      %v1859 = vadd.f32 %v1795, %v1827
      %v1860 = vadd.f32 %v1796, %v1828
      %v1861 = vadd.f32 %v1797, %v1829
      %v1862 = vadd.f32 %v1798, %v1830
      %v1863 = vadd.f32 %v1799, %v1831
      %v1864 = vadd.f32 %v1800, %v1832
      %v1865 = vadd.f32 %v1801, %v1833
      %v1866 = vadd.f32 %v1802, %v1834
      %v1867 = vadd.f32 %v1803, %v1835
      %v1868 = vadd.f32 %v1804, %v1836
      %v1869 = vadd.f32 %v1805, %v1837
      %v1870 = vadd.f32 %v1806, %v1838
      %v1871 = vadd.f32 %v1807, %v1839
      %v1872 = vadd.f32 %v1808, %v1840
      %1873 = vst.msk [vmem:[%s267] sm:$0xff] %vm726, %v1841
      %1874 = vst.msk [vmem:[%s267 + $0x8] sm:$0xff] %vm726, %v1842
      %1875 = vst.msk [vmem:[%s267 + $0x10] sm:$0xff] %vm726, %v1843
      %1876 = vst.msk [vmem:[%s267 + $0x18] sm:$0xff] %vm726, %v1844
      %1877 = vst.msk [vmem:[%s267 + $0x20] sm:$0xff] %vm726, %v1845
      %1878 = vst.msk [vmem:[%s267 + $0x28] sm:$0xff] %vm726, %v1846
      %1879 = vst.msk [vmem:[%s267 + $0x30] sm:$0xff] %vm726, %v1847
      %1880 = vst.msk [vmem:[%s267 + $0x38] sm:$0xff] %vm726, %v1848
      %1881 = vst.msk [vmem:[%s267 + $0x40] sm:$0xff] %vm726, %v1849
      %1882 = vst.msk [vmem:[%s267 + $0x48] sm:$0xff] %vm726, %v1850
      %1883 = vst.msk [vmem:[%s267 + $0x50] sm:$0xff] %vm726, %v1851
      %1884 = vst.msk [vmem:[%s267 + $0x58] sm:$0xff] %vm726, %v1852
      %1885 = vst.msk [vmem:[%s267 + $0x60] sm:$0xff] %vm726, %v1853
      %1886 = vst.msk [vmem:[%s267 + $0x68] sm:$0xff] %vm726, %v1854
      %1887 = vst.msk [vmem:[%s267 + $0x70] sm:$0xff] %vm726, %v1855
      %1888 = vst.msk [vmem:[%s267 + $0x78] sm:$0xff] %vm726, %v1856
      %1889 = vst.msk [vmem:[%s267 + $0x80] sm:$0xff] %vm726, %v1857
      %1890 = vst.msk [vmem:[%s267 + $0x88] sm:$0xff] %vm726, %v1858
      %1891 = vst.msk [vmem:[%s267 + $0x90] sm:$0xff] %vm726, %v1859
      %1892 = vst.msk [vmem:[%s267 + $0x98] sm:$0xff] %vm726, %v1860
      %1893 = vst.msk [vmem:[%s267 + $0xa0] sm:$0xff] %vm726, %v1861
      %1894 = vst.msk [vmem:[%s267 + $0xa8] sm:$0xff] %vm726, %v1862
      %1895 = vst.msk [vmem:[%s267 + $0xb0] sm:$0xff] %vm726, %v1863
      %1896 = vst.msk [vmem:[%s267 + $0xb8] sm:$0xff] %vm726, %v1864
      %1897 = vst.msk [vmem:[%s267 + $0xc0] sm:$0xff] %vm726, %v1865
      %1898 = vst.msk [vmem:[%s267 + $0xc8] sm:$0xff] %vm726, %v1866
      %1899 = vst.msk [vmem:[%s267 + $0xd0] sm:$0xff] %vm726, %v1867
      %1900 = vst.msk [vmem:[%s267 + $0xd8] sm:$0xff] %vm726, %v1868
      %1901 = vst.msk [vmem:[%s267 + $0xe0] sm:$0xff] %vm726, %v1869
      %1902 = vst.msk [vmem:[%s267 + $0xe8] sm:$0xff] %vm726, %v1870
      %1903 = vst.msk [vmem:[%s267 + $0xf0] sm:$0xff] %vm726, %v1871
      %1904 = vst.msk [vmem:[%s267 + $0xf8] sm:$0xff] %vm726, %v1872
      %s1905 = smul.u32 16, %s20
      %p1906 = scmp.lt.s32.totalorder %s19, 1
      %s1907 = scalar_select %p1906, %s19, 1
      %p1908 = scmp.lt.s32.totalorder %s1905, 15
      %s1909 = scalar_select %p1908, %s1905, 15
      %s1910 = smul.addr %s1909, 2
      %s1911 = smul.addr %s1907, 32
      %s1912 = sadd.s32 %s1910, %s1911
      %s1913 = smul.addr %s1912, 8
      %s1914 = scalar_lea.vmem %s4, %s1913
      // Predicated region
      $region37: #{enhancer_forward.6} parent=35 // pred_check
        %p1915 = pneg %p145
      $region38: #{enhancer_forward.6} parent=35 // pred_check_branch
        %1917 = sbr.rel (%p1915) target = $region40
      $region39: #{enhancer_forward.6} parent=35 // pred_region
        %s1918 = smul.u32 16, %s20
      $region40: #{enhancer_forward.6} parent=35 // pred_fallthru
        _
    $region36: #{enhancer_forward.6} parent=5 // pred_fallthru
      _
    %p1919 = scmp.le.s32.totalorder 2, %s10
    // Predicated region
    $region41: #{enhancer_forward.6} parent=5 // pred_check
      %p1920 = pneg %p1919
    $region42: #{enhancer_forward.6} parent=5 // pred_check_branch
      %1922 = sbr.rel (%p1920) target = $region44
    $region43: #{enhancer_forward.6} parent=5 // pred_region
      %s1923 = ssub.s32 %s10, 2
      // Predicated region
      $region45: #{enhancer_forward.6} parent=43 // pred_check
        %p1924 = pneg %p151
      $region46: #{enhancer_forward.6} parent=43 // pred_check_branch
        %1926 = sbr.rel (%p1924) target = $region48
      $region47: #{enhancer_forward.6} parent=43 // pred_region
        %s1927 = smul.u32 16, %s22
        %p1928 = scmp.lt.s32.totalorder %s21, 1
        %s1929 = scalar_select %p1928, %s21, 1
        %p1930 = scmp.lt.s32.totalorder %s1927, 15
        %s1931 = scalar_select %p1930, %s1927, 15
        %s1932 = smul.addr %s1931, 2
        %s1933 = smul.addr %s1929, 32
        %s1934 = sadd.s32 %s1932, %s1933
        %s1935 = smul.addr %s1934, 8
        %s1936 = scalar_lea.vmem %s4, %s1935
      $region48: #{enhancer_forward.6} parent=43 // pred_fallthru
        _
    $region44: #{enhancer_forward.6} parent=5 // pred_fallthru
      _
  $region6: #{enhancer_forward.6} parent=0 // loop_footer
    %s14 = sadd.s32 1, %s10
  $region7: #{enhancer_forward.6} parent=0 // loop_footer_branch
    %9 = sbr.rel target = $region3
  $region8: #{enhancer_forward.6} parent=0 // loop_exit
    _

// kernel: enhancer_forward.9
$region0: #{enhancer_forward.9}
  #allocation0 [shape = 'u32[]', space=smem, size = 0x4, offset = 0x4, fixed_abs, tag = 'smem constant byte address 0x4 - core index']
  #allocation1 [shape = 'u32[72,128]{1,0:T(1,128)}', space=vmem, size = 0x9000, scoped, tag = 'internal scratch']
  %s0 = inlined_call_operand.vmem [shape: bf16[2,18,18,64], index: 0, kind: input, shape index: {}]
  %s1 = inlined_call_operand.vmem [shape: bf16[3,192,3], index: 1, kind: input, shape index: {}]
  %s2 = inlined_call_operand.vmem [shape: f32[1,3], index: 2, kind: input, shape index: {}]
  %s3 = inlined_call_operand.vmem [shape: f32[2,16,16,3], index: 3, kind: output, shape index: {}]
  %s4 = sld [smem:[#allocation0]]
  $region45: #{enhancer_forward.9} parent=0
    _
  %s6 = ssub.s32 1, %s4
  %s7 = scalar_select 0, %s6, %s4
  loop: start=0, step=1, limit=4
  $region2: #{enhancer_forward.9} parent=0 // loop_pre_header
    _
  $region3: #{enhancer_forward.9} parent=0 // loop_header
    %s9 = sphi 0, %s13
    %p10 = scmp.ge.s32.totalorder %s9, 4
    %s16 = sphi 0, %s28
    %s17 = sphi 0, %s24
    %s18 = sphi 0, %s16
    %s19 = sphi 0, %s17
    %s20 = sphi 0, %s18
    %s21 = sphi 0, %s19
    %s33 = sphi 0, %s35
    %s36 = sphi 0, %s33
    %s37 = sphi 0, %s36
    %s53 = sphi 0, %s37
    %s57 = sphi 0, %s57
    %s59 = sphi 0, %s57
    %s60 = sphi 0, %s59
    %s74 = sphi 0, %s60
    %s78 = sphi 0, %s78
    %s80 = sphi 0, %s78
    %s81 = sphi 0, %s80
    %s95 = sphi 0, %s81
    %s103 = sphi 0, %s105
    %s106 = sphi 0, %s103
    %s107 = sphi 0, %s106
    %s123 = sphi 0, %s107
  $region4: #{enhancer_forward.9} parent=0 // loop_header_branch
    %12 = sbr.rel (%p10) target = $region8
  $region5: #{enhancer_forward.9} parent=0 // loop_body
    %s14 = ssub.s32 %s9, 1
    %s15 = ssub.s32 %s9, 2
    %s22 = sadd.s32 1, %s17
    %p23 = scmp.ge.s32.totalorder %s22, 1
    %s24 = scalar_select %p23, 0, %s22
    %s25 = sadd.s32 1, %s16
    %s26 = scalar_select %p23, %s25, %s16
    %p27 = scmp.ge.s32.totalorder %s26, 2
    %s28 = scalar_select %p27, 0, %s26
    %s29 = sadd.s32 %s16, %s17
    %s30 = sadd.s32 %s28, %s24
    %s31 = ssub.s32 %s29, %s30
    %p32 = scmp.eq.s32.totalorder %s31, 0
    %s34 = sadd.s32 %s33, 1
    %s35 = scalar_select %p32, %s33, %s34
    %p38 = pneg %p32
    %p39 = scmp.eq.s32.totalorder %s9, 1
    %p40 = por %p38, %p39
    %p41 = scmp.ne.s32.totalorder %s33, %s36
    %p42 = scmp.eq.s32.totalorder %s9, 0
    %p43 = por %p41, %p42
    %p44 = scmp.ne.s32.totalorder %s33, %s36
    %p45 = scmp.eq.s32.totalorder %s14, 1
    %p46 = por %p44, %p45
    %p47 = scmp.ne.s32.totalorder %s36, %s37
    %p48 = scmp.eq.s32.totalorder %s14, 0
    %p49 = por %p47, %p48
    %p50 = scmp.ne.s32.totalorder %s36, %s37
    %p51 = scmp.eq.s32.totalorder %s15, 1
    %p52 = por %p50, %p51
    %p54 = scmp.ne.s32.totalorder %s37, %s53
    %p55 = scmp.eq.s32.totalorder %s15, 0
    %p56 = por %p54, %p55
    %s58 = sadd.s32 %s57, 1
    %p61 = scmp.eq.s32.totalorder %s9, 1
    %p62 = scmp.ne.s32.totalorder %s57, %s59
    %p63 = scmp.eq.s32.totalorder %s9, 0
    %p64 = por %p62, %p63
    %p65 = scmp.ne.s32.totalorder %s57, %s59
    %p66 = scmp.eq.s32.totalorder %s14, 1
    %p67 = por %p65, %p66
    %p68 = scmp.ne.s32.totalorder %s59, %s60
    %p69 = scmp.eq.s32.totalorder %s14, 0
    %p70 = por %p68, %p69
    %p71 = scmp.ne.s32.totalorder %s59, %s60
    %p72 = scmp.eq.s32.totalorder %s15, 1
    %p73 = por %p71, %p72
    %p75 = scmp.ne.s32.totalorder %s60, %s74
    %p76 = scmp.eq.s32.totalorder %s15, 0
    %p77 = por %p75, %p76
    %s79 = sadd.s32 %s78, 1
    %p82 = scmp.eq.s32.totalorder %s9, 1
    %p83 = scmp.ne.s32.totalorder %s78, %s80
    %p84 = scmp.eq.s32.totalorder %s9, 0
    %p85 = por %p83, %p84
    %p86 = scmp.ne.s32.totalorder %s78, %s80
    %p87 = scmp.eq.s32.totalorder %s14, 1
    %p88 = por %p86, %p87
    %p89 = scmp.ne.s32.totalorder %s80, %s81
    %p90 = scmp.eq.s32.totalorder %s14, 0
    %p91 = por %p89, %p90
    %p92 = scmp.ne.s32.totalorder %s80, %s81
    %p93 = scmp.eq.s32.totalorder %s15, 1
    %p94 = por %p92, %p93
    %p96 = scmp.ne.s32.totalorder %s81, %s95
    %p97 = scmp.eq.s32.totalorder %s15, 0
    %p98 = por %p96, %p97
    %s99 = ssub.s32 %s16, %s28
    %s100 = ssub.s32 %s17, %s24
    %s101 = sor.u32 %s99, %s100
    %p102 = scmp.eq.s32.totalorder %s101, 0
    %s104 = sadd.s32 %s103, 1
    %s105 = scalar_select %p102, %s103, %s104
    %p108 = pneg %p102
    %p109 = scmp.eq.s32.totalorder %s9, 1
    %p110 = por %p108, %p109
    %p111 = scmp.ne.s32.totalorder %s103, %s106
    %p112 = scmp.eq.s32.totalorder %s9, 0
    %p113 = por %p111, %p112
    %p114 = scmp.ne.s32.totalorder %s103, %s106
    %p115 = scmp.eq.s32.totalorder %s14, 1
    %p116 = por %p114, %p115
    %p117 = scmp.ne.s32.totalorder %s106, %s107
    %p118 = scmp.eq.s32.totalorder %s14, 0
    %p119 = por %p117, %p118
    %p120 = scmp.ne.s32.totalorder %s106, %s107
    %p121 = scmp.eq.s32.totalorder %s15, 1
    %p122 = por %p120, %p121
    %p124 = scmp.ne.s32.totalorder %s107, %s123
    %p125 = scmp.eq.s32.totalorder %s15, 0
    %p126 = por %p124, %p125
    %p127 = scmp.le.s32.totalorder 1, %s9
    %p128 = scmp.lt.s32.totalorder %s9, 3
    %p129 = pnand %p127, %p128
    %p130 = pneg %p129
    // Predicated region
    $region9: #{enhancer_forward.9} parent=5 // pred_check
      _
    $region10: #{enhancer_forward.9} parent=5 // pred_check_branch
      %132 = sbr.rel (%p129) target = $region12
    $region11: #{enhancer_forward.9} parent=5 // pred_region
      %s133 = ssub.s32 %s9, 1
      // Predicated region
      $region13: #{enhancer_forward.9} parent=11 // pred_check
        %p134 = pneg %p70
      $region14: #{enhancer_forward.9} parent=11 // pred_check_branch
        %136 = sbr.rel (%p134) target = $region16
      $region15: #{enhancer_forward.9} parent=11 // pred_region
        _
      $region16: #{enhancer_forward.9} parent=11 // pred_fallthru
        _
      // Predicated region
      $region17: #{enhancer_forward.9} parent=11 // pred_check
        %p137 = pneg %p91
      $region18: #{enhancer_forward.9} parent=11 // pred_check_branch
        %139 = sbr.rel (%p137) target = $region20
      $region19: #{enhancer_forward.9} parent=11 // pred_region
        _
      $region20: #{enhancer_forward.9} parent=11 // pred_fallthru
        _
    $region12: #{enhancer_forward.9} parent=5 // pred_fallthru
      _
    %p140 = scmp.lt.s32.totalorder %s9, 2
    // Predicated region
    $region21: #{enhancer_forward.9} parent=5 // pred_check
      %p141 = pneg %p140
    $region22: #{enhancer_forward.9} parent=5 // pred_check_branch
      %143 = sbr.rel (%p141) target = $region24
    $region23: #{enhancer_forward.9} parent=5 // pred_region
      // Predicated region
      $region25: #{enhancer_forward.9} parent=23 // pred_check
        %p144 = pneg %p43
      $region26: #{enhancer_forward.9} parent=23 // pred_check_branch
        %146 = sbr.rel (%p144) target = $region28
      $region27: #{enhancer_forward.9} parent=23 // pred_region
        %s147 = sadd.s32 %s16, %s17
        %p148 = scmp.lt.s32.totalorder %s147, 1
        %s149 = scalar_select %p148, %s147, 1
        %s150 = smul.addr %s149, 54
        %s151 = smul.addr %s150, 4
        %s152 = scalar_lea.vmem %s0, %s151
        %s153 = sadd.s32 %s16, %s17
      $region28: #{enhancer_forward.9} parent=23 // pred_fallthru
        _
    $region24: #{enhancer_forward.9} parent=5 // pred_fallthru
      _
    %p154 = scmp.le.s32.totalorder 1, %s9
    %p155 = scmp.lt.s32.totalorder %s9, 3
    %p156 = pnand %p154, %p155
    %p157 = pneg %p156
    // Predicated region
    $region29: #{enhancer_forward.9} parent=5 // pred_check
      _
    $region30: #{enhancer_forward.9} parent=5 // pred_check_branch
      %159 = sbr.rel (%p156) target = $region32
    $region31: #{enhancer_forward.9} parent=5 // pred_region
      %s160 = ssub.s32 %s9, 1
      %s161 = sadd.s32 %s18, %s19
      %p162 = scmp.lt.s32.totalorder %s161, 1
      %s163 = scalar_select %p162, %s161, 1
      %s164 = smul.addr %s163, 54
      %s165 = smul.addr %s164, 4
      %s166 = scalar_lea.vmem %s0, %s165
      %p167 = pneg %p49
      %p168 = pneg %p46
      %p169 = pneg %p70
      %p170 = pneg %p67
      %p171 = pneg %p91
      %p172 = pneg %p88
      %p173 = pneg %p119
      %p174 = pneg %p116
      %s175 = smul.u32 16, %s19
      %p176 = scmp.lt.s32.totalorder %s18, 1
      %s177 = scalar_select %p176, %s18, 1
      %p178 = scmp.lt.s32.totalorder %s175, 15
      %s179 = scalar_select %p178, %s175, 15
      %s180 = smul.addr %s179, 2
      %s181 = smul.addr %s177, 32
      %s182 = sadd.s32 %s180, %s181
      %s183 = smul.addr %s182, 8
      %s184 = scalar_lea.vmem %s3, %s183
      %s185 = sadd.s32 %s18, %s19
      %p186 = scmp.lt.s32.totalorder %s185, 1
      %s187 = scalar_select %p186, %s185, 1
      %s188 = smul.addr %s187, 54
      %s189 = smul.addr %s188, 4
      %s190 = scalar_lea.vmem %s0, %s189
      %s191 = sadd.s32 %s18, %s19
      %s192 = smul.u32 16, %s19
      %p193 = scmp.lt.s32.totalorder %s18, 1
      %s194 = scalar_select %p193, %s18, 1
      %p195 = scmp.lt.s32.totalorder %s192, 15
      %s196 = scalar_select %p195, %s192, 15
      %s197 = smul.addr %s196, 2
      %s198 = smul.addr %s194, 32
      %s199 = sadd.s32 %s197, %s198
      %s200 = smul.addr %s199, 8
      %s201 = scalar_lea.vmem %s3, %s200
      %s202 = smul.u32 16, %s19
      %v204 = vld [vmem:[%s190] sm:$0xf]
      %v205 = vld [vmem:[%s190 + $0x4] sm:$0xf]
      %v206 = vld [vmem:[%s190 + $0x8] sm:$0x1]
      %v207 = vld [vmem:[%s190 + $0xc] sm:$0xf]
      %v208 = vld [vmem:[%s190 + $0x10] sm:$0xf]
      %v209 = vld [vmem:[%s190 + $0x14] sm:$0x1]
      %v210 = vld [vmem:[%s190 + $0x18] sm:$0xf]
      %v211 = vld [vmem:[%s190 + $0x1c] sm:$0xf]
      %v212 = vld [vmem:[%s190 + $0x20] sm:$0x1]
      %v213 = vld [vmem:[%s190 + $0x24] sm:$0xf]
      %v214 = vld [vmem:[%s190 + $0x28] sm:$0xf]
      %v215 = vld [vmem:[%s190 + $0x2c] sm:$0x1]
      %v216 = vld [vmem:[%s190 + $0x30] sm:$0xf]
      %v217 = vld [vmem:[%s190 + $0x34] sm:$0xf]
      %v218 = vld [vmem:[%s190 + $0x38] sm:$0x1]
      %v219 = vld [vmem:[%s190 + $0x3c] sm:$0xf]
      %v220 = vld [vmem:[%s190 + $0x40] sm:$0xf]
      %v221 = vld [vmem:[%s190 + $0x44] sm:$0x1]
      %v222 = vld [vmem:[%s190 + $0x48] sm:$0xf]
      %v223 = vld [vmem:[%s190 + $0x4c] sm:$0xf]
      %v224 = vld [vmem:[%s190 + $0x50] sm:$0x1]
      %v225 = vld [vmem:[%s190 + $0x54] sm:$0xf]
      %v226 = vld [vmem:[%s190 + $0x58] sm:$0xf]
      %v227 = vld [vmem:[%s190 + $0x5c] sm:$0x1]
      %v228 = vld [vmem:[%s190 + $0x60] sm:$0xf]
      %v229 = vld [vmem:[%s190 + $0x64] sm:$0xf]
      %v230 = vld [vmem:[%s190 + $0x68] sm:$0x1]
      %v231 = vld [vmem:[%s190 + $0x6c] sm:$0xf]
      %v232 = vld [vmem:[%s190 + $0x70] sm:$0xf]
      %v233 = vld [vmem:[%s190 + $0x74] sm:$0x1]
      %v234 = vld [vmem:[%s190 + $0x78] sm:$0xf]
      %v235 = vld [vmem:[%s190 + $0x7c] sm:$0xf]
      %v236 = vld [vmem:[%s190 + $0x80] sm:$0x1]
      %v237 = vld [vmem:[%s190 + $0x84] sm:$0xf]
      %v238 = vld [vmem:[%s190 + $0x88] sm:$0xf]
      %v239 = vld [vmem:[%s190 + $0x8c] sm:$0x1]
      %v240 = vld [vmem:[%s190 + $0x90] sm:$0xf]
      %v241 = vld [vmem:[%s190 + $0x94] sm:$0xf]
      %v242 = vld [vmem:[%s190 + $0x98] sm:$0x1]
      %v243 = vld [vmem:[%s190 + $0x9c] sm:$0xf]
      %v244 = vld [vmem:[%s190 + $0xa0] sm:$0xf]
      %v245 = vld [vmem:[%s190 + $0xa4] sm:$0x1]
      %v246 = vld [vmem:[%s190 + $0xa8] sm:$0xf]
      %v247 = vld [vmem:[%s190 + $0xac] sm:$0xf]
      %v248 = vld [vmem:[%s190 + $0xb0] sm:$0x1]
      %v249 = vld [vmem:[%s190 + $0xb4] sm:$0xf]
      %v250 = vld [vmem:[%s190 + $0xb8] sm:$0xf]
      %v251 = vld [vmem:[%s190 + $0xbc] sm:$0x1]
      %v252 = vld [vmem:[%s190 + $0xc0] sm:$0xf]
      %v253 = vld [vmem:[%s190 + $0xc4] sm:$0xf]
      %v254 = vld [vmem:[%s190 + $0xc8] sm:$0x1]
      %v255 = vld [vmem:[%s190 + $0xcc] sm:$0xf]
      %v256 = vld [vmem:[%s190 + $0xd0] sm:$0xf]
      %v257 = vld [vmem:[%s190 + $0xd4] sm:$0x1]
      %v290 = vunpack.c.l.b16 %v204
      %v291 = vunpack.c.l.b16 %v205
      %v292 = vunpack.c.l.b16 %v207
      %v293 = vunpack.c.l.b16 %v208
      %v294 = vunpack.c.l.b16 %v210
      %v295 = vunpack.c.l.b16 %v211
      %v296 = vunpack.c.l.b16 %v213
      %v297 = vunpack.c.l.b16 %v214
      %v298 = vunpack.c.l.b16 %v216
      %v299 = vunpack.c.l.b16 %v217
      %v300 = vunpack.c.l.b16 %v219
      %v301 = vunpack.c.l.b16 %v220
      %v302 = vunpack.c.l.b16 %v222
      %v303 = vunpack.c.l.b16 %v223
      %v304 = vunpack.c.l.b16 %v225
      %v305 = vunpack.c.l.b16 %v226
      %v306 = vunpack.c.l.b16 %v228
      %v307 = vunpack.c.l.b16 %v229
      %v308 = vunpack.c.l.b16 %v231
      %v309 = vunpack.c.l.b16 %v232
      %v310 = vunpack.c.l.b16 %v234
      %v311 = vunpack.c.l.b16 %v235
      %v312 = vunpack.c.l.b16 %v237
      %v313 = vunpack.c.l.b16 %v238
      %v314 = vunpack.c.l.b16 %v240
      %v315 = vunpack.c.l.b16 %v241
      %v316 = vunpack.c.l.b16 %v243
      %v317 = vunpack.c.l.b16 %v244
      %v318 = vunpack.c.l.b16 %v246
      %v319 = vunpack.c.l.b16 %v247
      %v320 = vunpack.c.l.b16 %v249
      %v321 = vunpack.c.l.b16 %v250
      %v322 = vpack.c.b16 %v291, %v290
      %v323 = vpack.c.b16 %v293, %v292
      %v324 = vpack.c.b16 %v295, %v294
      %v325 = vpack.c.b16 %v297, %v296
      %v326 = vpack.c.b16 %v299, %v298
      %v327 = vpack.c.b16 %v301, %v300
      %v328 = vpack.c.b16 %v303, %v302
      %v329 = vpack.c.b16 %v305, %v304
      %v330 = vpack.c.b16 %v307, %v306
      %v331 = vpack.c.b16 %v309, %v308
      %v332 = vpack.c.b16 %v311, %v310
      %v333 = vpack.c.b16 %v313, %v312
      %v334 = vpack.c.b16 %v315, %v314
      %v335 = vpack.c.b16 %v317, %v316
      %v336 = vpack.c.b16 %v319, %v318
      %v337 = vpack.c.b16 %v321, %v320
      %v354 = vunpack.c.l.b16 %v206
      %v355 = vunpack.c.l.b16 %v209
      %v356 = vunpack.c.l.b16 %v212
      %v357 = vunpack.c.l.b16 %v215
      %v358 = vunpack.c.l.b16 %v218
      %v359 = vunpack.c.l.b16 %v221
      %v360 = vunpack.c.l.b16 %v224
      %v361 = vunpack.c.l.b16 %v227
      %v362 = vunpack.c.l.b16 %v230
      %v363 = vunpack.c.l.b16 %v233
      %v364 = vunpack.c.l.b16 %v236
      %v365 = vunpack.c.l.b16 %v239
      %v366 = vunpack.c.l.b16 %v242
      %v367 = vunpack.c.l.b16 %v245
      %v368 = vunpack.c.l.b16 %v248
      %v369 = vunpack.c.l.b16 %v251
      %v370 = vpack.c.b16 %v354, %v354
      %v371 = vpack.c.b16 %v355, %v355
      %v372 = vpack.c.b16 %v356, %v356
      %v373 = vpack.c.b16 %v357, %v357
      %v374 = vpack.c.b16 %v358, %v358
      %v375 = vpack.c.b16 %v359, %v359
      %v376 = vpack.c.b16 %v360, %v360
      %v377 = vpack.c.b16 %v361, %v361
      %v378 = vpack.c.b16 %v362, %v362
      %v379 = vpack.c.b16 %v363, %v363
      %v380 = vpack.c.b16 %v364, %v364
      %v381 = vpack.c.b16 %v365, %v365
      %v382 = vpack.c.b16 %v366, %v366
      %v383 = vpack.c.b16 %v367, %v367
      %v384 = vpack.c.b16 %v368, %v368
      %v385 = vpack.c.b16 %v369, %v369
      %vm386 = vsmask.f32 7424
      %v388 = vshrl.u32 %v322, 16
      %v390 = vshll.u32 %v322, 16
      %v392 = vrot.slane %v390, 1
      %v393 = vor.u32 %v388, %v392
      %v395 = vshll.u32 %v370, 16
      %v397 = vrot.slane %v395, 1
      %v398 = vsel %vm386, %v393, %v397
      %v400 = vshrl.u32 %v323, 16
      %v402 = vshll.u32 %v323, 16
      %v404 = vrot.slane %v402, 1
      %v405 = vor.u32 %v400, %v404
      %v407 = vshll.u32 %v371, 16
      %v409 = vrot.slane %v407, 1
      %v410 = vsel %vm386, %v405, %v409
      %v412 = vshrl.u32 %v324, 16
      %v414 = vshll.u32 %v324, 16
      %v416 = vrot.slane %v414, 1
      %v417 = vor.u32 %v412, %v416
      %v419 = vshll.u32 %v372, 16
      %v421 = vrot.slane %v419, 1
      %v422 = vsel %vm386, %v417, %v421
      %v424 = vshrl.u32 %v325, 16
      %v426 = vshll.u32 %v325, 16
      %v428 = vrot.slane %v426, 1
      %v429 = vor.u32 %v424, %v428
      %v431 = vshll.u32 %v373, 16
      %v433 = vrot.slane %v431, 1
      %v434 = vsel %vm386, %v429, %v433
      %v436 = vshrl.u32 %v326, 16
      %v438 = vshll.u32 %v326, 16
      %v440 = vrot.slane %v438, 1
      %v441 = vor.u32 %v436, %v440
      %v443 = vshll.u32 %v374, 16
      %v445 = vrot.slane %v443, 1
      %v446 = vsel %vm386, %v441, %v445
      %v448 = vshrl.u32 %v327, 16
      %v450 = vshll.u32 %v327, 16
      %v452 = vrot.slane %v450, 1
      %v453 = vor.u32 %v448, %v452
      %v455 = vshll.u32 %v375, 16
      %v457 = vrot.slane %v455, 1
      %v458 = vsel %vm386, %v453, %v457
      %v460 = vshrl.u32 %v328, 16
      %v462 = vshll.u32 %v328, 16
      %v464 = vrot.slane %v462, 1
      %v465 = vor.u32 %v460, %v464
      %v467 = vshll.u32 %v376, 16
      %v469 = vrot.slane %v467, 1
      %v470 = vsel %vm386, %v465, %v469
      %v472 = vshrl.u32 %v329, 16
      %v474 = vshll.u32 %v329, 16
      %v476 = vrot.slane %v474, 1
      %v477 = vor.u32 %v472, %v476
      %v479 = vshll.u32 %v377, 16
      %v481 = vrot.slane %v479, 1
      %v482 = vsel %vm386, %v477, %v481
      %v484 = vshrl.u32 %v330, 16
      %v486 = vshll.u32 %v330, 16
      %v488 = vrot.slane %v486, 1
      %v489 = vor.u32 %v484, %v488
      %v491 = vshll.u32 %v378, 16
      %v493 = vrot.slane %v491, 1
      %v494 = vsel %vm386, %v489, %v493
      %v496 = vshrl.u32 %v331, 16
      %v498 = vshll.u32 %v331, 16
      %v500 = vrot.slane %v498, 1
      %v501 = vor.u32 %v496, %v500
      %v503 = vshll.u32 %v379, 16
      %v505 = vrot.slane %v503, 1
      %v506 = vsel %vm386, %v501, %v505
      %v508 = vshrl.u32 %v332, 16
      %v510 = vshll.u32 %v332, 16
      %v512 = vrot.slane %v510, 1
      %v513 = vor.u32 %v508, %v512
      %v515 = vshll.u32 %v380, 16
      %v517 = vrot.slane %v515, 1
      %v518 = vsel %vm386, %v513, %v517
      %v520 = vshrl.u32 %v333, 16
      %v522 = vshll.u32 %v333, 16
      %v524 = vrot.slane %v522, 1
      %v525 = vor.u32 %v520, %v524
      %v527 = vshll.u32 %v381, 16
      %v529 = vrot.slane %v527, 1
      %v530 = vsel %vm386, %v525, %v529
      %v532 = vshrl.u32 %v334, 16
      %v534 = vshll.u32 %v334, 16
      %v536 = vrot.slane %v534, 1
      %v537 = vor.u32 %v532, %v536
      %v539 = vshll.u32 %v382, 16
      %v541 = vrot.slane %v539, 1
      %v542 = vsel %vm386, %v537, %v541
      %v544 = vshrl.u32 %v335, 16
      %v546 = vshll.u32 %v335, 16
      %v548 = vrot.slane %v546, 1
      %v549 = vor.u32 %v544, %v548
      %v551 = vshll.u32 %v383, 16
      %v553 = vrot.slane %v551, 1
      %v554 = vsel %vm386, %v549, %v553
      %v556 = vshrl.u32 %v336, 16
      %v558 = vshll.u32 %v336, 16
      %v560 = vrot.slane %v558, 1
      %v561 = vor.u32 %v556, %v560
      %v563 = vshll.u32 %v384, 16
      %v565 = vrot.slane %v563, 1
      %v566 = vsel %vm386, %v561, %v565
      %v568 = vshrl.u32 %v337, 16
      %v570 = vshll.u32 %v337, 16
      %v572 = vrot.slane %v570, 1
      %v573 = vor.u32 %v568, %v572
      %v575 = vshll.u32 %v385, 16
      %v577 = vrot.slane %v575, 1
      %v578 = vsel %vm386, %v573, %v577
      %579 = vrot.lane.b32.xlu0 %v398, 64
      %v580 = vpop.permute.xlu0 %579
      %581 = vrot.lane.b32.xlu0 %v410, 64
      %v582 = vpop.permute.xlu0 %581
      %583 = vrot.lane.b32.xlu0 %v422, 64
      %v584 = vpop.permute.xlu0 %583
      %585 = vrot.lane.b32.xlu0 %v434, 64
      %v586 = vpop.permute.xlu0 %585
      %587 = vrot.lane.b32.xlu0 %v446, 64
      %v588 = vpop.permute.xlu0 %587
      %589 = vrot.lane.b32.xlu0 %v458, 64
      %v590 = vpop.permute.xlu0 %589
      %591 = vrot.lane.b32.xlu0 %v470, 64
      %v592 = vpop.permute.xlu0 %591
      %593 = vrot.lane.b32.xlu0 %v482, 64
      %v594 = vpop.permute.xlu0 %593
      %595 = vrot.lane.b32.xlu0 %v494, 64
      %v596 = vpop.permute.xlu0 %595
      %597 = vrot.lane.b32.xlu0 %v506, 64
      %v598 = vpop.permute.xlu0 %597
      %599 = vrot.lane.b32.xlu0 %v518, 64
      %v600 = vpop.permute.xlu0 %599
      %601 = vrot.lane.b32.xlu0 %v530, 64
      %v602 = vpop.permute.xlu0 %601
      %603 = vrot.lane.b32.xlu0 %v542, 64
      %v604 = vpop.permute.xlu0 %603
      %605 = vrot.lane.b32.xlu0 %v554, 64
      %v606 = vpop.permute.xlu0 %605
      %607 = vrot.lane.b32.xlu0 %v566, 64
      %v608 = vpop.permute.xlu0 %607
      %609 = vrot.lane.b32.xlu0 %v578, 64
      %v610 = vpop.permute.xlu0 %609
      %vm611 = vcmask 1046528
      %v612 = vrot.slane %v322, 1
      %v613 = vrot.slane %v370, 1
      %v614 = vsel %vm611, %v612, %v613
      %v615 = vrot.slane %v323, 1
      %v616 = vrot.slane %v371, 1
      %v617 = vsel %vm611, %v615, %v616
      %v618 = vrot.slane %v324, 1
      %v619 = vrot.slane %v372, 1
      %v620 = vsel %vm611, %v618, %v619
      %v621 = vrot.slane %v325, 1
      %v622 = vrot.slane %v373, 1
      %v623 = vsel %vm611, %v621, %v622
      %v624 = vrot.slane %v326, 1
      %v625 = vrot.slane %v374, 1
      %v626 = vsel %vm611, %v624, %v625
      %v627 = vrot.slane %v327, 1
      %v628 = vrot.slane %v375, 1
      %v629 = vsel %vm611, %v627, %v628
      %v630 = vrot.slane %v328, 1
      %v631 = vrot.slane %v376, 1
      %v632 = vsel %vm611, %v630, %v631
      %v633 = vrot.slane %v329, 1
      %v634 = vrot.slane %v377, 1
      %v635 = vsel %vm611, %v633, %v634
      %v636 = vrot.slane %v330, 1
      %v637 = vrot.slane %v378, 1
      %v638 = vsel %vm611, %v636, %v637
      %v639 = vrot.slane %v331, 1
      %v640 = vrot.slane %v379, 1
      %v641 = vsel %vm611, %v639, %v640
      %v642 = vrot.slane %v332, 1
      %v643 = vrot.slane %v380, 1
      %v644 = vsel %vm611, %v642, %v643
      %v645 = vrot.slane %v333, 1
      %v646 = vrot.slane %v381, 1
      %v647 = vsel %vm611, %v645, %v646
      %v648 = vrot.slane %v334, 1
      %v649 = vrot.slane %v382, 1
      %v650 = vsel %vm611, %v648, %v649
      %v651 = vrot.slane %v335, 1
      %v652 = vrot.slane %v383, 1
      %v653 = vsel %vm611, %v651, %v652
      %v654 = vrot.slane %v336, 1
      %v655 = vrot.slane %v384, 1
      %v656 = vsel %vm611, %v654, %v655
      %v657 = vrot.slane %v337, 1
      %v658 = vrot.slane %v385, 1
      %v659 = vsel %vm611, %v657, %v658
      %vm660 = vcmask 523264
      %v662 = vsel %vm660, %v322, %v580
      %v665 = vsel %vm660, %v323, %v582
      %v668 = vsel %vm660, %v324, %v584
      %v671 = vsel %vm660, %v325, %v586
      %v674 = vsel %vm660, %v326, %v588
      %v677 = vsel %vm660, %v327, %v590
      %v680 = vsel %vm660, %v328, %v592
      %v683 = vsel %vm660, %v329, %v594
      %v686 = vsel %vm660, %v330, %v596
      %v689 = vsel %vm660, %v331, %v598
      %v692 = vsel %vm660, %v332, %v600
      %v695 = vsel %vm660, %v333, %v602
      %v698 = vsel %vm660, %v334, %v604
      %v701 = vsel %vm660, %v335, %v606
      %v704 = vsel %vm660, %v336, %v608
      %v707 = vsel %vm660, %v337, %v610
      %v709 = vld [vmem:[%s1] sm:$0xf]
      %v710 = vld [vmem:[%s1 + $0x4] sm:$0xf]
      %v711 = vld [vmem:[%s1 + $0x8] sm:$0xf]
      %v712 = vld [vmem:[%s1 + $0xc] sm:$0xf]
      %v713 = vld [vmem:[%s1 + $0x10] sm:$0xf]
      %v714 = vld [vmem:[%s1 + $0x14] sm:$0xf]
      %v715 = vld [vmem:[%s1 + $0x18] sm:$0xf]
      %v716 = vld [vmem:[%s1 + $0x1c] sm:$0xf]
      %v717 = vld [vmem:[%s1 + $0x20] sm:$0xf]
      %v718 = vld [vmem:[%s1 + $0x24] sm:$0xf]
      %v719 = vld [vmem:[%s1 + $0x28] sm:$0xf]
      %v720 = vld [vmem:[%s1 + $0x2c] sm:$0xf]
      %v721 = vld [vmem:[%s1 + $0x30] sm:$0xf]
      %v722 = vld [vmem:[%s1 + $0x34] sm:$0xf]
      %v723 = vld [vmem:[%s1 + $0x38] sm:$0xf]
      %v724 = vld [vmem:[%s1 + $0x3c] sm:$0xf]
      %v725 = vld [vmem:[%s1 + $0x40] sm:$0xf]
      %v726 = vld [vmem:[%s1 + $0x44] sm:$0xf]
      %v727 = vld [vmem:[%s1 + $0x48] sm:$0xf]
      %v728 = vld [vmem:[%s1 + $0x4c] sm:$0xf]
      %v729 = vld [vmem:[%s1 + $0x50] sm:$0xf]
      %v730 = vld [vmem:[%s1 + $0x54] sm:$0xf]
      %v731 = vld [vmem:[%s1 + $0x58] sm:$0xf]
      %v732 = vld [vmem:[%s1 + $0x5c] sm:$0xf]
      %v735 = vunpack.c.l.b16 %v252
      %v736 = vunpack.c.l.b16 %v253
      %v737 = vpack.c.b16 %v736, %v735
      %v739 = vunpack.c.l.b16 %v254
      %v740 = vpack.c.b16 %v739, %v739
      %v742 = vshrl.u32 %v737, 16
      %v744 = vshll.u32 %v737, 16
      %v746 = vrot.slane %v744, 1
      %v747 = vor.u32 %v742, %v746
      %v749 = vshll.u32 %v740, 16
      %v751 = vrot.slane %v749, 1
      %v752 = vsel %vm386, %v747, %v751
      %753 = vrot.lane.b32.xlu0 %v752, 64
      %v754 = vpop.permute.xlu0 %753
      %v755 = vrot.slane %v737, 1
      %v756 = vrot.slane %v740, 1
      %v757 = vsel %vm611, %v755, %v756
      %v759 = vsel %vm660, %v737, %v754
      %s761 = scalar_lea.vmem %s1, 96
      %v762 = vld [vmem:[%s761] sm:$0xf]
      %v763 = vld [vmem:[%s761 + $0x4] sm:$0xf]
      %v764 = vld [vmem:[%s761 + $0x8] sm:$0xf]
      %v765 = vld [vmem:[%s761 + $0xc] sm:$0xf]
      %v766 = vld [vmem:[%s761 + $0x10] sm:$0xf]
      %v767 = vld [vmem:[%s761 + $0x14] sm:$0xf]
      %v768 = vld [vmem:[%s761 + $0x18] sm:$0xf]
      %v769 = vld [vmem:[%s761 + $0x1c] sm:$0xf]
      %v770 = vld [vmem:[%s761 + $0x20] sm:$0xf]
      %v771 = vld [vmem:[%s761 + $0x24] sm:$0xf]
      %v772 = vld [vmem:[%s761 + $0x28] sm:$0xf]
      %v773 = vld [vmem:[%s761 + $0x2c] sm:$0xf]
      %v774 = vld [vmem:[%s761 + $0x30] sm:$0xf]
      %v775 = vld [vmem:[%s761 + $0x34] sm:$0xf]
      %v776 = vld [vmem:[%s761 + $0x38] sm:$0xf]
      %v777 = vld [vmem:[%s761 + $0x3c] sm:$0xf]
      %v778 = vld [vmem:[%s761 + $0x40] sm:$0xf]
      %v779 = vld [vmem:[%s761 + $0x44] sm:$0xf]
      %v780 = vld [vmem:[%s761 + $0x48] sm:$0xf]
      %v781 = vld [vmem:[%s761 + $0x4c] sm:$0xf]
      %v782 = vld [vmem:[%s761 + $0x50] sm:$0xf]
      %v783 = vld [vmem:[%s761 + $0x54] sm:$0xf]
      %v784 = vld [vmem:[%s761 + $0x58] sm:$0xf]
      %v785 = vld [vmem:[%s761 + $0x5c] sm:$0xf]
      %v810 = vunpack.c.l.b16 %v762
      %v811 = vunpack.c.l.b16 %v763
      %v812 = vunpack.c.l.b16 %v764
      %v813 = vunpack.c.l.b16 %v765
      %v814 = vunpack.c.l.b16 %v766
      %v815 = vunpack.c.l.b16 %v767
      %v816 = vunpack.c.l.b16 %v768
      %v817 = vunpack.c.l.b16 %v769
      %v818 = vunpack.c.l.b16 %v770
      %v819 = vunpack.c.l.b16 %v771
      %v820 = vunpack.c.l.b16 %v772
      %v821 = vunpack.c.l.b16 %v773
      %v822 = vunpack.c.l.b16 %v774
      %v823 = vunpack.c.l.b16 %v775
      %v824 = vunpack.c.l.b16 %v776
      %v825 = vunpack.c.l.b16 %v777
      %v826 = vunpack.c.l.b16 %v778
      %v827 = vunpack.c.l.b16 %v779
      %v828 = vunpack.c.l.b16 %v780
      %v829 = vunpack.c.l.b16 %v781
      %v830 = vunpack.c.l.b16 %v782
      %v831 = vunpack.c.l.b16 %v783
      %v832 = vunpack.c.l.b16 %v784
      %v833 = vunpack.c.l.b16 %v785
      %v834 = vpack.c.b16 %v811, %v810
      %v835 = vpack.c.b16 %v813, %v812
      %v836 = vpack.c.b16 %v815, %v814
      %v837 = vpack.c.b16 %v817, %v816
      %v838 = vpack.c.b16 %v819, %v818
      %v839 = vpack.c.b16 %v821, %v820
      %v840 = vpack.c.b16 %v823, %v822
      %v841 = vpack.c.b16 %v825, %v824
      %v842 = vpack.c.b16 %v827, %v826
      %v843 = vpack.c.b16 %v829, %v828
      %v844 = vpack.c.b16 %v831, %v830
      %v845 = vpack.c.b16 %v833, %v832
      %v859 = vsel %vm660, %v617, 0
      %v862 = vsel %vm660, %v620, 0
      %v865 = vsel %vm660, %v623, 0
      %v868 = vsel %vm660, %v626, 0
      %v871 = vsel %vm660, %v629, 0
      %v874 = vsel %vm660, %v632, 0
      %v877 = vsel %vm660, %v635, 0
      %v880 = vsel %vm660, %v638, 0
      %v883 = vsel %vm660, %v641, 0
      %v886 = vsel %vm660, %v644, 0
      %v889 = vsel %vm660, %v647, 0
      %v892 = vsel %vm660, %v650, 0
      %v895 = vsel %vm660, %v653, 0
      %v898 = vsel %vm660, %v656, 0
      %v901 = vsel %vm660, %v659, 0
      %v904 = vsel %vm660, %v757, 0
      %906 = vmatpush.bf16.msra.mxu0 %v841
      %907 = vmatpush.bf16.msra.mxu0 %v840
      %908 = vmatpush.bf16.msra.mxu0 %v839
      %909 = vmatpush.bf16.msra.mxu0 %v838
      %910 = vmatpush.bf16.msra.mxu0 %v837
      %911 = vmatpush.bf16.msra.mxu0 %v836
      %912 = vmatpush.bf16.msra.mxu0 %v835
      %913 = vmatpush.bf16.msra.mxu0 %v834
      %914 = vmatmul.bf16.gmra.mxu0 %v665
      %v915 = vpop.f32.mrf.mxu0
      %v916 = vadd.f32 0.0, %v915
      %v917 = vpop.f32.mrf.mxu0
      %v918 = vadd.f32 0.0, %v917
      %919 = vmatmul.bf16.gmra.mxu0 %v668
      %v920 = vpop.f32.mrf.mxu0
      %v921 = vadd.f32 0.0, %v920
      %v922 = vpop.f32.mrf.mxu0
      %v923 = vadd.f32 0.0, %v922
      %924 = vmatmul.bf16.gmra.mxu0 %v671
      %v925 = vpop.f32.mrf.mxu0
      %v926 = vadd.f32 0.0, %v925
      %v927 = vpop.f32.mrf.mxu0
      %v928 = vadd.f32 0.0, %v927
      %929 = vmatmul.bf16.gmra.mxu0 %v674
      %v930 = vpop.f32.mrf.mxu0
      %v931 = vadd.f32 0.0, %v930
      %v932 = vpop.f32.mrf.mxu0
      %v933 = vadd.f32 0.0, %v932
      %934 = vmatmul.bf16.gmra.mxu0 %v677
      %v935 = vpop.f32.mrf.mxu0
      %v936 = vadd.f32 0.0, %v935
      %v937 = vpop.f32.mrf.mxu0
      %v938 = vadd.f32 0.0, %v937
      %939 = vmatmul.bf16.gmra.mxu0 %v680
      %v940 = vpop.f32.mrf.mxu0
      %v941 = vadd.f32 0.0, %v940
      %v942 = vpop.f32.mrf.mxu0
      %v943 = vadd.f32 0.0, %v942
      %944 = vmatmul.bf16.gmra.mxu0 %v683
      %v945 = vpop.f32.mrf.mxu0
      %v946 = vadd.f32 0.0, %v945
      %v947 = vpop.f32.mrf.mxu0
      %v948 = vadd.f32 0.0, %v947
      %949 = vmatmul.bf16.gmra.mxu0 %v686
      %v950 = vpop.f32.mrf.mxu0
      %v951 = vadd.f32 0.0, %v950
      %v952 = vpop.f32.mrf.mxu0
      %v953 = vadd.f32 0.0, %v952
      %954 = vmatmul.bf16.gmra.mxu0 %v689
      %v955 = vpop.f32.mrf.mxu0
      %v956 = vadd.f32 0.0, %v955
      %v957 = vpop.f32.mrf.mxu0
      %v958 = vadd.f32 0.0, %v957
      %959 = vmatmul.bf16.gmra.mxu0 %v692
      %v960 = vpop.f32.mrf.mxu0
      %v961 = vadd.f32 0.0, %v960
      %v962 = vpop.f32.mrf.mxu0
      %v963 = vadd.f32 0.0, %v962
      %964 = vmatmul.bf16.gmra.mxu0 %v695
      %v965 = vpop.f32.mrf.mxu0
      %v966 = vadd.f32 0.0, %v965
      %v967 = vpop.f32.mrf.mxu0
      %v968 = vadd.f32 0.0, %v967
      %969 = vmatmul.bf16.gmra.mxu0 %v698
      %v970 = vpop.f32.mrf.mxu0
      %v971 = vadd.f32 0.0, %v970
      %v972 = vpop.f32.mrf.mxu0
      %v973 = vadd.f32 0.0, %v972
      %974 = vmatmul.bf16.gmra.mxu0 %v701
      %v975 = vpop.f32.mrf.mxu0
      %v976 = vadd.f32 0.0, %v975
      %v977 = vpop.f32.mrf.mxu0
      %v978 = vadd.f32 0.0, %v977
      %979 = vmatmul.bf16.gmra.mxu0 %v704
      %v980 = vpop.f32.mrf.mxu0
      %v981 = vadd.f32 0.0, %v980
      %v982 = vpop.f32.mrf.mxu0
      %v983 = vadd.f32 0.0, %v982
      %984 = vmatmul.bf16.gmra.mxu0 %v707
      %v985 = vpop.f32.mrf.mxu0
      %v986 = vadd.f32 0.0, %v985
      %v987 = vpop.f32.mrf.mxu0
      %v988 = vadd.f32 0.0, %v987
      %989 = vmatmul.bf16.gmra.mxu0 %v759
      %v990 = vpop.f32.mrf.mxu0
      %v991 = vadd.f32 0.0, %v990
      %v992 = vpop.f32.mrf.mxu0
      %v993 = vadd.f32 0.0, %v992
      %994 = vdwg.mxu0
      %995 = vmatpush.bf16.msra.mxu0 0
      %996 = vmatpush.bf16.msra.mxu0 0
      %997 = vmatpush.bf16.msra.mxu0 0
      %998 = vmatpush.bf16.msra.mxu0 0
      %999 = vmatpush.bf16.msra.mxu0 %v845
      %1000 = vmatpush.bf16.msra.mxu0 %v844
      %1001 = vmatpush.bf16.msra.mxu0 %v843
      %1002 = vmatpush.bf16.msra.mxu0 %v842
      %1003 = vmatmul.bf16.gmra.mxu0 %v859
      %v1004 = vpop.f32.mrf.mxu0
      %v1005 = vadd.f32 %v916, %v1004
      %v1006 = vpop.f32.mrf.mxu0
      %v1007 = vadd.f32 %v918, %v1006
      %1008 = vmatmul.bf16.gmra.mxu0 %v862
      %v1009 = vpop.f32.mrf.mxu0
      %v1010 = vadd.f32 %v921, %v1009
      %v1011 = vpop.f32.mrf.mxu0
      %v1012 = vadd.f32 %v923, %v1011
      %1013 = vmatmul.bf16.gmra.mxu0 %v865
      %v1014 = vpop.f32.mrf.mxu0
      %v1015 = vadd.f32 %v926, %v1014
      %v1016 = vpop.f32.mrf.mxu0
      %v1017 = vadd.f32 %v928, %v1016
      %1018 = vmatmul.bf16.gmra.mxu0 %v868
      %v1019 = vpop.f32.mrf.mxu0
      %v1020 = vadd.f32 %v931, %v1019
      %v1021 = vpop.f32.mrf.mxu0
      %v1022 = vadd.f32 %v933, %v1021
      %1023 = vmatmul.bf16.gmra.mxu0 %v871
      %v1024 = vpop.f32.mrf.mxu0
      %v1025 = vadd.f32 %v936, %v1024
      %v1026 = vpop.f32.mrf.mxu0
      %v1027 = vadd.f32 %v938, %v1026
      %1028 = vmatmul.bf16.gmra.mxu0 %v874
      %v1029 = vpop.f32.mrf.mxu0
      %v1030 = vadd.f32 %v941, %v1029
      %v1031 = vpop.f32.mrf.mxu0
      %v1032 = vadd.f32 %v943, %v1031
      %1033 = vmatmul.bf16.gmra.mxu0 %v877
      %v1034 = vpop.f32.mrf.mxu0
      %v1035 = vadd.f32 %v946, %v1034
      %v1036 = vpop.f32.mrf.mxu0
      %v1037 = vadd.f32 %v948, %v1036
      %1038 = vmatmul.bf16.gmra.mxu0 %v880
      %v1039 = vpop.f32.mrf.mxu0
      %v1040 = vadd.f32 %v951, %v1039
      %v1041 = vpop.f32.mrf.mxu0
      %v1042 = vadd.f32 %v953, %v1041
      %1043 = vmatmul.bf16.gmra.mxu0 %v883
      %v1044 = vpop.f32.mrf.mxu0
      %v1045 = vadd.f32 %v956, %v1044
      %v1046 = vpop.f32.mrf.mxu0
      %v1047 = vadd.f32 %v958, %v1046
      %1048 = vmatmul.bf16.gmra.mxu0 %v886
      %v1049 = vpop.f32.mrf.mxu0
      %v1050 = vadd.f32 %v961, %v1049
      %v1051 = vpop.f32.mrf.mxu0
      %v1052 = vadd.f32 %v963, %v1051
      %1053 = vmatmul.bf16.gmra.mxu0 %v889
      %v1054 = vpop.f32.mrf.mxu0
      %v1055 = vadd.f32 %v966, %v1054
      %v1056 = vpop.f32.mrf.mxu0
      %v1057 = vadd.f32 %v968, %v1056
      %1058 = vmatmul.bf16.gmra.mxu0 %v892
      %v1059 = vpop.f32.mrf.mxu0
      %v1060 = vadd.f32 %v971, %v1059
      %v1061 = vpop.f32.mrf.mxu0
      %v1062 = vadd.f32 %v973, %v1061
      %1063 = vmatmul.bf16.gmra.mxu0 %v895
      %v1064 = vpop.f32.mrf.mxu0
      %v1065 = vadd.f32 %v976, %v1064
      %v1066 = vpop.f32.mrf.mxu0
      %v1067 = vadd.f32 %v978, %v1066
      %1068 = vmatmul.bf16.gmra.mxu0 %v898
      %v1069 = vpop.f32.mrf.mxu0
      %v1070 = vadd.f32 %v981, %v1069
      %v1071 = vpop.f32.mrf.mxu0
      %v1072 = vadd.f32 %v983, %v1071
      %1073 = vmatmul.bf16.gmra.mxu0 %v901
      %v1074 = vpop.f32.mrf.mxu0
      %v1075 = vadd.f32 %v986, %v1074
      %v1076 = vpop.f32.mrf.mxu0
      %v1077 = vadd.f32 %v988, %v1076
      %1078 = vmatmul.bf16.gmra.mxu0 %v904
      %v1079 = vpop.f32.mrf.mxu0
      %v1080 = vadd.f32 %v991, %v1079
      %v1081 = vpop.f32.mrf.mxu0
      %v1082 = vadd.f32 %v993, %v1081
      %1083 = vdwg.mxu0
      %v1108 = vunpack.c.l.b16 %v709
      %v1109 = vunpack.c.l.b16 %v710
      %v1110 = vunpack.c.l.b16 %v711
      %v1111 = vunpack.c.l.b16 %v712
      %v1112 = vunpack.c.l.b16 %v713
      %v1113 = vunpack.c.l.b16 %v714
      %v1114 = vunpack.c.l.b16 %v715
      %v1115 = vunpack.c.l.b16 %v716
      %v1116 = vunpack.c.l.b16 %v717
      %v1117 = vunpack.c.l.b16 %v718
      %v1118 = vunpack.c.l.b16 %v719
      %v1119 = vunpack.c.l.b16 %v720
      %v1120 = vunpack.c.l.b16 %v721
      %v1121 = vunpack.c.l.b16 %v722
      %v1122 = vunpack.c.l.b16 %v723
      %v1123 = vunpack.c.l.b16 %v724
      %v1124 = vunpack.c.l.b16 %v725
      %v1125 = vunpack.c.l.b16 %v726
      %v1126 = vunpack.c.l.b16 %v727
      %v1127 = vunpack.c.l.b16 %v728
      %v1128 = vunpack.c.l.b16 %v729
      %v1129 = vunpack.c.l.b16 %v730
      %v1130 = vunpack.c.l.b16 %v731
      %v1131 = vunpack.c.l.b16 %v732
      %v1132 = vpack.c.b16 %v1109, %v1108
      %v1133 = vpack.c.b16 %v1111, %v1110
      %v1134 = vpack.c.b16 %v1113, %v1112
      %v1135 = vpack.c.b16 %v1115, %v1114
      %v1136 = vpack.c.b16 %v1117, %v1116
      %v1137 = vpack.c.b16 %v1119, %v1118
      %v1138 = vpack.c.b16 %v1121, %v1120
      %v1139 = vpack.c.b16 %v1123, %v1122
      %v1140 = vpack.c.b16 %v1125, %v1124
      %v1141 = vpack.c.b16 %v1127, %v1126
      %v1142 = vpack.c.b16 %v1129, %v1128
      %v1143 = vpack.c.b16 %v1131, %v1130
      %v1157 = vsel %vm660, %v614, 0
      %1159 = vmatpush.bf16.msra.mxu0 %v1139
      %1160 = vmatpush.bf16.msra.mxu0 %v1138
      %1161 = vmatpush.bf16.msra.mxu0 %v1137
      %1162 = vmatpush.bf16.msra.mxu0 %v1136
      %1163 = vmatpush.bf16.msra.mxu0 %v1135
      %1164 = vmatpush.bf16.msra.mxu0 %v1134
      %1165 = vmatpush.bf16.msra.mxu0 %v1133
      %1166 = vmatpush.bf16.msra.mxu0 %v1132
      %1167 = vmatmul.bf16.gmra.mxu0 %v662
      %v1168 = vpop.f32.mrf.mxu0
      %v1169 = vadd.f32 %v1005, %v1168
      %v1170 = vpop.f32.mrf.mxu0
      %v1171 = vadd.f32 %v1007, %v1170
      %1172 = vmatmul.bf16.gmra.mxu0 %v665
      %v1173 = vpop.f32.mrf.mxu0
      %v1174 = vadd.f32 %v1010, %v1173
      %v1175 = vpop.f32.mrf.mxu0
      %v1176 = vadd.f32 %v1012, %v1175
      %1177 = vmatmul.bf16.gmra.mxu0 %v668
      %v1178 = vpop.f32.mrf.mxu0
      %v1179 = vadd.f32 %v1015, %v1178
      %v1180 = vpop.f32.mrf.mxu0
      %v1181 = vadd.f32 %v1017, %v1180
      %1182 = vmatmul.bf16.gmra.mxu0 %v671
      %v1183 = vpop.f32.mrf.mxu0
      %v1184 = vadd.f32 %v1020, %v1183
      %v1185 = vpop.f32.mrf.mxu0
      %v1186 = vadd.f32 %v1022, %v1185
      %1187 = vmatmul.bf16.gmra.mxu0 %v674
      %v1188 = vpop.f32.mrf.mxu0
      %v1189 = vadd.f32 %v1025, %v1188
      %v1190 = vpop.f32.mrf.mxu0
      %v1191 = vadd.f32 %v1027, %v1190
      %1192 = vmatmul.bf16.gmra.mxu0 %v677
      %v1193 = vpop.f32.mrf.mxu0
      %v1194 = vadd.f32 %v1030, %v1193
      %v1195 = vpop.f32.mrf.mxu0
      %v1196 = vadd.f32 %v1032, %v1195
      %1197 = vmatmul.bf16.gmra.mxu0 %v680
      %v1198 = vpop.f32.mrf.mxu0
      %v1199 = vadd.f32 %v1035, %v1198
      %v1200 = vpop.f32.mrf.mxu0
      %v1201 = vadd.f32 %v1037, %v1200
      %1202 = vmatmul.bf16.gmra.mxu0 %v683
      %v1203 = vpop.f32.mrf.mxu0
      %v1204 = vadd.f32 %v1040, %v1203
      %v1205 = vpop.f32.mrf.mxu0
      %v1206 = vadd.f32 %v1042, %v1205
      %1207 = vmatmul.bf16.gmra.mxu0 %v686
      %v1208 = vpop.f32.mrf.mxu0
      %v1209 = vadd.f32 %v1045, %v1208
      %v1210 = vpop.f32.mrf.mxu0
      %v1211 = vadd.f32 %v1047, %v1210
      %1212 = vmatmul.bf16.gmra.mxu0 %v689
      %v1213 = vpop.f32.mrf.mxu0
      %v1214 = vadd.f32 %v1050, %v1213
      %v1215 = vpop.f32.mrf.mxu0
      %v1216 = vadd.f32 %v1052, %v1215
      %1217 = vmatmul.bf16.gmra.mxu0 %v692
      %v1218 = vpop.f32.mrf.mxu0
      %v1219 = vadd.f32 %v1055, %v1218
      %v1220 = vpop.f32.mrf.mxu0
      %v1221 = vadd.f32 %v1057, %v1220
      %1222 = vmatmul.bf16.gmra.mxu0 %v695
      %v1223 = vpop.f32.mrf.mxu0
      %v1224 = vadd.f32 %v1060, %v1223
      %v1225 = vpop.f32.mrf.mxu0
      %v1226 = vadd.f32 %v1062, %v1225
      %1227 = vmatmul.bf16.gmra.mxu0 %v698
      %v1228 = vpop.f32.mrf.mxu0
      %v1229 = vadd.f32 %v1065, %v1228
      %v1230 = vpop.f32.mrf.mxu0
      %v1231 = vadd.f32 %v1067, %v1230
      %1232 = vmatmul.bf16.gmra.mxu0 %v701
      %v1233 = vpop.f32.mrf.mxu0
      %v1234 = vadd.f32 %v1070, %v1233
      %v1235 = vpop.f32.mrf.mxu0
      %v1236 = vadd.f32 %v1072, %v1235
      %1237 = vmatmul.bf16.gmra.mxu0 %v704
      %v1238 = vpop.f32.mrf.mxu0
      %v1239 = vadd.f32 %v1075, %v1238
      %v1240 = vpop.f32.mrf.mxu0
      %v1241 = vadd.f32 %v1077, %v1240
      %1242 = vmatmul.bf16.gmra.mxu0 %v707
      %v1243 = vpop.f32.mrf.mxu0
      %v1244 = vadd.f32 %v1080, %v1243
      %v1245 = vpop.f32.mrf.mxu0
      %v1246 = vadd.f32 %v1082, %v1245
      %1247 = vdwg.mxu0
      %1248 = vmatpush.bf16.msra.mxu0 0
      %1249 = vmatpush.bf16.msra.mxu0 0
      %1250 = vmatpush.bf16.msra.mxu0 0
      %1251 = vmatpush.bf16.msra.mxu0 0
      %1252 = vmatpush.bf16.msra.mxu0 %v1143
      %1253 = vmatpush.bf16.msra.mxu0 %v1142
      %1254 = vmatpush.bf16.msra.mxu0 %v1141
      %1255 = vmatpush.bf16.msra.mxu0 %v1140
      %1256 = vmatmul.bf16.gmra.mxu0 %v1157
      %v1257 = vpop.f32.mrf.mxu0
      %v1258 = vadd.f32 %v1169, %v1257
      %v1259 = vpop.f32.mrf.mxu0
      %v1260 = vadd.f32 %v1171, %v1259
      %1261 = vmatmul.bf16.gmra.mxu0 %v859
      %v1262 = vpop.f32.mrf.mxu0
      %v1263 = vadd.f32 %v1174, %v1262
      %v1264 = vpop.f32.mrf.mxu0
      %v1265 = vadd.f32 %v1176, %v1264
      %1266 = vmatmul.bf16.gmra.mxu0 %v862
      %v1267 = vpop.f32.mrf.mxu0
      %v1268 = vadd.f32 %v1179, %v1267
      %v1269 = vpop.f32.mrf.mxu0
      %v1270 = vadd.f32 %v1181, %v1269
      %1271 = vmatmul.bf16.gmra.mxu0 %v865
      %v1272 = vpop.f32.mrf.mxu0
      %v1273 = vadd.f32 %v1184, %v1272
      %v1274 = vpop.f32.mrf.mxu0
      %v1275 = vadd.f32 %v1186, %v1274
      %1276 = vmatmul.bf16.gmra.mxu0 %v868
      %v1277 = vpop.f32.mrf.mxu0
      %v1278 = vadd.f32 %v1189, %v1277
      %v1279 = vpop.f32.mrf.mxu0
      %v1280 = vadd.f32 %v1191, %v1279
      %1281 = vmatmul.bf16.gmra.mxu0 %v871
      %v1282 = vpop.f32.mrf.mxu0
      %v1283 = vadd.f32 %v1194, %v1282
      %v1284 = vpop.f32.mrf.mxu0
      %v1285 = vadd.f32 %v1196, %v1284
      %1286 = vmatmul.bf16.gmra.mxu0 %v874
      %v1287 = vpop.f32.mrf.mxu0
      %v1288 = vadd.f32 %v1199, %v1287
      %v1289 = vpop.f32.mrf.mxu0
      %v1290 = vadd.f32 %v1201, %v1289
      %1291 = vmatmul.bf16.gmra.mxu0 %v877
      %v1292 = vpop.f32.mrf.mxu0
      %v1293 = vadd.f32 %v1204, %v1292
      %v1294 = vpop.f32.mrf.mxu0
      %v1295 = vadd.f32 %v1206, %v1294
      %1296 = vmatmul.bf16.gmra.mxu0 %v880
      %v1297 = vpop.f32.mrf.mxu0
      %v1298 = vadd.f32 %v1209, %v1297
      %v1299 = vpop.f32.mrf.mxu0
      %v1300 = vadd.f32 %v1211, %v1299
      %1301 = vmatmul.bf16.gmra.mxu0 %v883
      %v1302 = vpop.f32.mrf.mxu0
      %v1303 = vadd.f32 %v1214, %v1302
      %v1304 = vpop.f32.mrf.mxu0
      %v1305 = vadd.f32 %v1216, %v1304
      %1306 = vmatmul.bf16.gmra.mxu0 %v886
      %v1307 = vpop.f32.mrf.mxu0
      %v1308 = vadd.f32 %v1219, %v1307
      %v1309 = vpop.f32.mrf.mxu0
      %v1310 = vadd.f32 %v1221, %v1309
      %1311 = vmatmul.bf16.gmra.mxu0 %v889
      %v1312 = vpop.f32.mrf.mxu0
      %v1313 = vadd.f32 %v1224, %v1312
      %v1314 = vpop.f32.mrf.mxu0
      %v1315 = vadd.f32 %v1226, %v1314
      %1316 = vmatmul.bf16.gmra.mxu0 %v892
      %v1317 = vpop.f32.mrf.mxu0
      %v1318 = vadd.f32 %v1229, %v1317
      %v1319 = vpop.f32.mrf.mxu0
      %v1320 = vadd.f32 %v1231, %v1319
      %1321 = vmatmul.bf16.gmra.mxu0 %v895
      %v1322 = vpop.f32.mrf.mxu0
      %v1323 = vadd.f32 %v1234, %v1322
      %v1324 = vpop.f32.mrf.mxu0
      %v1325 = vadd.f32 %v1236, %v1324
      %1326 = vmatmul.bf16.gmra.mxu0 %v898
      %v1327 = vpop.f32.mrf.mxu0
      %v1328 = vadd.f32 %v1239, %v1327
      %v1329 = vpop.f32.mrf.mxu0
      %v1330 = vadd.f32 %v1241, %v1329
      %1331 = vmatmul.bf16.gmra.mxu0 %v901
      %v1332 = vpop.f32.mrf.mxu0
      %v1333 = vadd.f32 %v1244, %v1332
      %v1334 = vpop.f32.mrf.mxu0
      %v1335 = vadd.f32 %v1246, %v1334
      %1336 = vdwg.mxu0
      %v1339 = vunpack.c.l.b16 %v255
      %v1340 = vunpack.c.l.b16 %v256
      %v1341 = vpack.c.b16 %v1340, %v1339
      %v1343 = vunpack.c.l.b16 %v257
      %v1344 = vpack.c.b16 %v1343, %v1343
      %v1346 = vshrl.u32 %v1341, 16
      %v1348 = vshll.u32 %v1341, 16
      %v1350 = vrot.slane %v1348, 1
      %v1351 = vor.u32 %v1346, %v1350
      %v1353 = vshll.u32 %v1344, 16
      %v1355 = vrot.slane %v1353, 1
      %v1356 = vsel %vm386, %v1351, %v1355
      %1357 = vrot.lane.b32.xlu0 %v1356, 64
      %v1358 = vpop.permute.xlu0 %1357
      %v1359 = vrot.slane %v1341, 1
      %v1360 = vrot.slane %v1344, 1
      %v1361 = vsel %vm611, %v1359, %v1360
      %v1363 = vsel %vm660, %v1341, %v1358
      %s1365 = scalar_lea.vmem %s1, 192
      %v1366 = vld [vmem:[%s1365] sm:$0xf]
      %v1367 = vld [vmem:[%s1365 + $0x4] sm:$0xf]
      %v1368 = vld [vmem:[%s1365 + $0x8] sm:$0xf]
      %v1369 = vld [vmem:[%s1365 + $0xc] sm:$0xf]
      %v1370 = vld [vmem:[%s1365 + $0x10] sm:$0xf]
      %v1371 = vld [vmem:[%s1365 + $0x14] sm:$0xf]
      %v1372 = vld [vmem:[%s1365 + $0x18] sm:$0xf]
      %v1373 = vld [vmem:[%s1365 + $0x1c] sm:$0xf]
      %v1374 = vld [vmem:[%s1365 + $0x20] sm:$0xf]
      %v1375 = vld [vmem:[%s1365 + $0x24] sm:$0xf]
      %v1376 = vld [vmem:[%s1365 + $0x28] sm:$0xf]
      %v1377 = vld [vmem:[%s1365 + $0x2c] sm:$0xf]
      %v1378 = vld [vmem:[%s1365 + $0x30] sm:$0xf]
      %v1379 = vld [vmem:[%s1365 + $0x34] sm:$0xf]
      %v1380 = vld [vmem:[%s1365 + $0x38] sm:$0xf]
      %v1381 = vld [vmem:[%s1365 + $0x3c] sm:$0xf]
      %v1382 = vld [vmem:[%s1365 + $0x40] sm:$0xf]
      %v1383 = vld [vmem:[%s1365 + $0x44] sm:$0xf]
      %v1384 = vld [vmem:[%s1365 + $0x48] sm:$0xf]
      %v1385 = vld [vmem:[%s1365 + $0x4c] sm:$0xf]
      %v1386 = vld [vmem:[%s1365 + $0x50] sm:$0xf]
      %v1387 = vld [vmem:[%s1365 + $0x54] sm:$0xf]
      %v1388 = vld [vmem:[%s1365 + $0x58] sm:$0xf]
      %v1389 = vld [vmem:[%s1365 + $0x5c] sm:$0xf]
      %v1414 = vunpack.c.l.b16 %v1366
      %v1415 = vunpack.c.l.b16 %v1367
      %v1416 = vunpack.c.l.b16 %v1368
      %v1417 = vunpack.c.l.b16 %v1369
      %v1418 = vunpack.c.l.b16 %v1370
      %v1419 = vunpack.c.l.b16 %v1371
      %v1420 = vunpack.c.l.b16 %v1372
      %v1421 = vunpack.c.l.b16 %v1373
      %v1422 = vunpack.c.l.b16 %v1374
      %v1423 = vunpack.c.l.b16 %v1375
      %v1424 = vunpack.c.l.b16 %v1376
      %v1425 = vunpack.c.l.b16 %v1377
      %v1426 = vunpack.c.l.b16 %v1378
      %v1427 = vunpack.c.l.b16 %v1379
      %v1428 = vunpack.c.l.b16 %v1380
      %v1429 = vunpack.c.l.b16 %v1381
      %v1430 = vunpack.c.l.b16 %v1382
      %v1431 = vunpack.c.l.b16 %v1383
      %v1432 = vunpack.c.l.b16 %v1384
      %v1433 = vunpack.c.l.b16 %v1385
      %v1434 = vunpack.c.l.b16 %v1386
      %v1435 = vunpack.c.l.b16 %v1387
      %v1436 = vunpack.c.l.b16 %v1388
      %v1437 = vunpack.c.l.b16 %v1389
      %v1438 = vpack.c.b16 %v1415, %v1414
      %v1439 = vpack.c.b16 %v1417, %v1416
      %v1440 = vpack.c.b16 %v1419, %v1418
      %v1441 = vpack.c.b16 %v1421, %v1420
      %v1442 = vpack.c.b16 %v1423, %v1422
      %v1443 = vpack.c.b16 %v1425, %v1424
      %v1444 = vpack.c.b16 %v1427, %v1426
      %v1445 = vpack.c.b16 %v1429, %v1428
      %v1446 = vpack.c.b16 %v1431, %v1430
      %v1447 = vpack.c.b16 %v1433, %v1432
      %v1448 = vpack.c.b16 %v1435, %v1434
      %v1449 = vpack.c.b16 %v1437, %v1436
      %v1463 = vsel %vm660, %v1361, 0
      %1465 = vmatpush.bf16.msra.mxu0 %v1445
      %1466 = vmatpush.bf16.msra.mxu0 %v1444
      %1467 = vmatpush.bf16.msra.mxu0 %v1443
      %1468 = vmatpush.bf16.msra.mxu0 %v1442
      %1469 = vmatpush.bf16.msra.mxu0 %v1441
      %1470 = vmatpush.bf16.msra.mxu0 %v1440
      %1471 = vmatpush.bf16.msra.mxu0 %v1439
      %1472 = vmatpush.bf16.msra.mxu0 %v1438
      %1473 = vmatmul.bf16.gmra.mxu0 %v668
      %v1474 = vpop.f32.mrf.mxu0
      %v1475 = vadd.f32 0.0, %v1474
      %v1476 = vpop.f32.mrf.mxu0
      %v1477 = vadd.f32 0.0, %v1476
      %1478 = vmatmul.bf16.gmra.mxu0 %v671
      %v1479 = vpop.f32.mrf.mxu0
      %v1480 = vadd.f32 0.0, %v1479
      %v1481 = vpop.f32.mrf.mxu0
      %v1482 = vadd.f32 0.0, %v1481
      %1483 = vmatmul.bf16.gmra.mxu0 %v674
      %v1484 = vpop.f32.mrf.mxu0
      %v1485 = vadd.f32 0.0, %v1484
      %v1486 = vpop.f32.mrf.mxu0
      %v1487 = vadd.f32 0.0, %v1486
      %1488 = vmatmul.bf16.gmra.mxu0 %v677
      %v1489 = vpop.f32.mrf.mxu0
      %v1490 = vadd.f32 0.0, %v1489
      %v1491 = vpop.f32.mrf.mxu0
      %v1492 = vadd.f32 0.0, %v1491
      %1493 = vmatmul.bf16.gmra.mxu0 %v680
      %v1494 = vpop.f32.mrf.mxu0
      %v1495 = vadd.f32 0.0, %v1494
      %v1496 = vpop.f32.mrf.mxu0
      %v1497 = vadd.f32 0.0, %v1496
      %1498 = vmatmul.bf16.gmra.mxu0 %v683
      %v1499 = vpop.f32.mrf.mxu0
      %v1500 = vadd.f32 0.0, %v1499
      %v1501 = vpop.f32.mrf.mxu0
      %v1502 = vadd.f32 0.0, %v1501
      %1503 = vmatmul.bf16.gmra.mxu0 %v686
      %v1504 = vpop.f32.mrf.mxu0
      %v1505 = vadd.f32 0.0, %v1504
      %v1506 = vpop.f32.mrf.mxu0
      %v1507 = vadd.f32 0.0, %v1506
      %1508 = vmatmul.bf16.gmra.mxu0 %v689
      %v1509 = vpop.f32.mrf.mxu0
      %v1510 = vadd.f32 0.0, %v1509
      %v1511 = vpop.f32.mrf.mxu0
      %v1512 = vadd.f32 0.0, %v1511
      %1513 = vmatmul.bf16.gmra.mxu0 %v692
      %v1514 = vpop.f32.mrf.mxu0
      %v1515 = vadd.f32 0.0, %v1514
      %v1516 = vpop.f32.mrf.mxu0
      %v1517 = vadd.f32 0.0, %v1516
      %1518 = vmatmul.bf16.gmra.mxu0 %v695
      %v1519 = vpop.f32.mrf.mxu0
      %v1520 = vadd.f32 0.0, %v1519
      %v1521 = vpop.f32.mrf.mxu0
      %v1522 = vadd.f32 0.0, %v1521
      %1523 = vmatmul.bf16.gmra.mxu0 %v698
      %v1524 = vpop.f32.mrf.mxu0
      %v1525 = vadd.f32 0.0, %v1524
      %v1526 = vpop.f32.mrf.mxu0
      %v1527 = vadd.f32 0.0, %v1526
      %1528 = vmatmul.bf16.gmra.mxu0 %v701
      %v1529 = vpop.f32.mrf.mxu0
      %v1530 = vadd.f32 0.0, %v1529
      %v1531 = vpop.f32.mrf.mxu0
      %v1532 = vadd.f32 0.0, %v1531
      %1533 = vmatmul.bf16.gmra.mxu0 %v704
      %v1534 = vpop.f32.mrf.mxu0
      %v1535 = vadd.f32 0.0, %v1534
      %v1536 = vpop.f32.mrf.mxu0
      %v1537 = vadd.f32 0.0, %v1536
      %1538 = vmatmul.bf16.gmra.mxu0 %v707
      %v1539 = vpop.f32.mrf.mxu0
      %v1540 = vadd.f32 0.0, %v1539
      %v1541 = vpop.f32.mrf.mxu0
      %v1542 = vadd.f32 0.0, %v1541
      %1543 = vmatmul.bf16.gmra.mxu0 %v759
      %v1544 = vpop.f32.mrf.mxu0
      %v1545 = vadd.f32 0.0, %v1544
      %v1546 = vpop.f32.mrf.mxu0
      %v1547 = vadd.f32 0.0, %v1546
      %1548 = vmatmul.bf16.gmra.mxu0 %v1363
      %v1549 = vpop.f32.mrf.mxu0
      %v1550 = vadd.f32 0.0, %v1549
      %v1551 = vpop.f32.mrf.mxu0
      %v1552 = vadd.f32 0.0, %v1551
      %1553 = vdwg.mxu0
      %1554 = vmatpush.bf16.msra.mxu0 0
      %1555 = vmatpush.bf16.msra.mxu0 0
      %1556 = vmatpush.bf16.msra.mxu0 0
      %1557 = vmatpush.bf16.msra.mxu0 0
      %1558 = vmatpush.bf16.msra.mxu0 %v1449
      %1559 = vmatpush.bf16.msra.mxu0 %v1448
      %1560 = vmatpush.bf16.msra.mxu0 %v1447
      %1561 = vmatpush.bf16.msra.mxu0 %v1446
      %1562 = vmatmul.bf16.gmra.mxu0 %v862
      %v1563 = vpop.f32.mrf.mxu0
      %v1564 = vadd.f32 %v1475, %v1563
      %v1565 = vpop.f32.mrf.mxu0
      %v1566 = vadd.f32 %v1477, %v1565
      %1567 = vmatmul.bf16.gmra.mxu0 %v865
      %v1568 = vpop.f32.mrf.mxu0
      %v1569 = vadd.f32 %v1480, %v1568
      %v1570 = vpop.f32.mrf.mxu0
      %v1571 = vadd.f32 %v1482, %v1570
      %1572 = vmatmul.bf16.gmra.mxu0 %v868
      %v1573 = vpop.f32.mrf.mxu0
      %v1574 = vadd.f32 %v1485, %v1573
      %v1575 = vpop.f32.mrf.mxu0
      %v1576 = vadd.f32 %v1487, %v1575
      %1577 = vmatmul.bf16.gmra.mxu0 %v871
      %v1578 = vpop.f32.mrf.mxu0
      %v1579 = vadd.f32 %v1490, %v1578
      %v1580 = vpop.f32.mrf.mxu0
      %v1581 = vadd.f32 %v1492, %v1580
      %1582 = vmatmul.bf16.gmra.mxu0 %v874
      %v1583 = vpop.f32.mrf.mxu0
      %v1584 = vadd.f32 %v1495, %v1583
      %v1585 = vpop.f32.mrf.mxu0
      %v1586 = vadd.f32 %v1497, %v1585
      %1587 = vmatmul.bf16.gmra.mxu0 %v877
      %v1588 = vpop.f32.mrf.mxu0
      %v1589 = vadd.f32 %v1500, %v1588
      %v1590 = vpop.f32.mrf.mxu0
      %v1591 = vadd.f32 %v1502, %v1590
      %1592 = vmatmul.bf16.gmra.mxu0 %v880
      %v1593 = vpop.f32.mrf.mxu0
      %v1594 = vadd.f32 %v1505, %v1593
      %v1595 = vpop.f32.mrf.mxu0
      %v1596 = vadd.f32 %v1507, %v1595
      %1597 = vmatmul.bf16.gmra.mxu0 %v883
      %v1598 = vpop.f32.mrf.mxu0
      %v1599 = vadd.f32 %v1510, %v1598
      %v1600 = vpop.f32.mrf.mxu0
      %v1601 = vadd.f32 %v1512, %v1600
      %1602 = vmatmul.bf16.gmra.mxu0 %v886
      %v1603 = vpop.f32.mrf.mxu0
      %v1604 = vadd.f32 %v1515, %v1603
      %v1605 = vpop.f32.mrf.mxu0
      %v1606 = vadd.f32 %v1517, %v1605
      %1607 = vmatmul.bf16.gmra.mxu0 %v889
      %v1608 = vpop.f32.mrf.mxu0
      %v1609 = vadd.f32 %v1520, %v1608
      %v1610 = vpop.f32.mrf.mxu0
      %v1611 = vadd.f32 %v1522, %v1610
      %1612 = vmatmul.bf16.gmra.mxu0 %v892
      %v1613 = vpop.f32.mrf.mxu0
      %v1614 = vadd.f32 %v1525, %v1613
      %v1615 = vpop.f32.mrf.mxu0
      %v1616 = vadd.f32 %v1527, %v1615
      %1617 = vmatmul.bf16.gmra.mxu0 %v895
      %v1618 = vpop.f32.mrf.mxu0
      %v1619 = vadd.f32 %v1530, %v1618
      %v1620 = vpop.f32.mrf.mxu0
      %v1621 = vadd.f32 %v1532, %v1620
      %1622 = vmatmul.bf16.gmra.mxu0 %v898
      %v1623 = vpop.f32.mrf.mxu0
      %v1624 = vadd.f32 %v1535, %v1623
      %v1625 = vpop.f32.mrf.mxu0
      %v1626 = vadd.f32 %v1537, %v1625
      %1627 = vmatmul.bf16.gmra.mxu0 %v901
      %v1628 = vpop.f32.mrf.mxu0
      %v1629 = vadd.f32 %v1540, %v1628
      %v1630 = vpop.f32.mrf.mxu0
      %v1631 = vadd.f32 %v1542, %v1630
      %1632 = vmatmul.bf16.gmra.mxu0 %v904
      %v1633 = vpop.f32.mrf.mxu0
      %v1634 = vadd.f32 %v1545, %v1633
      %v1635 = vpop.f32.mrf.mxu0
      %v1636 = vadd.f32 %v1547, %v1635
      %1637 = vmatmul.bf16.gmra.mxu0 %v1463
      %v1638 = vpop.f32.mrf.mxu0
      %v1639 = vadd.f32 %v1550, %v1638
      %v1640 = vpop.f32.mrf.mxu0
      %v1641 = vadd.f32 %v1552, %v1640
      %1642 = vdwg.mxu0
      %v1643 = vadd.f32 %v1258, %v1564
      %v1644 = vadd.f32 %v1260, %v1566
      %v1645 = vadd.f32 %v1263, %v1569
      %v1646 = vadd.f32 %v1265, %v1571
      %v1647 = vadd.f32 %v1268, %v1574
      %v1648 = vadd.f32 %v1270, %v1576
      %v1649 = vadd.f32 %v1273, %v1579
      %v1650 = vadd.f32 %v1275, %v1581
      %v1651 = vadd.f32 %v1278, %v1584
      %v1652 = vadd.f32 %v1280, %v1586
      %v1653 = vadd.f32 %v1283, %v1589
      %v1654 = vadd.f32 %v1285, %v1591
      %v1655 = vadd.f32 %v1288, %v1594
      %v1656 = vadd.f32 %v1290, %v1596
      %v1657 = vadd.f32 %v1293, %v1599
      %v1658 = vadd.f32 %v1295, %v1601
      %v1659 = vadd.f32 %v1298, %v1604
      %v1660 = vadd.f32 %v1300, %v1606
      %v1661 = vadd.f32 %v1303, %v1609
      %v1662 = vadd.f32 %v1305, %v1611
      %v1663 = vadd.f32 %v1308, %v1614
      %v1664 = vadd.f32 %v1310, %v1616
      %v1665 = vadd.f32 %v1313, %v1619
      %v1666 = vadd.f32 %v1315, %v1621
      %v1667 = vadd.f32 %v1318, %v1624
      %v1668 = vadd.f32 %v1320, %v1626
      %v1669 = vadd.f32 %v1323, %v1629
      %v1670 = vadd.f32 %v1325, %v1631
      %v1671 = vadd.f32 %v1328, %v1634
      %v1672 = vadd.f32 %v1330, %v1636
      %v1673 = vadd.f32 %v1333, %v1639
      %v1674 = vadd.f32 %v1335, %v1641
      %v1675 = vld [vmem:[%s2] sm:$0x1]
      %v1677 = vperm.slane %v1675, 0
      %v1679 = vadd.f32 %v1643, %v1677
      %v1680 = vadd.f32 %v1644, %v1677
      %v1681 = vadd.f32 %v1645, %v1677
      %v1682 = vadd.f32 %v1646, %v1677
      %v1683 = vadd.f32 %v1647, %v1677
      %v1684 = vadd.f32 %v1648, %v1677
      %v1685 = vadd.f32 %v1649, %v1677
      %v1686 = vadd.f32 %v1650, %v1677
      %v1687 = vadd.f32 %v1651, %v1677
      %v1688 = vadd.f32 %v1652, %v1677
      %v1689 = vadd.f32 %v1653, %v1677
      %v1690 = vadd.f32 %v1654, %v1677
      %v1691 = vadd.f32 %v1655, %v1677
      %v1692 = vadd.f32 %v1656, %v1677
      %v1693 = vadd.f32 %v1657, %v1677
      %v1694 = vadd.f32 %v1658, %v1677
      %v1695 = vadd.f32 %v1659, %v1677
      %v1696 = vadd.f32 %v1660, %v1677
      %v1697 = vadd.f32 %v1661, %v1677
      %v1698 = vadd.f32 %v1662, %v1677
      %v1699 = vadd.f32 %v1663, %v1677
      %v1700 = vadd.f32 %v1664, %v1677
      %v1701 = vadd.f32 %v1665, %v1677
      %v1702 = vadd.f32 %v1666, %v1677
      %v1703 = vadd.f32 %v1667, %v1677
      %v1704 = vadd.f32 %v1668, %v1677
      %v1705 = vadd.f32 %v1669, %v1677
      %v1706 = vadd.f32 %v1670, %v1677
      %v1707 = vadd.f32 %v1671, %v1677
      %v1708 = vadd.f32 %v1672, %v1677
      %v1709 = vadd.f32 %v1673, %v1677
      %v1710 = vadd.f32 %v1674, %v1677
      %v1711 = vsub.f32 0.0, %v1679
      %v1712 = vsub.f32 0.0, %v1680
      %v1713 = vsub.f32 0.0, %v1681
      %v1714 = vsub.f32 0.0, %v1682
      %v1715 = vsub.f32 0.0, %v1683
      %v1716 = vsub.f32 0.0, %v1684
      %v1717 = vsub.f32 0.0, %v1685
      %v1718 = vsub.f32 0.0, %v1686
      %v1719 = vsub.f32 0.0, %v1687
      %v1720 = vsub.f32 0.0, %v1688
      %v1721 = vsub.f32 0.0, %v1689
      %v1722 = vsub.f32 0.0, %v1690
      %v1723 = vsub.f32 0.0, %v1691
      %v1724 = vsub.f32 0.0, %v1692
      %v1725 = vsub.f32 0.0, %v1693
      %v1726 = vsub.f32 0.0, %v1694
      %v1727 = vsub.f32 0.0, %v1695
      %v1728 = vsub.f32 0.0, %v1696
      %v1729 = vsub.f32 0.0, %v1697
      %v1730 = vsub.f32 0.0, %v1698
      %v1731 = vsub.f32 0.0, %v1699
      %v1732 = vsub.f32 0.0, %v1700
      %v1733 = vsub.f32 0.0, %v1701
      %v1734 = vsub.f32 0.0, %v1702
      %v1735 = vsub.f32 0.0, %v1703
      %v1736 = vsub.f32 0.0, %v1704
      %v1737 = vsub.f32 0.0, %v1705
      %v1738 = vsub.f32 0.0, %v1706
      %v1739 = vsub.f32 0.0, %v1707
      %v1740 = vsub.f32 0.0, %v1708
      %v1741 = vsub.f32 0.0, %v1709
      %v1742 = vsub.f32 0.0, %v1710
      %v1743 = vmul.f32 %v1711, 1.442695
      %v1744 = vpow.pop %v1743
      %v1745 = vmul.f32 %v1712, 1.442695
      %v1746 = vpow.pop %v1745
      %v1747 = vmul.f32 %v1713, 1.442695
      %v1748 = vpow.pop %v1747
      %v1749 = vmul.f32 %v1714, 1.442695
      %v1750 = vpow.pop %v1749
      %v1751 = vmul.f32 %v1715, 1.442695
      %v1752 = vpow.pop %v1751
      %v1753 = vmul.f32 %v1716, 1.442695
      %v1754 = vpow.pop %v1753
      %v1755 = vmul.f32 %v1717, 1.442695
      %v1756 = vpow.pop %v1755
      %v1757 = vmul.f32 %v1718, 1.442695
      %v1758 = vpow.pop %v1757
      %v1759 = vmul.f32 %v1719, 1.442695
      %v1760 = vpow.pop %v1759
      %v1761 = vmul.f32 %v1720, 1.442695
      %v1762 = vpow.pop %v1761
      %v1763 = vmul.f32 %v1721, 1.442695
      %v1764 = vpow.pop %v1763
      %v1765 = vmul.f32 %v1722, 1.442695
      %v1766 = vpow.pop %v1765
      %v1767 = vmul.f32 %v1723, 1.442695
      %v1768 = vpow.pop %v1767
      %v1769 = vmul.f32 %v1724, 1.442695
      %v1770 = vpow.pop %v1769
      %v1771 = vmul.f32 %v1725, 1.442695
      %v1772 = vpow.pop %v1771
      %v1773 = vmul.f32 %v1726, 1.442695
      %v1774 = vpow.pop %v1773
      %v1775 = vmul.f32 %v1727, 1.442695
      %v1776 = vpow.pop %v1775
      %v1777 = vmul.f32 %v1728, 1.442695
      %v1778 = vpow.pop %v1777
      %v1779 = vmul.f32 %v1729, 1.442695
      %v1780 = vpow.pop %v1779
      %v1781 = vmul.f32 %v1730, 1.442695
      %v1782 = vpow.pop %v1781
      %v1783 = vmul.f32 %v1731, 1.442695
      %v1784 = vpow.pop %v1783
      %v1785 = vmul.f32 %v1732, 1.442695
      %v1786 = vpow.pop %v1785
      %v1787 = vmul.f32 %v1733, 1.442695
      %v1788 = vpow.pop %v1787
      %v1789 = vmul.f32 %v1734, 1.442695
      %v1790 = vpow.pop %v1789
      %v1791 = vmul.f32 %v1735, 1.442695
      %v1792 = vpow.pop %v1791
      %v1793 = vmul.f32 %v1736, 1.442695
      %v1794 = vpow.pop %v1793
      %v1795 = vmul.f32 %v1737, 1.442695
      %v1796 = vpow.pop %v1795
      %v1797 = vmul.f32 %v1738, 1.442695
      %v1798 = vpow.pop %v1797
      %v1799 = vmul.f32 %v1739, 1.442695
      %v1800 = vpow.pop %v1799
      %v1801 = vmul.f32 %v1740, 1.442695
      %v1802 = vpow.pop %v1801
      %v1803 = vmul.f32 %v1741, 1.442695
      %v1804 = vpow.pop %v1803
      %v1805 = vmul.f32 %v1742, 1.442695
      %v1806 = vpow.pop %v1805
      %v1807 = vadd.f32 %v1744, 1.0
      %v1808 = vadd.f32 %v1746, 1.0
      %v1809 = vadd.f32 %v1748, 1.0
      %v1810 = vadd.f32 %v1750, 1.0
      %v1811 = vadd.f32 %v1752, 1.0
      %v1812 = vadd.f32 %v1754, 1.0
      %v1813 = vadd.f32 %v1756, 1.0
      %v1814 = vadd.f32 %v1758, 1.0
      %v1815 = vadd.f32 %v1760, 1.0
      %v1816 = vadd.f32 %v1762, 1.0
      %v1817 = vadd.f32 %v1764, 1.0
      %v1818 = vadd.f32 %v1766, 1.0
      %v1819 = vadd.f32 %v1768, 1.0
      %v1820 = vadd.f32 %v1770, 1.0
      %v1821 = vadd.f32 %v1772, 1.0
      %v1822 = vadd.f32 %v1774, 1.0
      %v1823 = vadd.f32 %v1776, 1.0
      %v1824 = vadd.f32 %v1778, 1.0
      %v1825 = vadd.f32 %v1780, 1.0
      %v1826 = vadd.f32 %v1782, 1.0
      %v1827 = vadd.f32 %v1784, 1.0
      %v1828 = vadd.f32 %v1786, 1.0
      %v1829 = vadd.f32 %v1788, 1.0
      %v1830 = vadd.f32 %v1790, 1.0
      %v1831 = vadd.f32 %v1792, 1.0
      %v1832 = vadd.f32 %v1794, 1.0
      %v1833 = vadd.f32 %v1796, 1.0
      %v1834 = vadd.f32 %v1798, 1.0
      %v1835 = vadd.f32 %v1800, 1.0
      %v1836 = vadd.f32 %v1802, 1.0
      %v1837 = vadd.f32 %v1804, 1.0
      %v1838 = vadd.f32 %v1806, 1.0
      %v1839 = vrcp.pop %v1807
      %v1840 = vrcp.pop %v1808
      %v1841 = vrcp.pop %v1809
      %v1842 = vrcp.pop %v1810
      %v1843 = vrcp.pop %v1811
      %v1844 = vrcp.pop %v1812
      %v1845 = vrcp.pop %v1813
      %v1846 = vrcp.pop %v1814
      %v1847 = vrcp.pop %v1815
      %v1848 = vrcp.pop %v1816
      %v1849 = vrcp.pop %v1817
      %v1850 = vrcp.pop %v1818
      %v1851 = vrcp.pop %v1819
      %v1852 = vrcp.pop %v1820
      %v1853 = vrcp.pop %v1821
      %v1854 = vrcp.pop %v1822
      %v1855 = vrcp.pop %v1823
      %v1856 = vrcp.pop %v1824
      %v1857 = vrcp.pop %v1825
      %v1858 = vrcp.pop %v1826
      %v1859 = vrcp.pop %v1827
      %v1860 = vrcp.pop %v1828
      %v1861 = vrcp.pop %v1829
      %v1862 = vrcp.pop %v1830
      %v1863 = vrcp.pop %v1831
      %v1864 = vrcp.pop %v1832
      %v1865 = vrcp.pop %v1833
      %v1866 = vrcp.pop %v1834
      %v1867 = vrcp.pop %v1835
      %v1868 = vrcp.pop %v1836
      %v1869 = vrcp.pop %v1837
      %v1870 = vrcp.pop %v1838
      %v1871 = vmax.f32 %v1839, 0.0001
      %v1872 = vmax.f32 %v1840, 0.0001
      %v1873 = vmax.f32 %v1841, 0.0001
      %v1874 = vmax.f32 %v1842, 0.0001
      %v1875 = vmax.f32 %v1843, 0.0001
      %v1876 = vmax.f32 %v1844, 0.0001
      %v1877 = vmax.f32 %v1845, 0.0001
      %v1878 = vmax.f32 %v1846, 0.0001
      %v1879 = vmax.f32 %v1847, 0.0001
      %v1880 = vmax.f32 %v1848, 0.0001
      %v1881 = vmax.f32 %v1849, 0.0001
      %v1882 = vmax.f32 %v1850, 0.0001
      %v1883 = vmax.f32 %v1851, 0.0001
      %v1884 = vmax.f32 %v1852, 0.0001
      %v1885 = vmax.f32 %v1853, 0.0001
      %v1886 = vmax.f32 %v1854, 0.0001
      %v1887 = vmax.f32 %v1855, 0.0001
      %v1888 = vmax.f32 %v1856, 0.0001
      %v1889 = vmax.f32 %v1857, 0.0001
      %v1890 = vmax.f32 %v1858, 0.0001
      %v1891 = vmax.f32 %v1859, 0.0001
      %v1892 = vmax.f32 %v1860, 0.0001
      %v1893 = vmax.f32 %v1861, 0.0001
      %v1894 = vmax.f32 %v1862, 0.0001
      %v1895 = vmax.f32 %v1863, 0.0001
      %v1896 = vmax.f32 %v1864, 0.0001
      %v1897 = vmax.f32 %v1865, 0.0001
      %v1898 = vmax.f32 %v1866, 0.0001
      %v1899 = vmax.f32 %v1867, 0.0001
      %v1900 = vmax.f32 %v1868, 0.0001
      %v1901 = vmax.f32 %v1869, 0.0001
      %v1902 = vmax.f32 %v1870, 0.0001
      %v1903 = vmin.f32 %v1871, 1.0
      %v1904 = vmin.f32 %v1872, 1.0
      %v1905 = vmin.f32 %v1873, 1.0
      %v1906 = vmin.f32 %v1874, 1.0
      %v1907 = vmin.f32 %v1875, 1.0
      %v1908 = vmin.f32 %v1876, 1.0
      %v1909 = vmin.f32 %v1877, 1.0
      %v1910 = vmin.f32 %v1878, 1.0
      %v1911 = vmin.f32 %v1879, 1.0
      %v1912 = vmin.f32 %v1880, 1.0
      %v1913 = vmin.f32 %v1881, 1.0
      %v1914 = vmin.f32 %v1882, 1.0
      %v1915 = vmin.f32 %v1883, 1.0
      %v1916 = vmin.f32 %v1884, 1.0
      %v1917 = vmin.f32 %v1885, 1.0
      %v1918 = vmin.f32 %v1886, 1.0
      %v1919 = vmin.f32 %v1887, 1.0
      %v1920 = vmin.f32 %v1888, 1.0
      %v1921 = vmin.f32 %v1889, 1.0
      %v1922 = vmin.f32 %v1890, 1.0
      %v1923 = vmin.f32 %v1891, 1.0
      %v1924 = vmin.f32 %v1892, 1.0
      %v1925 = vmin.f32 %v1893, 1.0
      %v1926 = vmin.f32 %v1894, 1.0
      %v1927 = vmin.f32 %v1895, 1.0
      %v1928 = vmin.f32 %v1896, 1.0
      %v1929 = vmin.f32 %v1897, 1.0
      %v1930 = vmin.f32 %v1898, 1.0
      %v1931 = vmin.f32 %v1899, 1.0
      %v1932 = vmin.f32 %v1900, 1.0
      %v1933 = vmin.f32 %v1901, 1.0
      %v1934 = vmin.f32 %v1902, 1.0
      %vm1935 = vcmask 23552
      %1936 = vst.msk [vmem:[%s201] sm:$0xff] %vm1935, %v1903
      %1937 = vst.msk [vmem:[%s201 + $0x8] sm:$0xff] %vm1935, %v1904
      %1938 = vst.msk [vmem:[%s201 + $0x10] sm:$0xff] %vm1935, %v1905
      %1939 = vst.msk [vmem:[%s201 + $0x18] sm:$0xff] %vm1935, %v1906
      %1940 = vst.msk [vmem:[%s201 + $0x20] sm:$0xff] %vm1935, %v1907
      %1941 = vst.msk [vmem:[%s201 + $0x28] sm:$0xff] %vm1935, %v1908
      %1942 = vst.msk [vmem:[%s201 + $0x30] sm:$0xff] %vm1935, %v1909
      %1943 = vst.msk [vmem:[%s201 + $0x38] sm:$0xff] %vm1935, %v1910
      %1944 = vst.msk [vmem:[%s201 + $0x40] sm:$0xff] %vm1935, %v1911
      %1945 = vst.msk [vmem:[%s201 + $0x48] sm:$0xff] %vm1935, %v1912
      %1946 = vst.msk [vmem:[%s201 + $0x50] sm:$0xff] %vm1935, %v1913
      %1947 = vst.msk [vmem:[%s201 + $0x58] sm:$0xff] %vm1935, %v1914
      %1948 = vst.msk [vmem:[%s201 + $0x60] sm:$0xff] %vm1935, %v1915
      %1949 = vst.msk [vmem:[%s201 + $0x68] sm:$0xff] %vm1935, %v1916
      %1950 = vst.msk [vmem:[%s201 + $0x70] sm:$0xff] %vm1935, %v1917
      %1951 = vst.msk [vmem:[%s201 + $0x78] sm:$0xff] %vm1935, %v1918
      %1952 = vst.msk [vmem:[%s201 + $0x80] sm:$0xff] %vm1935, %v1919
      %1953 = vst.msk [vmem:[%s201 + $0x88] sm:$0xff] %vm1935, %v1920
      %1954 = vst.msk [vmem:[%s201 + $0x90] sm:$0xff] %vm1935, %v1921
      %1955 = vst.msk [vmem:[%s201 + $0x98] sm:$0xff] %vm1935, %v1922
      %1956 = vst.msk [vmem:[%s201 + $0xa0] sm:$0xff] %vm1935, %v1923
      %1957 = vst.msk [vmem:[%s201 + $0xa8] sm:$0xff] %vm1935, %v1924
      %1958 = vst.msk [vmem:[%s201 + $0xb0] sm:$0xff] %vm1935, %v1925
      %1959 = vst.msk [vmem:[%s201 + $0xb8] sm:$0xff] %vm1935, %v1926
      %1960 = vst.msk [vmem:[%s201 + $0xc0] sm:$0xff] %vm1935, %v1927
      %1961 = vst.msk [vmem:[%s201 + $0xc8] sm:$0xff] %vm1935, %v1928
      %1962 = vst.msk [vmem:[%s201 + $0xd0] sm:$0xff] %vm1935, %v1929
      %1963 = vst.msk [vmem:[%s201 + $0xd8] sm:$0xff] %vm1935, %v1930
      %1964 = vst.msk [vmem:[%s201 + $0xe0] sm:$0xff] %vm1935, %v1931
      %1965 = vst.msk [vmem:[%s201 + $0xe8] sm:$0xff] %vm1935, %v1932
      %1966 = vst.msk [vmem:[%s201 + $0xf0] sm:$0xff] %vm1935, %v1933
      %1967 = vst.msk [vmem:[%s201 + $0xf8] sm:$0xff] %vm1935, %v1934
      %s1968 = smul.u32 16, %s19
      %p1969 = scmp.lt.s32.totalorder %s18, 1
      %s1970 = scalar_select %p1969, %s18, 1
      %p1971 = scmp.lt.s32.totalorder %s1968, 15
      %s1972 = scalar_select %p1971, %s1968, 15
      %s1973 = smul.addr %s1972, 2
      %s1974 = smul.addr %s1970, 32
      %s1975 = sadd.s32 %s1973, %s1974
      %s1976 = smul.addr %s1975, 8
      %s1977 = scalar_lea.vmem %s3, %s1976
      // Predicated region
      $region33: #{enhancer_forward.9} parent=31 // pred_check
        %p1978 = pneg %p116
      $region34: #{enhancer_forward.9} parent=31 // pred_check_branch
        %1980 = sbr.rel (%p1978) target = $region36
      $region35: #{enhancer_forward.9} parent=31 // pred_region
        %s1981 = smul.u32 16, %s19
      $region36: #{enhancer_forward.9} parent=31 // pred_fallthru
        _
    $region32: #{enhancer_forward.9} parent=5 // pred_fallthru
      _
    %p1982 = scmp.le.s32.totalorder 2, %s9
    // Predicated region
    $region37: #{enhancer_forward.9} parent=5 // pred_check
      %p1983 = pneg %p1982
    $region38: #{enhancer_forward.9} parent=5 // pred_check_branch
      %1985 = sbr.rel (%p1983) target = $region40
    $region39: #{enhancer_forward.9} parent=5 // pred_region
      %s1986 = ssub.s32 %s9, 2
      // Predicated region
      $region41: #{enhancer_forward.9} parent=39 // pred_check
        %p1987 = pneg %p122
      $region42: #{enhancer_forward.9} parent=39 // pred_check_branch
        %1989 = sbr.rel (%p1987) target = $region44
      $region43: #{enhancer_forward.9} parent=39 // pred_region
        %s1990 = smul.u32 16, %s21
        %p1991 = scmp.lt.s32.totalorder %s20, 1
        %s1992 = scalar_select %p1991, %s20, 1
        %p1993 = scmp.lt.s32.totalorder %s1990, 15
        %s1994 = scalar_select %p1993, %s1990, 15
        %s1995 = smul.addr %s1994, 2
        %s1996 = smul.addr %s1992, 32
        %s1997 = sadd.s32 %s1995, %s1996
        %s1998 = smul.addr %s1997, 8
        %s1999 = scalar_lea.vmem %s3, %s1998
      $region44: #{enhancer_forward.9} parent=39 // pred_fallthru
        _
    $region40: #{enhancer_forward.9} parent=5 // pred_fallthru
      _
  $region6: #{enhancer_forward.9} parent=0 // loop_footer
    %s13 = sadd.s32 1, %s9
  $region7: #{enhancer_forward.9} parent=0 // loop_footer_branch
    %8 = sbr.rel target = $region3
  $region8: #{enhancer_forward.9} parent=0 // loop_exit
    _

</llo_original>
